<compile_context>
chip_gen: v7x
topology: tpu7x:2x2x1
jax: 0.10.0
libtpu: 0.0.40
codegen_flags: <defaults>
</compile_context>

<pallas_src>
import functools
import math

import jax
import jax.numpy as jnp
from jax.experimental import pallas as pl
from jax.experimental.pallas import tpu as pltpu

# ---------------- small ElectraConfig-like setup ----------------
VOCAB = 128          # len(tokenizer.get_vocab())
HIDDEN = 32          # hidden_size (embedding_size == hidden_size -> no embeddings_project)
N_HEADS = 2
HEAD_DIM = HIDDEN // N_HEADS
INTERMEDIATE = 64
N_LAYERS = 2
MAX_POS = 16         # max_position_embeddings (relative distance table has 2*MAX_POS-1 rows)
REL_POS = 2 * MAX_POS - 1
EPS = 1e-12          # layer_norm_eps
NEG = float(jnp.finfo(jnp.float32).min)


def _gelu_exact(x):
    # HF get_activation('gelu') / default hidden_act: exact (erf) GELU.
    return 0.5 * x * (1.0 + jax.lax.erf(x * (1.0 / math.sqrt(2.0))))


def _ln(x, g, b, eps):
    # LayerNorm over the last axis (biased variance, matching torch.nn.LayerNorm).
    mean = jnp.mean(x, axis=-1, keepdims=True)
    var = jnp.mean(jnp.square(x - mean), axis=-1, keepdims=True)
    inv = jax.lax.rsqrt(var + eps)
    return (x - mean) * inv * g + b


# ---------------- fused encoder (+ tied head) kernel ----------------

def _encoder_kernel(emb_ref, mask_ref, gvec_ref, wemb_ref,
                    qkv_w_ref, ao_w_ref, i_w_ref, o_w_ref, dist_ref, vec_ref,
                    hid_ref, mlm_ref, x_scr,
                    *, B, S, n_heads, head_dim, eps):
    H = n_heads * head_dim
    R = REL_POS
    scale = 1.0 / math.sqrt(head_dim)
    layer = pl.program_id(0)

    # ---- layer 0: embeddings LayerNorm (no zero-residual buffer; dropout = identity) ----
    @pl.when(layer == 0)
    def _():
        e = emb_ref[...].astype(jnp.float32)                     # (N, H)
        x_scr[...] = _ln(e, gvec_ref[0:1, :H], gvec_ref[1:2, :H], eps)

    x = x_scr[...]                                               # (N, H) f32, VMEM-resident

    # ---- merged Q/K/V projection: one (N,H) @ (H,3H) matmul ----
    qkv = jax.lax.dot_general(x, qkv_w_ref[...], (((1,), (1,)), ((), ())),
                              preferred_element_type=jnp.float32)
    qkv = qkv + vec_ref[0:1, :]                                  # row 0 = [q_b | k_b | v_b]

    # ---- relative-position one-hot select (built with iota; shared by heads/batches) ----
    li = jax.lax.broadcasted_iota(jnp.int32, (S, S), 0)
    ri = jax.lax.broadcasted_iota(jnp.int32, (S, S), 1)
    dist = li - ri + (MAX_POS - 1)                               # (S, S), values in [0, R)
    jidx = jax.lax.broadcasted_iota(jnp.int32, (S, S, R), 2)
    sel = (jidx == dist[:, :, None]).astype(jnp.float32)         # (S, S, R) one-hot

    dist_emb = dist_ref[...].astype(jnp.float32)                 # (R, d)
    mask_b = mask_ref[...]                                       # (B, S) additive bias

    # ---- attention: all (batch, head) tiles in one invocation (static unroll) ----
    ctx_cols = []
    for h in range(n_heads):
        q2 = qkv[:, h * head_dim:(h + 1) * head_dim]             # (N, d)
        k2 = qkv[:, H + h * head_dim:H + (h + 1) * head_dim]
        v2 = qkv[:, 2 * H + h * head_dim:2 * H + (h + 1) * head_dim]
        # relative scores vs. the small (R, d) table (no (S,S,d) tensor materialized)
        rq_all = jax.lax.dot_general(q2, dist_emb, (((1,), (1,)), ((), ())),
                                     preferred_element_type=jnp.float32)   # (N, R)
        rk_all = jax.lax.dot_general(k2, dist_emb, (((1,), (1,)), ((), ())),
                                     preferred_element_type=jnp.float32)   # (N, R)
        ctx_rows = []
        for b in range(B):
            qb = q2[b * S:(b + 1) * S, :]                        # (S, d)
            kb = k2[b * S:(b + 1) * S, :]
            vb = v2[b * S:(b + 1) * S, :]
            sc = jax.lax.dot_general(qb, kb, (((1,), (1,)), ((), ())),
                                     preferred_element_type=jnp.float32)   # (S, S)
            rqb = rq_all[b * S:(b + 1) * S, :]                   # (S, R), rows = query l
            rkb = rk_all[b * S:(b + 1) * S, :]                   # (S, R), rows = key r
            rel_q = jnp.sum(rqb[:, None, :] * sel, axis=-1)      # (S, S): q[l]·E[dist(l,r)]
            rel_k = jnp.sum(rkb[None, :, :] * sel, axis=-1)      # (S, S): k[r]·E[dist(l,r)]
            sc = (sc + rel_q + rel_k) * scale + mask_b[b:b + 1, :]
            m = jnp.max(sc, axis=-1, keepdims=True)
            p = jnp.exp(sc - m)
            probs = p / jnp.sum(p, axis=-1, keepdims=True)       # fully-masked rows -> uniform (HF behavior)
            ctx_rows.append(jnp.dot(probs, vb, preferred_element_type=jnp.float32))
        ctx_cols.append(jnp.concatenate(ctx_rows, axis=0))       # (N, d)
    ctx = jnp.concatenate(ctx_cols, axis=-1)                     # (N, H)

    # ---- SelfOutput.dense + residual + LN1 (fused) ----
    ao = jax.lax.dot_general(ctx, ao_w_ref[...], (((1,), (1,)), ((), ())),
                             preferred_element_type=jnp.float32) + vec_ref[1:2, :H]
    x1 = _ln(ao + x, vec_ref[2:3, :H], vec_ref[3:4, :H], eps)

    # ---- Intermediate (GELU) + Output.dense + residual + LN2 (fused) ----
    inter = jax.lax.dot_general(x1, i_w_ref[...], (((1,), (1,)), ((), ())),
                                preferred_element_type=jnp.float32) + vec_ref[4:5, :INTERMEDIATE]
    inter = _gelu_exact(inter)
    ffn = jax.lax.dot_general(inter, o_w_ref[...], (((1,), (1,)), ((), ())),
                              preferred_element_type=jnp.float32) + vec_ref[5:6, :H]
    x2 = _ln(ffn + x1, vec_ref[6:7, :H], vec_ref[7:8, :H], eps)

    x_scr[...] = x2
    hid_ref[...] = x2.astype(hid_ref.dtype)

    # ---- tied generator head, fused into the last layer's grid step ----
    @pl.when(layer == pl.num_programs(0) - 1)
    def _():
        logits = jax.lax.dot_general(x2, wemb_ref[...].astype(jnp.float32),
                                     (((1,), (1,)), ((), ())),
                                     preferred_element_type=jnp.float32)   # (N, VOCAB) lane-dense
        act = _gelu_exact(logits)
        mlm_ref[...] = _ln(act, gvec_ref[2:3, :], gvec_ref[3:4, :], eps).astype(mlm_ref.dtype)


# ---------------- wrapper: pack params, run one pallas_call ----------------

def _pack_layer_vecs(lp):
    w3 = 3 * HIDDEN

    def pad(v):
        return jnp.pad(v, (0, w3 - v.shape[0]))

    rows = [
        jnp.concatenate([lp["q_b"], lp["k_b"], lp["v_b"]]),      # (96,)
        pad(lp["ao_b"]), pad(lp["ln1_g"]), pad(lp["ln1_b"]),
        pad(lp["i_b"]), pad(lp["o_b"]), pad(lp["ln2_g"]), pad(lp["ln2_b"]),
    ]
    return jnp.stack(rows, axis=0)                               # (8, 96)


def electra_generator_forward(params, input_ids, attention_mask, token_type_ids):
    """Returns (last_hidden_state [B,S,H], tied-generator MLM hidden [B,S,VOCAB])."""
    B, S = input_ids.shape
    N = B * S
    L = len(params["layers"])

    # Embeddings: word + token_type only (relative_key_query => no absolute positions).
    emb = (params["word_emb"][input_ids]
           + params["token_type_emb"][token_type_ids]).reshape(N, HIDDEN)
    # HF extended attention mask: (1 - mask) * finfo(f32).min, applied after score scaling.
    mask_bias = (1.0 - attention_mask.astype(jnp.float32)) * NEG          # (B, S)

    # Stack per-layer weights along a leading layer axis.
    qkv_w = jnp.stack([jnp.concatenate([lp["q_w"], lp["k_w"], lp["v_w"]], axis=0)
                       for lp in params["layers"]], axis=0)               # (L, 3H, H)
    ao_w = jnp.stack([lp["ao_w"] for lp in params["layers"]], axis=0)     # (L, H, H)
    i_w = jnp.stack([lp["i_w"] for lp in params["layers"]], axis=0)       # (L, I, H)
    o_w = jnp.stack([lp["o_w"] for lp in params["layers"]], axis=0)       # (L, H, I)
    dist_emb = jnp.stack([lp["distance_emb"] for lp in params["layers"]], axis=0)  # (L, R, d)
    vecs = jnp.stack([_pack_layer_vecs(lp) for lp in params["layers"]], axis=0)    # (L, 8, 3H)
    gvecs = jnp.stack([
        jnp.pad(params["emb_ln_g"], (0, VOCAB - HIDDEN)),
        jnp.pad(params["emb_ln_b"], (0, VOCAB - HIDDEN)),
        params["head_ln_g"], params["head_ln_b"]], axis=0)                # (4, VOCAB)

    kernel = functools.partial(_encoder_kernel, B=B, S=S,
                               n_heads=N_HEADS, head_dim=HEAD_DIM, eps=EPS)

    hidden, mlm = pl.pallas_call(
        kernel,
        out_shape=(jax.ShapeDtypeStruct((N, HIDDEN), jnp.float32),
                   jax.ShapeDtypeStruct((N, VOCAB), jnp.float32)),
        grid=(L,),
        in_specs=[
            pl.BlockSpec((N, HIDDEN), lambda l: (0, 0)),                  # emb
            pl.BlockSpec((B, S), lambda l: (0, 0)),                       # additive mask bias
            pl.BlockSpec((4, VOCAB), lambda l: (0, 0)),                   # emb/head LN vectors
            pl.BlockSpec((VOCAB, HIDDEN), lambda l: (0, 0)),              # tied word-embedding weights
            pl.BlockSpec((None, 3 * HIDDEN, HIDDEN), lambda l: (l, 0, 0)),     # merged QKV weight
            pl.BlockSpec((None, HIDDEN, HIDDEN), lambda l: (l, 0, 0)),         # SelfOutput.dense
            pl.BlockSpec((None, INTERMEDIATE, HIDDEN), lambda l: (l, 0, 0)),   # Intermediate.dense
            pl.BlockSpec((None, HIDDEN, INTERMEDIATE), lambda l: (l, 0, 0)),   # Output.dense
            pl.BlockSpec((None, REL_POS, HEAD_DIM), lambda l: (l, 0, 0)),      # distance embedding
            pl.BlockSpec((None, 8, 3 * HIDDEN), lambda l: (l, 0, 0)),          # packed biases/LN vecs
        ],
        out_specs=(pl.BlockSpec((N, HIDDEN), lambda l: (0, 0)),
                   pl.BlockSpec((N, VOCAB), lambda l: (0, 0))),
        scratch_shapes=[pltpu.VMEM((N, HIDDEN), jnp.float32)],            # resident activations
        compiler_params=pltpu.CompilerParams(dimension_semantics=("arbitrary",)),
    )(emb, mask_bias, gvecs, params["word_emb"], qkv_w, ao_w, i_w, o_w, dist_emb, vecs)

    return hidden.reshape(B, S, HIDDEN), mlm.reshape(B, S, VOCAB)


# ---------------- deterministic parameter init ----------------

def init_params(key):
    keys = iter(jax.random.split(key, 64))

    def nrm(shape):
        return 0.02 * jax.random.normal(next(keys), shape, jnp.float32)

    params = {
        "word_emb": nrm((VOCAB, HIDDEN)),            # tied with generator head
        "token_type_emb": nrm((2, HIDDEN)),
        "emb_ln_g": jnp.ones((HIDDEN,), jnp.float32),
        "emb_ln_b": jnp.zeros((HIDDEN,), jnp.float32),
        "head_ln_g": jnp.ones((VOCAB,), jnp.float32),
        "head_ln_b": jnp.zeros((VOCAB,), jnp.float32),
        "layers": [],
    }
    for _ in range(N_LAYERS):
        params["layers"].append({
            "q_w": nrm((HIDDEN, HIDDEN)), "q_b": jnp.zeros((HIDDEN,), jnp.float32),
            "k_w": nrm((HIDDEN, HIDDEN)), "k_b": jnp.zeros((HIDDEN,), jnp.float32),
            "v_w": nrm((HIDDEN, HIDDEN)), "v_b": jnp.zeros((HIDDEN,), jnp.float32),
            "ao_w": nrm((HIDDEN, HIDDEN)), "ao_b": jnp.zeros((HIDDEN,), jnp.float32),
            "i_w": nrm((INTERMEDIATE, HIDDEN)), "i_b": jnp.zeros((INTERMEDIATE,), jnp.float32),
            "o_w": nrm((HIDDEN, INTERMEDIATE)), "o_b": jnp.zeros((HIDDEN,), jnp.float32),
            "ln1_g": jnp.ones((HIDDEN,), jnp.float32), "ln1_b": jnp.zeros((HIDDEN,), jnp.float32),
            "ln2_g": jnp.ones((HIDDEN,), jnp.float32), "ln2_b": jnp.zeros((HIDDEN,), jnp.float32),
            "distance_emb": nrm((REL_POS, HEAD_DIM)),
        })
    return params


if __name__ == "__main__":
    key = jax.random.PRNGKey(0)
    pkey, ikey = jax.random.split(key)
    params = init_params(pkey)

    B, S = 2, 8
    input_ids = jax.random.randint(ikey, (B, S), 0, VOCAB, dtype=jnp.int32)
    attention_mask = jnp.ones((B, S), jnp.int32).at[1, -2:].set(0)   # some padding
    token_type_ids = jnp.zeros((B, S), jnp.int32)

    fwd = jax.jit(electra_generator_forward)
    last_hidden, mlm_hidden = fwd(params, input_ids, attention_mask, token_type_ids)
    jax.block_until_ready((last_hidden, mlm_hidden))

    assert last_hidden.shape == (B, S, HIDDEN)
    assert mlm_hidden.shape == (B, S, VOCAB)
    assert bool(jnp.all(jnp.isfinite(last_hidden))) and bool(jnp.all(jnp.isfinite(mlm_hidden)))
    print("KERNEL_OK")
</pallas_src>

<mosaic_0001>
module attributes {stable_mosaic.version = 11 : i64} {
  func.func @_encoder_kernel(%arg0: i32, %arg1: memref<16x32xf32, #tpu.memory_space<vmem>>, %arg2: memref<2x8xf32, #tpu.memory_space<vmem>>, %arg3: memref<4x128xf32, #tpu.memory_space<vmem>>, %arg4: memref<128x32xf32, #tpu.memory_space<vmem>>, %arg5: memref<1x96x32xf32, #tpu.memory_space<vmem>>, %arg6: memref<1x32x32xf32, #tpu.memory_space<vmem>>, %arg7: memref<1x64x32xf32, #tpu.memory_space<vmem>>, %arg8: memref<1x32x64xf32, #tpu.memory_space<vmem>>, %arg9: memref<1x31x16xf32, #tpu.memory_space<vmem>>, %arg10: memref<1x8x96xf32, #tpu.memory_space<vmem>>, %arg11: memref<16x32xf32, #tpu.memory_space<vmem>>, %arg12: memref<16x128xf32, #tpu.memory_space<vmem>>, %arg13: memref<16x32xf32, #tpu.memory_space<vmem>>) attributes {dimension_semantics = [#tpu.dimension_semantics<arbitrary>], iteration_bounds = array<i64: 2>, scalar_prefetch = 0 : i64, scratch_operands = 1 : i64, tpu.core_type = #tpu.core_type<tc>, window_params = [{pipeline_mode = #tpu.pipeline_mode<synchronous>, transform_indices = @transform_0, window_bounds = array<i64: 16, 32>}, {pipeline_mode = #tpu.pipeline_mode<synchronous>, transform_indices = @transform_1, window_bounds = array<i64: 2, 8>}, {pipeline_mode = #tpu.pipeline_mode<synchronous>, transform_indices = @transform_2, window_bounds = array<i64: 4, 128>}, {pipeline_mode = #tpu.pipeline_mode<synchronous>, transform_indices = @transform_3, window_bounds = array<i64: 128, 32>}, {transform_indices = @transform_4, window_bounds = array<i64: 1, 96, 32>}, {transform_indices = @transform_5, window_bounds = array<i64: 1, 32, 32>}, {transform_indices = @transform_6, window_bounds = array<i64: 1, 64, 32>}, {transform_indices = @transform_7, window_bounds = array<i64: 1, 32, 64>}, {transform_indices = @transform_8, window_bounds = array<i64: 1, 31, 16>}, {transform_indices = @transform_9, window_bounds = array<i64: 1, 8, 96>}, {pipeline_mode = #tpu.pipeline_mode<synchronous>, transform_indices = @transform_10, window_bounds = array<i64: 16, 32>}, {pipeline_mode = #tpu.pipeline_mode<synchronous>, transform_indices = @transform_11, window_bounds = array<i64: 16, 128>}]} {
    %c0_i32 = arith.constant 0 : i32
    %0 = arith.cmpi eq, %arg0, %c0_i32 : i32
    %1 = arith.extui %0 : i1 to i32
    %c0_i32_0 = arith.constant 0 : i32
    %2 = arith.cmpi ne, %1, %c0_i32_0 : i32
    scf.if %2 {
      %c0_89 = arith.constant 0 : index
      %c0_90 = arith.constant 0 : index
      %250 = vector.load %arg1[%c0_89, %c0_90] : memref<16x32xf32, #tpu.memory_space<vmem>>, vector<16x32xf32>
      %c0_91 = arith.constant 0 : index
      %c0_92 = arith.constant 0 : index
      %251 = vector.load %arg3[%c0_91, %c0_92] : memref<4x128xf32, #tpu.memory_space<vmem>>, vector<1x32xf32>
      %c1_93 = arith.constant 1 : index
      %c0_94 = arith.constant 0 : index
      %252 = vector.load %arg3[%c1_93, %c0_94] : memref<4x128xf32, #tpu.memory_space<vmem>>, vector<1x32xf32>
      %cst_95 = arith.constant dense<0.000000e+00> : vector<16xf32>
      %253 = vector.multi_reduction <add>, %250, %cst_95 [1] : vector<16x32xf32> to vector<16xf32>
      %254 = vector.shape_cast %253 : vector<16xf32> to vector<16x1xf32>
      %cst_96 = arith.constant 3.200000e+01 : f32
      %255 = vector.broadcast %cst_96 : f32 to vector<16x1xf32>
      %256 = arith.divf %254, %255 : vector<16x1xf32>
      %257 = vector.broadcast %256 : vector<16x1xf32> to vector<16x32xf32>
      %258 = arith.subf %250, %257 : vector<16x32xf32>
      %259 = arith.mulf %258, %258 : vector<16x32xf32>
      %cst_97 = arith.constant dense<0.000000e+00> : vector<16xf32>
      %260 = vector.multi_reduction <add>, %259, %cst_97 [1] : vector<16x32xf32> to vector<16xf32>
      %261 = vector.shape_cast %260 : vector<16xf32> to vector<16x1xf32>
      %cst_98 = arith.constant 3.200000e+01 : f32
      %262 = vector.broadcast %cst_98 : f32 to vector<16x1xf32>
      %263 = arith.divf %261, %262 : vector<16x1xf32>
      %cst_99 = arith.constant 9.99999996E-13 : f32
      %264 = vector.broadcast %cst_99 : f32 to vector<16x1xf32>
      %265 = arith.addf %263, %264 : vector<16x1xf32>
      %266 = math.rsqrt %265 : vector<16x1xf32>
      %267 = vector.broadcast %256 : vector<16x1xf32> to vector<16x32xf32>
      %268 = arith.subf %250, %267 : vector<16x32xf32>
      %269 = vector.broadcast %266 : vector<16x1xf32> to vector<16x32xf32>
      %270 = arith.mulf %268, %269 : vector<16x32xf32>
      %271 = vector.broadcast %251 : vector<1x32xf32> to vector<16x32xf32>
      %272 = arith.mulf %270, %271 : vector<16x32xf32>
      %273 = vector.broadcast %252 : vector<1x32xf32> to vector<16x32xf32>
      %274 = arith.addf %272, %273 : vector<16x32xf32>
      %c0_100 = arith.constant 0 : index
      %c0_101 = arith.constant 0 : index
      %275 = vector.load %arg13[%c0_100, %c0_101] : memref<16x32xf32, #tpu.memory_space<vmem>>, vector<16x32xf32>
      tpu.vector_store %arg13[%c0_100, %c0_101], %274 {strides = array<i32>} : memref<16x32xf32, #tpu.memory_space<vmem>>, vector<16x32xf32>,
    } else {
    }
    %c0 = arith.constant 0 : index
    %c0_1 = arith.constant 0 : index
    %3 = vector.load %arg13[%c0, %c0_1] : memref<16x32xf32, #tpu.memory_space<vmem>>, vector<16x32xf32>
    %c0_2 = arith.constant 0 : index
    %c0_3 = arith.constant 0 : index
    %c0_4 = arith.constant 0 : index
    %4 = vector.load %arg5[%c0_2, %c0_3, %c0_4] : memref<1x96x32xf32, #tpu.memory_space<vmem>>, vector<1x96x32xf32>
    %5 = vector.shape_cast %4 : vector<1x96x32xf32> to vector<96x32xf32>
    %cst = arith.constant dense<0.000000e+00> : vector<16x96xf32>
    %6 = tpu.matmul %3, %5, %cst {dimension_numbers = #tpu.dot_dimension_numbers<[1], [1], [0], [0], [0, 0, 1, 0], [], []>} : vector<16x32xf32>, vector<96x32xf32>, vector<16x96xf32> -> vector<16x96xf32>
    %c0_5 = arith.constant 0 : index
    %c0_6 = arith.constant 0 : index
    %c0_7 = arith.constant 0 : index
    %7 = vector.load %arg10[%c0_5, %c0_6, %c0_7] : memref<1x8x96xf32, #tpu.memory_space<vmem>>, vector<1x1x96xf32>
    %8 = vector.shape_cast %7 : vector<1x1x96xf32> to vector<1x96xf32>
    %9 = vector.broadcast %8 : vector<1x96xf32> to vector<16x96xf32>
    %10 = arith.addf %6, %9 : vector<16x96xf32>
    %11 = tpu.iota {dimensions = array<i32: 0>} : vector<8x8xi32>
    %12 = tpu.iota {dimensions = array<i32: 1>} : vector<8x8xi32>
    %13 = arith.subi %11, %12 : vector<8x8xi32>
    %c15_i32 = arith.constant 15 : i32
    %14 = vector.broadcast %c15_i32 : i32 to vector<8x8xi32>
    %15 = arith.addi %13, %14 : vector<8x8xi32>
    %16 = tpu.iota {dimensions = array<i32: 2>} : vector<8x8x31xi32>
    %17 = vector.shape_cast %15 : vector<8x8xi32> to vector<8x8x1xi32>
    %18 = vector.broadcast %17 : vector<8x8x1xi32> to vector<8x8x31xi32>
    %19 = arith.cmpi eq, %16, %18 : vector<8x8x31xi32>
    %20 = arith.extui %19 : vector<8x8x31xi1> to vector<8x8x31xi32>
    %21 = arith.sitofp %20 : vector<8x8x31xi32> to vector<8x8x31xf32>
    %c0_8 = arith.constant 0 : index
    %c0_9 = arith.constant 0 : index
    %c0_10 = arith.constant 0 : index
    %22 = vector.load %arg9[%c0_8, %c0_9, %c0_10] : memref<1x31x16xf32, #tpu.memory_space<vmem>>, vector<1x31x16xf32>
    %23 = vector.shape_cast %22 : vector<1x31x16xf32> to vector<31x16xf32>
    %c0_11 = arith.constant 0 : index
    %c0_12 = arith.constant 0 : index
    %24 = vector.load %arg2[%c0_11, %c0_12] : memref<2x8xf32, #tpu.memory_space<vmem>>, vector<2x8xf32>
    %25 = vector.extract_strided_slice %10 {offsets = [0, 0], sizes = [16, 16], strides = [1, 1]} : vector<16x96xf32> to vector<16x16xf32>
    %26 = vector.extract_strided_slice %10 {offsets = [0, 32], sizes = [16, 16], strides = [1, 1]} : vector<16x96xf32> to vector<16x16xf32>
    %27 = vector.extract_strided_slice %10 {offsets = [0, 64], sizes = [16, 16], strides = [1, 1]} : vector<16x96xf32> to vector<16x16xf32>
    %cst_13 = arith.constant dense<0.000000e+00> : vector<16x31xf32>
    %28 = tpu.matmul %25, %23, %cst_13 {dimension_numbers = #tpu.dot_dimension_numbers<[1], [1], [0], [0], [0, 0, 1, 0], [], []>} : vector<16x16xf32>, vector<31x16xf32>, vector<16x31xf32> -> vector<16x31xf32>
    %cst_14 = arith.constant dense<0.000000e+00> : vector<16x31xf32>
    %29 = tpu.matmul %26, %23, %cst_14 {dimension_numbers = #tpu.dot_dimension_numbers<[1], [1], [0], [0], [0, 0, 1, 0], [], []>} : vector<16x16xf32>, vector<31x16xf32>, vector<16x31xf32> -> vector<16x31xf32>
    %30 = vector.extract_strided_slice %25 {offsets = [0, 0], sizes = [8, 16], strides = [1, 1]} : vector<16x16xf32> to vector<8x16xf32>
    %31 = vector.extract_strided_slice %26 {offsets = [0, 0], sizes = [8, 16], strides = [1, 1]} : vector<16x16xf32> to vector<8x16xf32>
    %32 = vector.extract_strided_slice %27 {offsets = [0, 0], sizes = [8, 16], strides = [1, 1]} : vector<16x16xf32> to vector<8x16xf32>
    %cst_15 = arith.constant dense<0.000000e+00> : vector<8x8xf32>
    %33 = tpu.matmul %30, %31, %cst_15 {dimension_numbers = #tpu.dot_dimension_numbers<[1], [1], [0], [0], [0, 0, 1, 0], [], []>} : vector<8x16xf32>, vector<8x16xf32>, vector<8x8xf32> -> vector<8x8xf32>
    %34 = vector.extract_strided_slice %28 {offsets = [0, 0], sizes = [8, 31], strides = [1, 1]} : vector<16x31xf32> to vector<8x31xf32>
    %35 = vector.extract_strided_slice %29 {offsets = [0, 0], sizes = [8, 31], strides = [1, 1]} : vector<16x31xf32> to vector<8x31xf32>
    %36 = vector.shape_cast %34 : vector<8x31xf32> to vector<8x1x31xf32>
    %37 = vector.broadcast %36 : vector<8x1x31xf32> to vector<8x8x31xf32>
    %38 = arith.mulf %37, %21 : vector<8x8x31xf32>
    %cst_16 = arith.constant dense<0.000000e+00> : vector<8x8xf32>
    %39 = vector.multi_reduction <add>, %38, %cst_16 [2] : vector<8x8x31xf32> to vector<8x8xf32>
    %40 = vector.shape_cast %35 : vector<8x31xf32> to vector<1x8x31xf32>
    %41 = vector.broadcast %40 : vector<1x8x31xf32> to vector<8x8x31xf32>
    %42 = arith.mulf %41, %21 : vector<8x8x31xf32>
    %cst_17 = arith.constant dense<0.000000e+00> : vector<8x8xf32>
    %43 = vector.multi_reduction <add>, %42, %cst_17 [2] : vector<8x8x31xf32> to vector<8x8xf32>
    %44 = arith.addf %33, %39 : vector<8x8xf32>
    %45 = arith.addf %44, %43 : vector<8x8xf32>
    %cst_18 = arith.constant 2.500000e-01 : f32
    %46 = vector.broadcast %cst_18 : f32 to vector<8x8xf32>
    %47 = arith.mulf %45, %46 : vector<8x8xf32>
    %48 = vector.extract_strided_slice %24 {offsets = [0, 0], sizes = [1, 8], strides = [1, 1]} : vector<2x8xf32> to vector<1x8xf32>
    %49 = vector.broadcast %48 : vector<1x8xf32> to vector<8x8xf32>
    %50 = arith.addf %47, %49 : vector<8x8xf32>
    %cst_19 = arith.constant dense<0xFF800000> : vector<8xf32>
    %51 = vector.multi_reduction <maximumf>, %50, %cst_19 [1] : vector<8x8xf32> to vector<8xf32>
    %52 = vector.shape_cast %51 : vector<8xf32> to vector<8x1xf32>
    %53 = vector.broadcast %52 : vector<8x1xf32> to vector<8x8xf32>
    %54 = arith.subf %50, %53 : vector<8x8xf32>
    %55 = math.exp %54 : vector<8x8xf32>
    %cst_20 = arith.constant dense<0.000000e+00> : vector<8xf32>
    %56 = vector.multi_reduction <add>, %55, %cst_20 [1] : vector<8x8xf32> to vector<8xf32>
    %57 = vector.shape_cast %56 : vector<8xf32> to vector<8x1xf32>
    %58 = vector.broadcast %57 : vector<8x1xf32> to vector<8x8xf32>
    %59 = arith.divf %55, %58 : vector<8x8xf32>
    %cst_21 = arith.constant dense<0.000000e+00> : vector<8x16xf32>
    %60 = tpu.matmul %59, %32, %cst_21 {dimension_numbers = #tpu.dot_dimension_numbers<[1], [0], [0], [1], [0, 0, 1, 1], [], []>} : vector<8x8xf32>, vector<8x16xf32>, vector<8x16xf32> -> vector<8x16xf32>
    %61 = vector.extract_strided_slice %25 {offsets = [8, 0], sizes = [8, 16], strides = [1, 1]} : vector<16x16xf32> to vector<8x16xf32>
    %62 = vector.extract_strided_slice %26 {offsets = [8, 0], sizes = [8, 16], strides = [1, 1]} : vector<16x16xf32> to vector<8x16xf32>
    %63 = vector.extract_strided_slice %27 {offsets = [8, 0], sizes = [8, 16], strides = [1, 1]} : vector<16x16xf32> to vector<8x16xf32>
    %cst_22 = arith.constant dense<0.000000e+00> : vector<8x8xf32>
    %64 = tpu.matmul %61, %62, %cst_22 {dimension_numbers = #tpu.dot_dimension_numbers<[1], [1], [0], [0], [0, 0, 1, 0], [], []>} : vector<8x16xf32>, vector<8x16xf32>, vector<8x8xf32> -> vector<8x8xf32>
    %65 = vector.extract_strided_slice %28 {offsets = [8, 0], sizes = [8, 31], strides = [1, 1]} : vector<16x31xf32> to vector<8x31xf32>
    %66 = vector.extract_strided_slice %29 {offsets = [8, 0], sizes = [8, 31], strides = [1, 1]} : vector<16x31xf32> to vector<8x31xf32>
    %67 = vector.shape_cast %65 : vector<8x31xf32> to vector<8x1x31xf32>
    %68 = vector.broadcast %67 : vector<8x1x31xf32> to vector<8x8x31xf32>
    %69 = arith.mulf %68, %21 : vector<8x8x31xf32>
    %cst_23 = arith.constant dense<0.000000e+00> : vector<8x8xf32>
    %70 = vector.multi_reduction <add>, %69, %cst_23 [2] : vector<8x8x31xf32> to vector<8x8xf32>
    %71 = vector.shape_cast %66 : vector<8x31xf32> to vector<1x8x31xf32>
    %72 = vector.broadcast %71 : vector<1x8x31xf32> to vector<8x8x31xf32>
    %73 = arith.mulf %72, %21 : vector<8x8x31xf32>
    %cst_24 = arith.constant dense<0.000000e+00> : vector<8x8xf32>
    %74 = vector.multi_reduction <add>, %73, %cst_24 [2] : vector<8x8x31xf32> to vector<8x8xf32>
    %75 = arith.addf %64, %70 : vector<8x8xf32>
    %76 = arith.addf %75, %74 : vector<8x8xf32>
    %cst_25 = arith.constant 2.500000e-01 : f32
    %77 = vector.broadcast %cst_25 : f32 to vector<8x8xf32>
    %78 = arith.mulf %76, %77 : vector<8x8xf32>
    %79 = vector.extract_strided_slice %24 {offsets = [1, 0], sizes = [1, 8], strides = [1, 1]} : vector<2x8xf32> to vector<1x8xf32>
    %80 = vector.broadcast %79 : vector<1x8xf32> to vector<8x8xf32>
    %81 = arith.addf %78, %80 : vector<8x8xf32>
    %cst_26 = arith.constant dense<0xFF800000> : vector<8xf32>
    %82 = vector.multi_reduction <maximumf>, %81, %cst_26 [1] : vector<8x8xf32> to vector<8xf32>
    %83 = vector.shape_cast %82 : vector<8xf32> to vector<8x1xf32>
    %84 = vector.broadcast %83 : vector<8x1xf32> to vector<8x8xf32>
    %85 = arith.subf %81, %84 : vector<8x8xf32>
    %86 = math.exp %85 : vector<8x8xf32>
    %cst_27 = arith.constant dense<0.000000e+00> : vector<8xf32>
    %87 = vector.multi_reduction <add>, %86, %cst_27 [1] : vector<8x8xf32> to vector<8xf32>
    %88 = vector.shape_cast %87 : vector<8xf32> to vector<8x1xf32>
    %89 = vector.broadcast %88 : vector<8x1xf32> to vector<8x8xf32>
    %90 = arith.divf %86, %89 : vector<8x8xf32>
    %cst_28 = arith.constant dense<0.000000e+00> : vector<8x16xf32>
    %91 = tpu.matmul %90, %63, %cst_28 {dimension_numbers = #tpu.dot_dimension_numbers<[1], [0], [0], [1], [0, 0, 1, 1], [], []>} : vector<8x8xf32>, vector<8x16xf32>, vector<8x16xf32> -> vector<8x16xf32>
    %92 = tpu.concatenate %60, %91 in 0 : vector<8x16xf32>, vector<8x16xf32> -> vector<16x16xf32>
    %93 = vector.extract_strided_slice %10 {offsets = [0, 16], sizes = [16, 16], strides = [1, 1]} : vector<16x96xf32> to vector<16x16xf32>
    %94 = vector.extract_strided_slice %10 {offsets = [0, 48], sizes = [16, 16], strides = [1, 1]} : vector<16x96xf32> to vector<16x16xf32>
    %95 = vector.extract_strided_slice %10 {offsets = [0, 80], sizes = [16, 16], strides = [1, 1]} : vector<16x96xf32> to vector<16x16xf32>
    %cst_29 = arith.constant dense<0.000000e+00> : vector<16x31xf32>
    %96 = tpu.matmul %93, %23, %cst_29 {dimension_numbers = #tpu.dot_dimension_numbers<[1], [1], [0], [0], [0, 0, 1, 0], [], []>} : vector<16x16xf32>, vector<31x16xf32>, vector<16x31xf32> -> vector<16x31xf32>
    %cst_30 = arith.constant dense<0.000000e+00> : vector<16x31xf32>
    %97 = tpu.matmul %94, %23, %cst_30 {dimension_numbers = #tpu.dot_dimension_numbers<[1], [1], [0], [0], [0, 0, 1, 0], [], []>} : vector<16x16xf32>, vector<31x16xf32>, vector<16x31xf32> -> vector<16x31xf32>
    %98 = vector.extract_strided_slice %93 {offsets = [0, 0], sizes = [8, 16], strides = [1, 1]} : vector<16x16xf32> to vector<8x16xf32>
    %99 = vector.extract_strided_slice %94 {offsets = [0, 0], sizes = [8, 16], strides = [1, 1]} : vector<16x16xf32> to vector<8x16xf32>
    %100 = vector.extract_strided_slice %95 {offsets = [0, 0], sizes = [8, 16], strides = [1, 1]} : vector<16x16xf32> to vector<8x16xf32>
    %cst_31 = arith.constant dense<0.000000e+00> : vector<8x8xf32>
    %101 = tpu.matmul %98, %99, %cst_31 {dimension_numbers = #tpu.dot_dimension_numbers<[1], [1], [0], [0], [0, 0, 1, 0], [], []>} : vector<8x16xf32>, vector<8x16xf32>, vector<8x8xf32> -> vector<8x8xf32>
    %102 = vector.extract_strided_slice %96 {offsets = [0, 0], sizes = [8, 31], strides = [1, 1]} : vector<16x31xf32> to vector<8x31xf32>
    %103 = vector.extract_strided_slice %97 {offsets = [0, 0], sizes = [8, 31], strides = [1, 1]} : vector<16x31xf32> to vector<8x31xf32>
    %104 = vector.shape_cast %102 : vector<8x31xf32> to vector<8x1x31xf32>
    %105 = vector.broadcast %104 : vector<8x1x31xf32> to vector<8x8x31xf32>
    %106 = arith.mulf %105, %21 : vector<8x8x31xf32>
    %cst_32 = arith.constant dense<0.000000e+00> : vector<8x8xf32>
    %107 = vector.multi_reduction <add>, %106, %cst_32 [2] : vector<8x8x31xf32> to vector<8x8xf32>
    %108 = vector.shape_cast %103 : vector<8x31xf32> to vector<1x8x31xf32>
    %109 = vector.broadcast %108 : vector<1x8x31xf32> to vector<8x8x31xf32>
    %110 = arith.mulf %109, %21 : vector<8x8x31xf32>
    %cst_33 = arith.constant dense<0.000000e+00> : vector<8x8xf32>
    %111 = vector.multi_reduction <add>, %110, %cst_33 [2] : vector<8x8x31xf32> to vector<8x8xf32>
    %112 = arith.addf %101, %107 : vector<8x8xf32>
    %113 = arith.addf %112, %111 : vector<8x8xf32>
    %cst_34 = arith.constant 2.500000e-01 : f32
    %114 = vector.broadcast %cst_34 : f32 to vector<8x8xf32>
    %115 = arith.mulf %113, %114 : vector<8x8xf32>
    %116 = vector.extract_strided_slice %24 {offsets = [0, 0], sizes = [1, 8], strides = [1, 1]} : vector<2x8xf32> to vector<1x8xf32>
    %117 = vector.broadcast %116 : vector<1x8xf32> to vector<8x8xf32>
    %118 = arith.addf %115, %117 : vector<8x8xf32>
    %cst_35 = arith.constant dense<0xFF800000> : vector<8xf32>
    %119 = vector.multi_reduction <maximumf>, %118, %cst_35 [1] : vector<8x8xf32> to vector<8xf32>
    %120 = vector.shape_cast %119 : vector<8xf32> to vector<8x1xf32>
    %121 = vector.broadcast %120 : vector<8x1xf32> to vector<8x8xf32>
    %122 = arith.subf %118, %121 : vector<8x8xf32>
    %123 = math.exp %122 : vector<8x8xf32>
    %cst_36 = arith.constant dense<0.000000e+00> : vector<8xf32>
    %124 = vector.multi_reduction <add>, %123, %cst_36 [1] : vector<8x8xf32> to vector<8xf32>
    %125 = vector.shape_cast %124 : vector<8xf32> to vector<8x1xf32>
    %126 = vector.broadcast %125 : vector<8x1xf32> to vector<8x8xf32>
    %127 = arith.divf %123, %126 : vector<8x8xf32>
    %cst_37 = arith.constant dense<0.000000e+00> : vector<8x16xf32>
    %128 = tpu.matmul %127, %100, %cst_37 {dimension_numbers = #tpu.dot_dimension_numbers<[1], [0], [0], [1], [0, 0, 1, 1], [], []>} : vector<8x8xf32>, vector<8x16xf32>, vector<8x16xf32> -> vector<8x16xf32>
    %129 = vector.extract_strided_slice %93 {offsets = [8, 0], sizes = [8, 16], strides = [1, 1]} : vector<16x16xf32> to vector<8x16xf32>
    %130 = vector.extract_strided_slice %94 {offsets = [8, 0], sizes = [8, 16], strides = [1, 1]} : vector<16x16xf32> to vector<8x16xf32>
    %131 = vector.extract_strided_slice %95 {offsets = [8, 0], sizes = [8, 16], strides = [1, 1]} : vector<16x16xf32> to vector<8x16xf32>
    %cst_38 = arith.constant dense<0.000000e+00> : vector<8x8xf32>
    %132 = tpu.matmul %129, %130, %cst_38 {dimension_numbers = #tpu.dot_dimension_numbers<[1], [1], [0], [0], [0, 0, 1, 0], [], []>} : vector<8x16xf32>, vector<8x16xf32>, vector<8x8xf32> -> vector<8x8xf32>
    %133 = vector.extract_strided_slice %96 {offsets = [8, 0], sizes = [8, 31], strides = [1, 1]} : vector<16x31xf32> to vector<8x31xf32>
    %134 = vector.extract_strided_slice %97 {offsets = [8, 0], sizes = [8, 31], strides = [1, 1]} : vector<16x31xf32> to vector<8x31xf32>
    %135 = vector.shape_cast %133 : vector<8x31xf32> to vector<8x1x31xf32>
    %136 = vector.broadcast %135 : vector<8x1x31xf32> to vector<8x8x31xf32>
    %137 = arith.mulf %136, %21 : vector<8x8x31xf32>
    %cst_39 = arith.constant dense<0.000000e+00> : vector<8x8xf32>
    %138 = vector.multi_reduction <add>, %137, %cst_39 [2] : vector<8x8x31xf32> to vector<8x8xf32>
    %139 = vector.shape_cast %134 : vector<8x31xf32> to vector<1x8x31xf32>
    %140 = vector.broadcast %139 : vector<1x8x31xf32> to vector<8x8x31xf32>
    %141 = arith.mulf %140, %21 : vector<8x8x31xf32>
    %cst_40 = arith.constant dense<0.000000e+00> : vector<8x8xf32>
    %142 = vector.multi_reduction <add>, %141, %cst_40 [2] : vector<8x8x31xf32> to vector<8x8xf32>
    %143 = arith.addf %132, %138 : vector<8x8xf32>
    %144 = arith.addf %143, %142 : vector<8x8xf32>
    %cst_41 = arith.constant 2.500000e-01 : f32
    %145 = vector.broadcast %cst_41 : f32 to vector<8x8xf32>
    %146 = arith.mulf %144, %145 : vector<8x8xf32>
    %147 = vector.extract_strided_slice %24 {offsets = [1, 0], sizes = [1, 8], strides = [1, 1]} : vector<2x8xf32> to vector<1x8xf32>
    %148 = vector.broadcast %147 : vector<1x8xf32> to vector<8x8xf32>
    %149 = arith.addf %146, %148 : vector<8x8xf32>
    %cst_42 = arith.constant dense<0xFF800000> : vector<8xf32>
    %150 = vector.multi_reduction <maximumf>, %149, %cst_42 [1] : vector<8x8xf32> to vector<8xf32>
    %151 = vector.shape_cast %150 : vector<8xf32> to vector<8x1xf32>
    %152 = vector.broadcast %151 : vector<8x1xf32> to vector<8x8xf32>
    %153 = arith.subf %149, %152 : vector<8x8xf32>
    %154 = math.exp %153 : vector<8x8xf32>
    %cst_43 = arith.constant dense<0.000000e+00> : vector<8xf32>
    %155 = vector.multi_reduction <add>, %154, %cst_43 [1] : vector<8x8xf32> to vector<8xf32>
    %156 = vector.shape_cast %155 : vector<8xf32> to vector<8x1xf32>
    %157 = vector.broadcast %156 : vector<8x1xf32> to vector<8x8xf32>
    %158 = arith.divf %154, %157 : vector<8x8xf32>
    %cst_44 = arith.constant dense<0.000000e+00> : vector<8x16xf32>
    %159 = tpu.matmul %158, %131, %cst_44 {dimension_numbers = #tpu.dot_dimension_numbers<[1], [0], [0], [1], [0, 0, 1, 1], [], []>} : vector<8x8xf32>, vector<8x16xf32>, vector<8x16xf32> -> vector<8x16xf32>
    %160 = tpu.concatenate %128, %159 in 0 : vector<8x16xf32>, vector<8x16xf32> -> vector<16x16xf32>
    %161 = tpu.concatenate %92, %160 in 1 : vector<16x16xf32>, vector<16x16xf32> -> vector<16x32xf32>
    %c0_45 = arith.constant 0 : index
    %c0_46 = arith.constant 0 : index
    %c0_47 = arith.constant 0 : index
    %162 = vector.load %arg6[%c0_45, %c0_46, %c0_47] : memref<1x32x32xf32, #tpu.memory_space<vmem>>, vector<1x32x32xf32>
    %163 = vector.shape_cast %162 : vector<1x32x32xf32> to vector<32x32xf32>
    %cst_48 = arith.constant dense<0.000000e+00> : vector<16x32xf32>
    %164 = tpu.matmul %161, %163, %cst_48 {dimension_numbers = #tpu.dot_dimension_numbers<[1], [1], [0], [0], [0, 0, 1, 0], [], []>} : vector<16x32xf32>, vector<32x32xf32>, vector<16x32xf32> -> vector<16x32xf32>
    %c0_49 = arith.constant 0 : index
    %c1 = arith.constant 1 : index
    %c0_50 = arith.constant 0 : index
    %165 = vector.load %arg10[%c0_49, %c1, %c0_50] : memref<1x8x96xf32, #tpu.memory_space<vmem>>, vector<1x1x32xf32>
    %166 = vector.shape_cast %165 : vector<1x1x32xf32> to vector<1x32xf32>
    %167 = vector.broadcast %166 : vector<1x32xf32> to vector<16x32xf32>
    %168 = arith.addf %164, %167 : vector<16x32xf32>
    %169 = arith.addf %168, %3 : vector<16x32xf32>
    %c0_51 = arith.constant 0 : index
    %c2 = arith.constant 2 : index
    %c0_52 = arith.constant 0 : index
    %170 = vector.load %arg10[%c0_51, %c2, %c0_52] : memref<1x8x96xf32, #tpu.memory_space<vmem>>, vector<1x1x32xf32>
    %171 = vector.shape_cast %170 : vector<1x1x32xf32> to vector<1x32xf32>
    %c0_53 = arith.constant 0 : index
    %c3 = arith.constant 3 : index
    %c0_54 = arith.constant 0 : index
    %172 = vector.load %arg10[%c0_53, %c3, %c0_54] : memref<1x8x96xf32, #tpu.memory_space<vmem>>, vector<1x1x32xf32>
    %173 = vector.shape_cast %172 : vector<1x1x32xf32> to vector<1x32xf32>
    %cst_55 = arith.constant dense<0.000000e+00> : vector<16xf32>
    %174 = vector.multi_reduction <add>, %169, %cst_55 [1] : vector<16x32xf32> to vector<16xf32>
    %175 = vector.shape_cast %174 : vector<16xf32> to vector<16x1xf32>
    %cst_56 = arith.constant 3.200000e+01 : f32
    %176 = vector.broadcast %cst_56 : f32 to vector<16x1xf32>
    %177 = arith.divf %175, %176 : vector<16x1xf32>
    %178 = vector.broadcast %177 : vector<16x1xf32> to vector<16x32xf32>
    %179 = arith.subf %169, %178 : vector<16x32xf32>
    %180 = arith.mulf %179, %179 : vector<16x32xf32>
    %cst_57 = arith.constant dense<0.000000e+00> : vector<16xf32>
    %181 = vector.multi_reduction <add>, %180, %cst_57 [1] : vector<16x32xf32> to vector<16xf32>
    %182 = vector.shape_cast %181 : vector<16xf32> to vector<16x1xf32>
    %cst_58 = arith.constant 3.200000e+01 : f32
    %183 = vector.broadcast %cst_58 : f32 to vector<16x1xf32>
    %184 = arith.divf %182, %183 : vector<16x1xf32>
    %cst_59 = arith.constant 9.99999996E-13 : f32
    %185 = vector.broadcast %cst_59 : f32 to vector<16x1xf32>
    %186 = arith.addf %184, %185 : vector<16x1xf32>
    %187 = math.rsqrt %186 : vector<16x1xf32>
    %188 = vector.broadcast %177 : vector<16x1xf32> to vector<16x32xf32>
    %189 = arith.subf %169, %188 : vector<16x32xf32>
    %190 = vector.broadcast %187 : vector<16x1xf32> to vector<16x32xf32>
    %191 = arith.mulf %189, %190 : vector<16x32xf32>
    %192 = vector.broadcast %171 : vector<1x32xf32> to vector<16x32xf32>
    %193 = arith.mulf %191, %192 : vector<16x32xf32>
    %194 = vector.broadcast %173 : vector<1x32xf32> to vector<16x32xf32>
    %195 = arith.addf %193, %194 : vector<16x32xf32>
    %c0_60 = arith.constant 0 : index
    %c0_61 = arith.constant 0 : index
    %c0_62 = arith.constant 0 : index
    %196 = vector.load %arg7[%c0_60, %c0_61, %c0_62] : memref<1x64x32xf32, #tpu.memory_space<vmem>>, vector<1x64x32xf32>
    %197 = vector.shape_cast %196 : vector<1x64x32xf32> to vector<64x32xf32>
    %cst_63 = arith.constant dense<0.000000e+00> : vector<16x64xf32>
    %198 = tpu.matmul %195, %197, %cst_63 {dimension_numbers = #tpu.dot_dimension_numbers<[1], [1], [0], [0], [0, 0, 1, 0], [], []>} : vector<16x32xf32>, vector<64x32xf32>, vector<16x64xf32> -> vector<16x64xf32>
    %c0_64 = arith.constant 0 : index
    %c4 = arith.constant 4 : index
    %c0_65 = arith.constant 0 : index
    %199 = vector.load %arg10[%c0_64, %c4, %c0_65] : memref<1x8x96xf32, #tpu.memory_space<vmem>>, vector<1x1x64xf32>
    %200 = vector.shape_cast %199 : vector<1x1x64xf32> to vector<1x64xf32>
    %201 = vector.broadcast %200 : vector<1x64xf32> to vector<16x64xf32>
    %202 = arith.addf %198, %201 : vector<16x64xf32>
    %cst_66 = arith.constant 5.000000e-01 : f32
    %203 = vector.broadcast %cst_66 : f32 to vector<16x64xf32>
    %204 = arith.mulf %203, %202 : vector<16x64xf32>
    %cst_67 = arith.constant 0.707106769 : f32
    %205 = vector.broadcast %cst_67 : f32 to vector<16x64xf32>
    %206 = arith.mulf %202, %205 : vector<16x64xf32>
    %207 = math.erf %206 : vector<16x64xf32>
    %cst_68 = arith.constant 1.000000e+00 : f32
    %208 = vector.broadcast %cst_68 : f32 to vector<16x64xf32>
    %209 = arith.addf %208, %207 : vector<16x64xf32>
    %210 = arith.mulf %204, %209 : vector<16x64xf32>
    %c0_69 = arith.constant 0 : index
    %c0_70 = arith.constant 0 : index
    %c0_71 = arith.constant 0 : index
    %211 = vector.load %arg8[%c0_69, %c0_70, %c0_71] : memref<1x32x64xf32, #tpu.memory_space<vmem>>, vector<1x32x64xf32>
    %212 = vector.shape_cast %211 : vector<1x32x64xf32> to vector<32x64xf32>
    %cst_72 = arith.constant dense<0.000000e+00> : vector<16x32xf32>
    %213 = tpu.matmul %210, %212, %cst_72 {dimension_numbers = #tpu.dot_dimension_numbers<[1], [1], [0], [0], [0, 0, 1, 0], [], []>} : vector<16x64xf32>, vector<32x64xf32>, vector<16x32xf32> -> vector<16x32xf32>
    %c0_73 = arith.constant 0 : index
    %c5 = arith.constant 5 : index
    %c0_74 = arith.constant 0 : index
    %214 = vector.load %arg10[%c0_73, %c5, %c0_74] : memref<1x8x96xf32, #tpu.memory_space<vmem>>, vector<1x1x32xf32>
    %215 = vector.shape_cast %214 : vector<1x1x32xf32> to vector<1x32xf32>
    %216 = vector.broadcast %215 : vector<1x32xf32> to vector<16x32xf32>
    %217 = arith.addf %213, %216 : vector<16x32xf32>
    %218 = arith.addf %217, %195 : vector<16x32xf32>
    %c0_75 = arith.constant 0 : index
    %c6 = arith.constant 6 : index
    %c0_76 = arith.constant 0 : index
    %219 = vector.load %arg10[%c0_75, %c6, %c0_76] : memref<1x8x96xf32, #tpu.memory_space<vmem>>, vector<1x1x32xf32>
    %220 = vector.shape_cast %219 : vector<1x1x32xf32> to vector<1x32xf32>
    %c0_77 = arith.constant 0 : index
    %c7 = arith.constant 7 : index
    %c0_78 = arith.constant 0 : index
    %221 = vector.load %arg10[%c0_77, %c7, %c0_78] : memref<1x8x96xf32, #tpu.memory_space<vmem>>, vector<1x1x32xf32>
    %222 = vector.shape_cast %221 : vector<1x1x32xf32> to vector<1x32xf32>
    %cst_79 = arith.constant dense<0.000000e+00> : vector<16xf32>
    %223 = vector.multi_reduction <add>, %218, %cst_79 [1] : vector<16x32xf32> to vector<16xf32>
    %224 = vector.shape_cast %223 : vector<16xf32> to vector<16x1xf32>
    %cst_80 = arith.constant 3.200000e+01 : f32
    %225 = vector.broadcast %cst_80 : f32 to vector<16x1xf32>
    %226 = arith.divf %224, %225 : vector<16x1xf32>
    %227 = vector.broadcast %226 : vector<16x1xf32> to vector<16x32xf32>
    %228 = arith.subf %218, %227 : vector<16x32xf32>
    %229 = arith.mulf %228, %228 : vector<16x32xf32>
    %cst_81 = arith.constant dense<0.000000e+00> : vector<16xf32>
    %230 = vector.multi_reduction <add>, %229, %cst_81 [1] : vector<16x32xf32> to vector<16xf32>
    %231 = vector.shape_cast %230 : vector<16xf32> to vector<16x1xf32>
    %cst_82 = arith.constant 3.200000e+01 : f32
    %232 = vector.broadcast %cst_82 : f32 to vector<16x1xf32>
    %233 = arith.divf %231, %232 : vector<16x1xf32>
    %cst_83 = arith.constant 9.99999996E-13 : f32
    %234 = vector.broadcast %cst_83 : f32 to vector<16x1xf32>
    %235 = arith.addf %233, %234 : vector<16x1xf32>
    %236 = math.rsqrt %235 : vector<16x1xf32>
    %237 = vector.broadcast %226 : vector<16x1xf32> to vector<16x32xf32>
    %238 = arith.subf %218, %237 : vector<16x32xf32>
    %239 = vector.broadcast %236 : vector<16x1xf32> to vector<16x32xf32>
    %240 = arith.mulf %238, %239 : vector<16x32xf32>
    %241 = vector.broadcast %220 : vector<1x32xf32> to vector<16x32xf32>
    %242 = arith.mulf %240, %241 : vector<16x32xf32>
    %243 = vector.broadcast %222 : vector<1x32xf32> to vector<16x32xf32>
    %244 = arith.addf %242, %243 : vector<16x32xf32>
    %c0_84 = arith.constant 0 : index
    %c0_85 = arith.constant 0 : index
    %245 = vector.load %arg13[%c0_84, %c0_85] : memref<16x32xf32, #tpu.memory_space<vmem>>, vector<16x32xf32>
    tpu.vector_store %arg13[%c0_84, %c0_85], %244 {strides = array<i32>} : memref<16x32xf32, #tpu.memory_space<vmem>>, vector<16x32xf32>,
    %c0_86 = arith.constant 0 : index
    %c0_87 = arith.constant 0 : index
    %246 = vector.load %arg11[%c0_86, %c0_87] : memref<16x32xf32, #tpu.memory_space<vmem>>, vector<16x32xf32>
    tpu.vector_store %arg11[%c0_86, %c0_87], %244 {strides = array<i32>} : memref<16x32xf32, #tpu.memory_space<vmem>>, vector<16x32xf32>,
    %c1_i32 = arith.constant 1 : i32
    %247 = arith.cmpi eq, %arg0, %c1_i32 : i32
    %248 = arith.extui %247 : i1 to i32
    %c0_i32_88 = arith.constant 0 : i32
    %249 = arith.cmpi ne, %248, %c0_i32_88 : i32
    scf.if %249 {
      %c0_89 = arith.constant 0 : index
      %c0_90 = arith.constant 0 : index
      %250 = vector.load %arg4[%c0_89, %c0_90] : memref<128x32xf32, #tpu.memory_space<vmem>>, vector<128x32xf32>
      %cst_91 = arith.constant dense<0.000000e+00> : vector<16x128xf32>
      %251 = tpu.matmul %244, %250, %cst_91 {dimension_numbers = #tpu.dot_dimension_numbers<[1], [1], [0], [0], [0, 0, 1, 0], [], []>} : vector<16x32xf32>, vector<128x32xf32>, vector<16x128xf32> -> vector<16x128xf32>
      %cst_92 = arith.constant 5.000000e-01 : f32
      %252 = vector.broadcast %cst_92 : f32 to vector<16x128xf32>
      %253 = arith.mulf %252, %251 : vector<16x128xf32>
      %cst_93 = arith.constant 0.707106769 : f32
      %254 = vector.broadcast %cst_93 : f32 to vector<16x128xf32>
      %255 = arith.mulf %251, %254 : vector<16x128xf32>
      %256 = math.erf %255 : vector<16x128xf32>
      %cst_94 = arith.constant 1.000000e+00 : f32
      %257 = vector.broadcast %cst_94 : f32 to vector<16x128xf32>
      %258 = arith.addf %257, %256 : vector<16x128xf32>
      %259 = arith.mulf %253, %258 : vector<16x128xf32>
      %c2_95 = arith.constant 2 : index
      %c0_96 = arith.constant 0 : index
      %260 = vector.load %arg3[%c2_95, %c0_96] : memref<4x128xf32, #tpu.memory_space<vmem>>, vector<1x128xf32>
      %c3_97 = arith.constant 3 : index
      %c0_98 = arith.constant 0 : index
      %261 = vector.load %arg3[%c3_97, %c0_98] : memref<4x128xf32, #tpu.memory_space<vmem>>, vector<1x128xf32>
      %cst_99 = arith.constant dense<0.000000e+00> : vector<16xf32>
      %262 = vector.multi_reduction <add>, %259, %cst_99 [1] : vector<16x128xf32> to vector<16xf32>
      %263 = vector.shape_cast %262 : vector<16xf32> to vector<16x1xf32>
      %cst_100 = arith.constant 1.280000e+02 : f32
      %264 = vector.broadcast %cst_100 : f32 to vector<16x1xf32>
      %265 = arith.divf %263, %264 : vector<16x1xf32>
      %266 = vector.broadcast %265 : vector<16x1xf32> to vector<16x128xf32>
      %267 = arith.subf %259, %266 : vector<16x128xf32>
      %268 = arith.mulf %267, %267 : vector<16x128xf32>
      %cst_101 = arith.constant dense<0.000000e+00> : vector<16xf32>
      %269 = vector.multi_reduction <add>, %268, %cst_101 [1] : vector<16x128xf32> to vector<16xf32>
      %270 = vector.shape_cast %269 : vector<16xf32> to vector<16x1xf32>
      %cst_102 = arith.constant 1.280000e+02 : f32
      %271 = vector.broadcast %cst_102 : f32 to vector<16x1xf32>
      %272 = arith.divf %270, %271 : vector<16x1xf32>
      %cst_103 = arith.constant 9.99999996E-13 : f32
      %273 = vector.broadcast %cst_103 : f32 to vector<16x1xf32>
      %274 = arith.addf %272, %273 : vector<16x1xf32>
      %275 = math.rsqrt %274 : vector<16x1xf32>
      %276 = vector.broadcast %265 : vector<16x1xf32> to vector<16x128xf32>
      %277 = arith.subf %259, %276 : vector<16x128xf32>
      %278 = vector.broadcast %275 : vector<16x1xf32> to vector<16x128xf32>
      %279 = arith.mulf %277, %278 : vector<16x128xf32>
      %280 = vector.broadcast %260 : vector<1x128xf32> to vector<16x128xf32>
      %281 = arith.mulf %279, %280 : vector<16x128xf32>
      %282 = vector.broadcast %261 : vector<1x128xf32> to vector<16x128xf32>
      %283 = arith.addf %281, %282 : vector<16x128xf32>
      %c0_104 = arith.constant 0 : index
      %c0_105 = arith.constant 0 : index
      %284 = vector.load %arg12[%c0_104, %c0_105] : memref<16x128xf32, #tpu.memory_space<vmem>>, vector<16x128xf32>
      tpu.vector_store %arg12[%c0_104, %c0_105], %283 {strides = array<i32>} : memref<16x128xf32, #tpu.memory_space<vmem>>, vector<16x128xf32>,
    } else {
    }
    return
  }
  func.func @transform_0(%arg0: i32) -> (i32, i32) {
    %c0_i32 = arith.constant 0 : i32
    %c0_i32_0 = arith.constant 0 : i32
    %c0_i32_1 = arith.constant 0 : i32
    return %c0_i32, %c0_i32_0 : i32, i32
  }
  func.func @transform_1(%arg0: i32) -> (i32, i32) {
    %c0_i32 = arith.constant 0 : i32
    %c0_i32_0 = arith.constant 0 : i32
    %c0_i32_1 = arith.constant 0 : i32
    return %c0_i32, %c0_i32_0 : i32, i32
  }
  func.func @transform_2(%arg0: i32) -> (i32, i32) {
    %c0_i32 = arith.constant 0 : i32
    %c0_i32_0 = arith.constant 0 : i32
    %c0_i32_1 = arith.constant 0 : i32
    return %c0_i32, %c0_i32_0 : i32, i32
  }
  func.func @transform_3(%arg0: i32) -> (i32, i32) {
    %c0_i32 = arith.constant 0 : i32
    %c0_i32_0 = arith.constant 0 : i32
    %c0_i32_1 = arith.constant 0 : i32
    return %c0_i32, %c0_i32_0 : i32, i32
  }
  func.func @transform_4(%arg0: i32) -> (i32, i32, i32) {
    %c0_i32 = arith.constant 0 : i32
    %c0_i32_0 = arith.constant 0 : i32
    %c0_i32_1 = arith.constant 0 : i32
    return %arg0, %c0_i32, %c0_i32_0 : i32, i32, i32
  }
  func.func @transform_5(%arg0: i32) -> (i32, i32, i32) {
    %c0_i32 = arith.constant 0 : i32
    %c0_i32_0 = arith.constant 0 : i32
    %c0_i32_1 = arith.constant 0 : i32
    return %arg0, %c0_i32, %c0_i32_0 : i32, i32, i32
  }
  func.func @transform_6(%arg0: i32) -> (i32, i32, i32) {
    %c0_i32 = arith.constant 0 : i32
    %c0_i32_0 = arith.constant 0 : i32
    %c0_i32_1 = arith.constant 0 : i32
    return %arg0, %c0_i32, %c0_i32_0 : i32, i32, i32
  }
  func.func @transform_7(%arg0: i32) -> (i32, i32, i32) {
    %c0_i32 = arith.constant 0 : i32
    %c0_i32_0 = arith.constant 0 : i32
    %c0_i32_1 = arith.constant 0 : i32
    return %arg0, %c0_i32, %c0_i32_0 : i32, i32, i32
  }
  func.func @transform_8(%arg0: i32) -> (i32, i32, i32) {
    %c0_i32 = arith.constant 0 : i32
    %c0_i32_0 = arith.constant 0 : i32
    %c0_i32_1 = arith.constant 0 : i32
    return %arg0, %c0_i32, %c0_i32_0 : i32, i32, i32
  }
  func.func @transform_9(%arg0: i32) -> (i32, i32, i32) {
    %c0_i32 = arith.constant 0 : i32
    %c0_i32_0 = arith.constant 0 : i32
    %c0_i32_1 = arith.constant 0 : i32
    return %arg0, %c0_i32, %c0_i32_0 : i32, i32, i32
  }
  func.func @transform_10(%arg0: i32) -> (i32, i32) {
    %c0_i32 = arith.constant 0 : i32
    %c0_i32_0 = arith.constant 0 : i32
    %c0_i32_1 = arith.constant 0 : i32
    return %c0_i32, %c0_i32_0 : i32, i32
  }
  func.func @transform_11(%arg0: i32) -> (i32, i32) {
    %c0_i32 = arith.constant 0 : i32
    %c0_i32_0 = arith.constant 0 : i32
    %c0_i32_1 = arith.constant 0 : i32
    return %c0_i32, %c0_i32_0 : i32, i32
  }
}

</mosaic_0001>

<llo_original>
// kernel: electra_generator_forward.1
$region0: #{electra_generator_forward.1}
  #allocation0 [shape = 'u32[]', space=smem, size = 0x4, offset = 0x4, fixed_abs, tag = 'smem constant byte address 0x4 - core index']
  #allocation1 [shape = 'u32[144,128]{1,0:T(1,128)}', space=vmem, size = 0x12000, scoped, tag = 'internal scratch']
  #allocation2 [shape = 'f32[16,32]{1,0:T(8,128)}', space=vmem, size = 0x2000, scoped, tag = 'scratch operand']
  %s0 = inlined_call_operand.vmem [shape: f32[16,32], index: 0, kind: input, shape index: {}]
  %s1 = inlined_call_operand.vmem [shape: f32[2,8], index: 1, kind: input, shape index: {}]
  %s2 = inlined_call_operand.vmem [shape: f32[4,128], index: 2, kind: input, shape index: {}]
  %s3 = inlined_call_operand.vmem [shape: f32[128,32], index: 3, kind: input, shape index: {}]
  %s4 = inlined_call_operand.vmem [shape: f32[2,96,32], index: 4, kind: input, shape index: {}]
  %s5 = inlined_call_operand.vmem [shape: f32[2,32,32], index: 5, kind: input, shape index: {}]
  %s6 = inlined_call_operand.vmem [shape: f32[2,64,32], index: 6, kind: input, shape index: {}]
  %s7 = inlined_call_operand.vmem [shape: f32[2,32,64], index: 7, kind: input, shape index: {}]
  %s8 = inlined_call_operand.vmem [shape: f32[2,31,16], index: 8, kind: input, shape index: {}]
  %s9 = inlined_call_operand.vmem [shape: f32[2,8,96], index: 9, kind: input, shape index: {}]
  %s10 = inlined_call_operand.hbm [shape: f32[16,32], index: 10, kind: output, shape index: {0}]
  %s11 = inlined_call_operand.hbm [shape: f32[16,128], index: 11, kind: output, shape index: {1}]
  %12 = xla_tuple %s10, %s11
  %s13 = sld [smem:[#allocation0]]
  $region89: #{electra_generator_forward.1} parent=0
    _
  %s15 = ssub.s32 1, %s13
  %s16 = scalar_select 0, %s15, %s13
  $region1: #{electra_generator_forward.1} parent=0
    #allocation3 [shape = 'u8[8192]{0}', space=vmem, size = 0x2000, scoped, tag = 'output window, operand 0, single buffered']
    #allocation4 [shape = 's32[2]{0}', space=sflag, size = 0x8, scoped, tag = 'scoped memory for electra_generator_forward.1']
    #allocation5 [shape = 'u8[8192]{0}', space=vmem, size = 0x2000, scoped, tag = 'output window, operand 1, single buffered']
    #allocation6 [shape = 's32[1]{0}', space=sflag, size = 0x4, scoped, tag = 'scoped memory for electra_generator_forward.1']
    %17 = vsyncpa [#allocation4], 0
    %18 = vsyncpa [#allocation6], 0
    loop: start=0, step=1, limit=4
    $region2: #{electra_generator_forward.1} parent=1 // loop_pre_header
      _
    $region3: #{electra_generator_forward.1} parent=1 // loop_header
      %s20 = sphi 0, %s24
      %p21 = scmp.ge.s32.totalorder %s20, 4
      %s28 = sphi 0, %s28
      %s30 = sphi 0, %s28
      %s31 = sphi 0, %s30
      %s45 = sphi 0, %s31
      %s49 = sphi 0, %s49
      %s51 = sphi 0, %s49
      %s52 = sphi 0, %s51
      %s66 = sphi 0, %s52
      %s70 = sphi 0, %s70
      %s72 = sphi 0, %s70
      %s73 = sphi 0, %s72
      %s87 = sphi 0, %s73
      %s91 = sphi 0, %s91
      %s93 = sphi 0, %s91
      %s94 = sphi 0, %s93
      %s108 = sphi 0, %s94
      %s114 = sphi 0, %s116
      %s117 = sphi 0, %s114
      %s118 = sphi 0, %s117
      %s134 = sphi 0, %s118
      %s140 = sphi 0, %s142
      %s143 = sphi 0, %s140
      %s144 = sphi 0, %s143
      %s160 = sphi 0, %s144
      %s166 = sphi 0, %s168
      %s169 = sphi 0, %s166
      %s170 = sphi 0, %s169
      %s186 = sphi 0, %s170
      %s192 = sphi 0, %s194
      %s195 = sphi 0, %s192
      %s196 = sphi 0, %s195
      %s212 = sphi 0, %s196
      %s218 = sphi 0, %s220
      %s221 = sphi 0, %s218
      %s222 = sphi 0, %s221
      %s238 = sphi 0, %s222
      %s244 = sphi 0, %s246
      %s247 = sphi 0, %s244
      %s248 = sphi 0, %s247
      %s264 = sphi 0, %s248
      %s268 = sphi 0, %s268
      %s270 = sphi 0, %s268
      %s271 = sphi 0, %s270
      %s285 = sphi 0, %s271
      %s289 = sphi 0, %s289
      %s291 = sphi 0, %s289
      %s292 = sphi 0, %s291
      %s306 = sphi 0, %s292
    $region4: #{electra_generator_forward.1} parent=1 // loop_header_branch
      %23 = sbr.rel (%p21) target = $region8
    $region5: #{electra_generator_forward.1} parent=1 // loop_body
      %s25 = ssub.s32 %s20, 1
      %s26 = ssub.s32 %s20, 2
      %s27 = sadd.s32 %s20, 1
      %s29 = sadd.s32 %s28, 1
      %p32 = scmp.eq.s32.totalorder %s20, 1
      %p33 = scmp.ne.s32.totalorder %s28, %s30
      %p34 = scmp.eq.s32.totalorder %s20, 0
      %p35 = por %p33, %p34
      %p36 = scmp.ne.s32.totalorder %s28, %s30
      %p37 = scmp.eq.s32.totalorder %s25, 1
      %p38 = por %p36, %p37
      %p39 = scmp.ne.s32.totalorder %s30, %s31
      %p40 = scmp.eq.s32.totalorder %s25, 0
      %p41 = por %p39, %p40
      %p42 = scmp.ne.s32.totalorder %s30, %s31
      %p43 = scmp.eq.s32.totalorder %s26, 1
      %p44 = por %p42, %p43
      %p46 = scmp.ne.s32.totalorder %s31, %s45
      %p47 = scmp.eq.s32.totalorder %s26, 0
      %p48 = por %p46, %p47
      %s50 = sadd.s32 %s49, 1
      %p53 = scmp.eq.s32.totalorder %s20, 1
      %p54 = scmp.ne.s32.totalorder %s49, %s51
      %p55 = scmp.eq.s32.totalorder %s20, 0
      %p56 = por %p54, %p55
      %p57 = scmp.ne.s32.totalorder %s49, %s51
      %p58 = scmp.eq.s32.totalorder %s25, 1
      %p59 = por %p57, %p58
      %p60 = scmp.ne.s32.totalorder %s51, %s52
      %p61 = scmp.eq.s32.totalorder %s25, 0
      %p62 = por %p60, %p61
      %p63 = scmp.ne.s32.totalorder %s51, %s52
      %p64 = scmp.eq.s32.totalorder %s26, 1
      %p65 = por %p63, %p64
      %p67 = scmp.ne.s32.totalorder %s52, %s66
      %p68 = scmp.eq.s32.totalorder %s26, 0
      %p69 = por %p67, %p68
      %s71 = sadd.s32 %s70, 1
      %p74 = scmp.eq.s32.totalorder %s20, 1
      %p75 = scmp.ne.s32.totalorder %s70, %s72
      %p76 = scmp.eq.s32.totalorder %s20, 0
      %p77 = por %p75, %p76
      %p78 = scmp.ne.s32.totalorder %s70, %s72
      %p79 = scmp.eq.s32.totalorder %s25, 1
      %p80 = por %p78, %p79
      %p81 = scmp.ne.s32.totalorder %s72, %s73
      %p82 = scmp.eq.s32.totalorder %s25, 0
      %p83 = por %p81, %p82
      %p84 = scmp.ne.s32.totalorder %s72, %s73
      %p85 = scmp.eq.s32.totalorder %s26, 1
      %p86 = por %p84, %p85
      %p88 = scmp.ne.s32.totalorder %s73, %s87
      %p89 = scmp.eq.s32.totalorder %s26, 0
      %p90 = por %p88, %p89
      %s92 = sadd.s32 %s91, 1
      %p95 = scmp.eq.s32.totalorder %s20, 1
      %p96 = scmp.ne.s32.totalorder %s91, %s93
      %p97 = scmp.eq.s32.totalorder %s20, 0
      %p98 = por %p96, %p97
      %p99 = scmp.ne.s32.totalorder %s91, %s93
      %p100 = scmp.eq.s32.totalorder %s25, 1
      %p101 = por %p99, %p100
      %p102 = scmp.ne.s32.totalorder %s93, %s94
      %p103 = scmp.eq.s32.totalorder %s25, 0
      %p104 = por %p102, %p103
      %p105 = scmp.ne.s32.totalorder %s93, %s94
      %p106 = scmp.eq.s32.totalorder %s26, 1
      %p107 = por %p105, %p106
      %p109 = scmp.ne.s32.totalorder %s94, %s108
      %p110 = scmp.eq.s32.totalorder %s26, 0
      %p111 = por %p109, %p110
      %s112 = ssub.s32 %s20, %s27
      %p113 = scmp.eq.s32.totalorder %s112, 0
      %s115 = sadd.s32 %s114, 1
      %s116 = scalar_select %p113, %s114, %s115
      %p119 = pneg %p113
      %p120 = scmp.eq.s32.totalorder %s20, 1
      %p121 = por %p119, %p120
      %p122 = scmp.ne.s32.totalorder %s114, %s117
      %p123 = scmp.eq.s32.totalorder %s20, 0
      %p124 = por %p122, %p123
      %p125 = scmp.ne.s32.totalorder %s114, %s117
      %p126 = scmp.eq.s32.totalorder %s25, 1
      %p127 = por %p125, %p126
      %p128 = scmp.ne.s32.totalorder %s117, %s118
      %p129 = scmp.eq.s32.totalorder %s25, 0
      %p130 = por %p128, %p129
      %p131 = scmp.ne.s32.totalorder %s117, %s118
      %p132 = scmp.eq.s32.totalorder %s26, 1
      %p133 = por %p131, %p132
      %p135 = scmp.ne.s32.totalorder %s118, %s134
      %p136 = scmp.eq.s32.totalorder %s26, 0
      %p137 = por %p135, %p136
      %s138 = ssub.s32 %s20, %s27
      %p139 = scmp.eq.s32.totalorder %s138, 0
      %s141 = sadd.s32 %s140, 1
      %s142 = scalar_select %p139, %s140, %s141
      %p145 = pneg %p139
      %p146 = scmp.eq.s32.totalorder %s20, 1
      %p147 = por %p145, %p146
      %p148 = scmp.ne.s32.totalorder %s140, %s143
      %p149 = scmp.eq.s32.totalorder %s20, 0
      %p150 = por %p148, %p149
      %p151 = scmp.ne.s32.totalorder %s140, %s143
      %p152 = scmp.eq.s32.totalorder %s25, 1
      %p153 = por %p151, %p152
      %p154 = scmp.ne.s32.totalorder %s143, %s144
      %p155 = scmp.eq.s32.totalorder %s25, 0
      %p156 = por %p154, %p155
      %p157 = scmp.ne.s32.totalorder %s143, %s144
      %p158 = scmp.eq.s32.totalorder %s26, 1
      %p159 = por %p157, %p158
      %p161 = scmp.ne.s32.totalorder %s144, %s160
      %p162 = scmp.eq.s32.totalorder %s26, 0
      %p163 = por %p161, %p162
      %s164 = ssub.s32 %s20, %s27
      %p165 = scmp.eq.s32.totalorder %s164, 0
      %s167 = sadd.s32 %s166, 1
      %s168 = scalar_select %p165, %s166, %s167
      %p171 = pneg %p165
      %p172 = scmp.eq.s32.totalorder %s20, 1
      %p173 = por %p171, %p172
      %p174 = scmp.ne.s32.totalorder %s166, %s169
      %p175 = scmp.eq.s32.totalorder %s20, 0
      %p176 = por %p174, %p175
      %p177 = scmp.ne.s32.totalorder %s166, %s169
      %p178 = scmp.eq.s32.totalorder %s25, 1
      %p179 = por %p177, %p178
      %p180 = scmp.ne.s32.totalorder %s169, %s170
      %p181 = scmp.eq.s32.totalorder %s25, 0
      %p182 = por %p180, %p181
      %p183 = scmp.ne.s32.totalorder %s169, %s170
      %p184 = scmp.eq.s32.totalorder %s26, 1
      %p185 = por %p183, %p184
      %p187 = scmp.ne.s32.totalorder %s170, %s186
      %p188 = scmp.eq.s32.totalorder %s26, 0
      %p189 = por %p187, %p188
      %s190 = ssub.s32 %s20, %s27
      %p191 = scmp.eq.s32.totalorder %s190, 0
      %s193 = sadd.s32 %s192, 1
      %s194 = scalar_select %p191, %s192, %s193
      %p197 = pneg %p191
      %p198 = scmp.eq.s32.totalorder %s20, 1
      %p199 = por %p197, %p198
      %p200 = scmp.ne.s32.totalorder %s192, %s195
      %p201 = scmp.eq.s32.totalorder %s20, 0
      %p202 = por %p200, %p201
      %p203 = scmp.ne.s32.totalorder %s192, %s195
      %p204 = scmp.eq.s32.totalorder %s25, 1
      %p205 = por %p203, %p204
      %p206 = scmp.ne.s32.totalorder %s195, %s196
      %p207 = scmp.eq.s32.totalorder %s25, 0
      %p208 = por %p206, %p207
      %p209 = scmp.ne.s32.totalorder %s195, %s196
      %p210 = scmp.eq.s32.totalorder %s26, 1
      %p211 = por %p209, %p210
      %p213 = scmp.ne.s32.totalorder %s196, %s212
      %p214 = scmp.eq.s32.totalorder %s26, 0
      %p215 = por %p213, %p214
      %s216 = ssub.s32 %s20, %s27
      %p217 = scmp.eq.s32.totalorder %s216, 0
      %s219 = sadd.s32 %s218, 1
      %s220 = scalar_select %p217, %s218, %s219
      %p223 = pneg %p217
      %p224 = scmp.eq.s32.totalorder %s20, 1
      %p225 = por %p223, %p224
      %p226 = scmp.ne.s32.totalorder %s218, %s221
      %p227 = scmp.eq.s32.totalorder %s20, 0
      %p228 = por %p226, %p227
      %p229 = scmp.ne.s32.totalorder %s218, %s221
      %p230 = scmp.eq.s32.totalorder %s25, 1
      %p231 = por %p229, %p230
      %p232 = scmp.ne.s32.totalorder %s221, %s222
      %p233 = scmp.eq.s32.totalorder %s25, 0
      %p234 = por %p232, %p233
      %p235 = scmp.ne.s32.totalorder %s221, %s222
      %p236 = scmp.eq.s32.totalorder %s26, 1
      %p237 = por %p235, %p236
      %p239 = scmp.ne.s32.totalorder %s222, %s238
      %p240 = scmp.eq.s32.totalorder %s26, 0
      %p241 = por %p239, %p240
      %s242 = ssub.s32 %s20, %s27
      %p243 = scmp.eq.s32.totalorder %s242, 0
      %s245 = sadd.s32 %s244, 1
      %s246 = scalar_select %p243, %s244, %s245
      %p249 = pneg %p243
      %p250 = scmp.eq.s32.totalorder %s20, 1
      %p251 = por %p249, %p250
      %p252 = scmp.ne.s32.totalorder %s244, %s247
      %p253 = scmp.eq.s32.totalorder %s20, 0
      %p254 = por %p252, %p253
      %p255 = scmp.ne.s32.totalorder %s244, %s247
      %p256 = scmp.eq.s32.totalorder %s25, 1
      %p257 = por %p255, %p256
      %p258 = scmp.ne.s32.totalorder %s247, %s248
      %p259 = scmp.eq.s32.totalorder %s25, 0
      %p260 = por %p258, %p259
      %p261 = scmp.ne.s32.totalorder %s247, %s248
      %p262 = scmp.eq.s32.totalorder %s26, 1
      %p263 = por %p261, %p262
      %p265 = scmp.ne.s32.totalorder %s248, %s264
      %p266 = scmp.eq.s32.totalorder %s26, 0
      %p267 = por %p265, %p266
      %s269 = sadd.s32 %s268, 1
      %p272 = scmp.eq.s32.totalorder %s20, 1
      %p273 = scmp.ne.s32.totalorder %s268, %s270
      %p274 = scmp.eq.s32.totalorder %s20, 0
      %p275 = por %p273, %p274
      %p276 = scmp.ne.s32.totalorder %s268, %s270
      %p277 = scmp.eq.s32.totalorder %s25, 1
      %p278 = por %p276, %p277
      %p279 = scmp.ne.s32.totalorder %s270, %s271
      %p280 = scmp.eq.s32.totalorder %s25, 0
      %p281 = por %p279, %p280
      %p282 = scmp.ne.s32.totalorder %s270, %s271
      %p283 = scmp.eq.s32.totalorder %s26, 1
      %p284 = por %p282, %p283
      %p286 = scmp.ne.s32.totalorder %s271, %s285
      %p287 = scmp.eq.s32.totalorder %s26, 0
      %p288 = por %p286, %p287
      %s290 = sadd.s32 %s289, 1
      %p293 = scmp.eq.s32.totalorder %s20, 1
      %p294 = scmp.ne.s32.totalorder %s289, %s291
      %p295 = scmp.eq.s32.totalorder %s20, 0
      %p296 = por %p294, %p295
      %p297 = scmp.ne.s32.totalorder %s289, %s291
      %p298 = scmp.eq.s32.totalorder %s25, 1
      %p299 = por %p297, %p298
      %p300 = scmp.ne.s32.totalorder %s291, %s292
      %p301 = scmp.eq.s32.totalorder %s25, 0
      %p302 = por %p300, %p301
      %p303 = scmp.ne.s32.totalorder %s291, %s292
      %p304 = scmp.eq.s32.totalorder %s26, 1
      %p305 = por %p303, %p304
      %p307 = scmp.ne.s32.totalorder %s292, %s306
      %p308 = scmp.eq.s32.totalorder %s26, 0
      %p309 = por %p307, %p308
      %p310 = scmp.le.s32.totalorder 1, %s20
      %p311 = scmp.lt.s32.totalorder %s20, 3
      %p312 = pnand %p310, %p311
      %p313 = pneg %p312
      // Predicated region
      $region9: #{electra_generator_forward.1} parent=5 // pred_check
        _
      $region10: #{electra_generator_forward.1} parent=5 // pred_check_branch
        %315 = sbr.rel (%p312) target = $region12
      $region11: #{electra_generator_forward.1} parent=5 // pred_region
        %s316 = ssub.s32 %s20, 1
        // Predicated region
        $region13: #{electra_generator_forward.1} parent=11 // pred_check
          %p317 = pneg %p41
        $region14: #{electra_generator_forward.1} parent=11 // pred_check_branch
          %319 = sbr.rel (%p317) target = $region16
        $region15: #{electra_generator_forward.1} parent=11 // pred_region
          _
        $region16: #{electra_generator_forward.1} parent=11 // pred_fallthru
          _
        // Predicated region
        $region17: #{electra_generator_forward.1} parent=11 // pred_check
          %p320 = pneg %p62
        $region18: #{electra_generator_forward.1} parent=11 // pred_check_branch
          %322 = sbr.rel (%p320) target = $region20
        $region19: #{electra_generator_forward.1} parent=11 // pred_region
          _
        $region20: #{electra_generator_forward.1} parent=11 // pred_fallthru
          _
        // Predicated region
        $region21: #{electra_generator_forward.1} parent=11 // pred_check
          %p323 = pneg %p83
        $region22: #{electra_generator_forward.1} parent=11 // pred_check_branch
          %325 = sbr.rel (%p323) target = $region24
        $region23: #{electra_generator_forward.1} parent=11 // pred_region
          _
        $region24: #{electra_generator_forward.1} parent=11 // pred_fallthru
          _
        // Predicated region
        $region25: #{electra_generator_forward.1} parent=11 // pred_check
          %p326 = pneg %p104
        $region26: #{electra_generator_forward.1} parent=11 // pred_check_branch
          %328 = sbr.rel (%p326) target = $region28
        $region27: #{electra_generator_forward.1} parent=11 // pred_region
          _
        $region28: #{electra_generator_forward.1} parent=11 // pred_fallthru
          _
      $region12: #{electra_generator_forward.1} parent=5 // pred_fallthru
        _
      %p329 = scmp.lt.s32.totalorder %s20, 2
      // Predicated region
      $region29: #{electra_generator_forward.1} parent=5 // pred_check
        %p330 = pneg %p329
      $region30: #{electra_generator_forward.1} parent=5 // pred_check_branch
        %332 = sbr.rel (%p330) target = $region32
      $region31: #{electra_generator_forward.1} parent=5 // pred_region
        // Predicated region
        $region33: #{electra_generator_forward.1} parent=31 // pred_check
          %p333 = pneg %p124
        $region34: #{electra_generator_forward.1} parent=31 // pred_check_branch
          %335 = sbr.rel (%p333) target = $region36
        $region35: #{electra_generator_forward.1} parent=31 // pred_region
          %p336 = scmp.lt.s32.totalorder %s20, 1
          %s337 = scalar_select %p336, %s20, 1
          %s338 = smul.addr %s337, 12
          %s339 = smul.addr %s338, 8
          %s340 = scalar_lea.vmem %s4, %s339
        $region36: #{electra_generator_forward.1} parent=31 // pred_fallthru
          _
        // Predicated region
        $region37: #{electra_generator_forward.1} parent=31 // pred_check
          %p341 = pneg %p150
        $region38: #{electra_generator_forward.1} parent=31 // pred_check_branch
          %343 = sbr.rel (%p341) target = $region40
        $region39: #{electra_generator_forward.1} parent=31 // pred_region
          %p344 = scmp.lt.s32.totalorder %s20, 1
          %s345 = scalar_select %p344, %s20, 1
          %s346 = smul.addr %s345, 4
          %s347 = smul.addr %s346, 8
          %s348 = scalar_lea.vmem %s5, %s347
        $region40: #{electra_generator_forward.1} parent=31 // pred_fallthru
          _
        // Predicated region
        $region41: #{electra_generator_forward.1} parent=31 // pred_check
          %p349 = pneg %p176
        $region42: #{electra_generator_forward.1} parent=31 // pred_check_branch
          %351 = sbr.rel (%p349) target = $region44
        $region43: #{electra_generator_forward.1} parent=31 // pred_region
          %p352 = scmp.lt.s32.totalorder %s20, 1
          %s353 = scalar_select %p352, %s20, 1
          %s354 = smul.addr %s353, 8
          %s355 = smul.addr %s354, 8
          %s356 = scalar_lea.vmem %s6, %s355
        $region44: #{electra_generator_forward.1} parent=31 // pred_fallthru
          _
        // Predicated region
        $region45: #{electra_generator_forward.1} parent=31 // pred_check
          %p357 = pneg %p202
        $region46: #{electra_generator_forward.1} parent=31 // pred_check_branch
          %359 = sbr.rel (%p357) target = $region48
        $region47: #{electra_generator_forward.1} parent=31 // pred_region
          %p360 = scmp.lt.s32.totalorder %s20, 1
          %s361 = scalar_select %p360, %s20, 1
          %s362 = smul.addr %s361, 4
          %s363 = smul.addr %s362, 8
          %s364 = scalar_lea.vmem %s7, %s363
        $region48: #{electra_generator_forward.1} parent=31 // pred_fallthru
          _
        // Predicated region
        $region49: #{electra_generator_forward.1} parent=31 // pred_check
          %p365 = pneg %p228
        $region50: #{electra_generator_forward.1} parent=31 // pred_check_branch
          %367 = sbr.rel (%p365) target = $region52
        $region51: #{electra_generator_forward.1} parent=31 // pred_region
          %p368 = scmp.lt.s32.totalorder %s20, 1
          %s369 = scalar_select %p368, %s20, 1
          %s370 = smul.addr %s369, 4
          %s371 = smul.addr %s370, 8
          %s372 = scalar_lea.vmem %s8, %s371
        $region52: #{electra_generator_forward.1} parent=31 // pred_fallthru
          _
        // Predicated region
        $region53: #{electra_generator_forward.1} parent=31 // pred_check
          %p373 = pneg %p254
        $region54: #{electra_generator_forward.1} parent=31 // pred_check_branch
          %375 = sbr.rel (%p373) target = $region56
        $region55: #{electra_generator_forward.1} parent=31 // pred_region
          %p376 = scmp.lt.s32.totalorder %s20, 1
          %s377 = scalar_select %p376, %s20, 1
          %s378 = smul.addr %s377, 8
          %s379 = scalar_lea.vmem %s9, %s378
        $region56: #{electra_generator_forward.1} parent=31 // pred_fallthru
          _
      $region32: #{electra_generator_forward.1} parent=5 // pred_fallthru
        _
      %p380 = scmp.le.s32.totalorder 1, %s20
      %p381 = scmp.lt.s32.totalorder %s20, 3
      %p382 = pnand %p380, %p381
      %p383 = pneg %p382
      // Predicated region
      $region57: #{electra_generator_forward.1} parent=5 // pred_check
        _
      $region58: #{electra_generator_forward.1} parent=5 // pred_check_branch
        %385 = sbr.rel (%p382) target = $region60
      $region59: #{electra_generator_forward.1} parent=5 // pred_region
        %s386 = ssub.s32 %s20, 1
        %p387 = pneg %p41
        %p388 = pneg %p38
        %p389 = pneg %p62
        %p390 = pneg %p59
        %p391 = pneg %p83
        %p392 = pneg %p80
        %p393 = pneg %p104
        %p394 = pneg %p101
        %p395 = scmp.lt.s32.totalorder %s25, 1
        %s396 = scalar_select %p395, %s25, 1
        %s397 = smul.addr %s396, 12
        %s398 = smul.addr %s397, 8
        %s399 = scalar_lea.vmem %s4, %s398
        %p400 = pneg %p130
        %p401 = pneg %p127
        %p402 = scmp.lt.s32.totalorder %s25, 1
        %s403 = scalar_select %p402, %s25, 1
        %s404 = smul.addr %s403, 4
        %s405 = smul.addr %s404, 8
        %s406 = scalar_lea.vmem %s5, %s405
        %p407 = pneg %p156
        %p408 = pneg %p153
        %p409 = scmp.lt.s32.totalorder %s25, 1
        %s410 = scalar_select %p409, %s25, 1
        %s411 = smul.addr %s410, 8
        %s412 = smul.addr %s411, 8
        %s413 = scalar_lea.vmem %s6, %s412
        %p414 = pneg %p182
        %p415 = pneg %p179
        %p416 = scmp.lt.s32.totalorder %s25, 1
        %s417 = scalar_select %p416, %s25, 1
        %s418 = smul.addr %s417, 4
        %s419 = smul.addr %s418, 8
        %s420 = scalar_lea.vmem %s7, %s419
        %p421 = pneg %p208
        %p422 = pneg %p205
        %p423 = scmp.lt.s32.totalorder %s25, 1
        %s424 = scalar_select %p423, %s25, 1
        %s425 = smul.addr %s424, 4
        %s426 = smul.addr %s425, 8
        %s427 = scalar_lea.vmem %s8, %s426
        %p428 = pneg %p234
        %p429 = pneg %p231
        %p430 = scmp.lt.s32.totalorder %s25, 1
        %s431 = scalar_select %p430, %s25, 1
        %s432 = smul.addr %s431, 8
        %s433 = scalar_lea.vmem %s9, %s432
        %p434 = pneg %p260
        %p435 = pneg %p257
        %p436 = pneg %p281
        %p437 = pneg %p278
        %p438 = pneg %p302
        %p439 = pneg %p299
        %p440 = scmp.lt.s32.totalorder %s25, 1
        %s441 = scalar_select %p440, %s25, 1
        %s442 = smul.addr %s441, 12
        %s443 = smul.addr %s442, 8
        %s444 = scalar_lea.vmem %s4, %s443
        %p445 = scmp.lt.s32.totalorder %s25, 1
        %s446 = scalar_select %p445, %s25, 1
        %s447 = smul.addr %s446, 4
        %s448 = smul.addr %s447, 8
        %s449 = scalar_lea.vmem %s5, %s448
        %p450 = scmp.lt.s32.totalorder %s25, 1
        %s451 = scalar_select %p450, %s25, 1
        %s452 = smul.addr %s451, 8
        %s453 = smul.addr %s452, 8
        %s454 = scalar_lea.vmem %s6, %s453
        %p455 = scmp.lt.s32.totalorder %s25, 1
        %s456 = scalar_select %p455, %s25, 1
        %s457 = smul.addr %s456, 4
        %s458 = smul.addr %s457, 8
        %s459 = scalar_lea.vmem %s7, %s458
        %p460 = scmp.lt.s32.totalorder %s25, 1
        %s461 = scalar_select %p460, %s25, 1
        %s462 = smul.addr %s461, 4
        %s463 = smul.addr %s462, 8
        %s464 = scalar_lea.vmem %s8, %s463
        %p465 = scmp.lt.s32.totalorder %s25, 1
        %s466 = scalar_select %p465, %s25, 1
        %s467 = smul.addr %s466, 8
        %s468 = scalar_lea.vmem %s9, %s467
        %p469 = scmp.eq.s32.totalorder %s25, 0
        // Predicated region
        $region61: #{electra_generator_forward.1} parent=59 // pred_check
          %p470 = pneg %p469
        $region62: #{electra_generator_forward.1} parent=59 // pred_check_branch
          %472 = sbr.rel (%p470) target = $region64
        $region63: #{electra_generator_forward.1} parent=59 // pred_region
          %v473 = vld [vmem:[%s0] sm:$0xff]
          %v474 = vld [vmem:[%s0 + $0x8] sm:$0xff]
          %v475 = vld [vmem:[%s2] sm:$0x1]
          %v476 = vld [vmem:[%s2 + $0x1] sm:$0x1]
          %vm477 = vcmask 261120
          %v478 = vsel %vm477, %v473, 0.0
          %479 = vadd.xlane.f32.xlu0 %v478
          %v480 = vpop.xlane.xlu0 %479
          %v481 = vsel %vm477, %v474, 0.0
          %482 = vadd.xlane.f32.xlu0 %v481
          %v483 = vpop.xlane.xlu0 %482
          %v484 = vrcp.pop 32.0
          %v485 = vmul.f32 %v480, %v484
          %v486 = vmul.f32 %v483, %v484
          %v487 = vsub.f32 %v473, %v485
          %v488 = vsub.f32 %v474, %v486
          %v489 = vmul.f32 %v487, %v487
          %v490 = vmul.f32 %v488, %v488
          %v491 = vsel %vm477, %v489, 0.0
          %492 = vadd.xlane.f32.xlu0 %v491
          %v493 = vpop.xlane.xlu0 %492
          %v494 = vsel %vm477, %v490, 0.0
          %495 = vadd.xlane.f32.xlu0 %v494
          %v496 = vpop.xlane.xlu0 %495
          %v497 = vmul.f32 %v493, %v484
          %v498 = vmul.f32 %v496, %v484
          %v499 = vadd.f32 %v497, 1e-12
          %v500 = vadd.f32 %v498, 1e-12
          %v501 = vrsqrt.pop %v499
          %v502 = vrsqrt.pop %v500
          %v503 = vmul.f32 %v487, %v501
          %v504 = vmul.f32 %v488, %v502
          %v505 = vlaneseq
          %v506 = vshrl.u32 %v505, 7
          %v507 = vsub.s32 0, %v506
          %v508 = vrot.slane %v475, %v507
          %v509 = vmul.f32 %v503, %v508
          %v510 = vmul.f32 %v504, %v508
          %v511 = vlaneseq
          %v512 = vshrl.u32 %v511, 7
          %v513 = vsub.s32 0, %v512
          %v514 = vrot.slane %v476, %v513
          %v515 = vadd.f32 %v509, %v514
          %v516 = vadd.f32 %v510, %v514
          %517 = vst.msk [vmem:[#allocation2] sm:$0xff] %vm477, %v515
          %518 = vst.msk [vmem:[#allocation2 + $0x8] sm:$0xff] %vm477, %v516
        $region64: #{electra_generator_forward.1} parent=59 // pred_fallthru
          _
        %v519 = vld [vmem:[#allocation2] sm:$0xff]
        %v520 = vld [vmem:[#allocation2 + $0x8] sm:$0xff]
        %v521 = vld [vmem:[%s444] sm:$0xff]
        %v522 = vld [vmem:[%s444 + $0x8] sm:$0xff]
        %v523 = vld [vmem:[%s444 + $0x10] sm:$0xff]
        %v524 = vld [vmem:[%s444 + $0x18] sm:$0xff]
        %v525 = vld [vmem:[%s444 + $0x20] sm:$0xff]
        %v526 = vld [vmem:[%s444 + $0x28] sm:$0xff]
        %v527 = vld [vmem:[%s444 + $0x30] sm:$0xff]
        %v528 = vld [vmem:[%s444 + $0x38] sm:$0xff]
        %v529 = vld [vmem:[%s444 + $0x40] sm:$0xff]
        %v530 = vld [vmem:[%s444 + $0x48] sm:$0xff]
        %v531 = vld [vmem:[%s444 + $0x50] sm:$0xff]
        %v532 = vld [vmem:[%s444 + $0x58] sm:$0xff]
        %v533 = vld [vmem:[%s468] sm:$0x1]
        %v534 = vlaneseq
        %v535 = vshrl.u32 %v534, 7
        %v536 = vsub.s32 0, %v535
        %v537 = vrot.slane %v533, %v536
        %vm538 = vcmask 261120
        %v540 = vsel %vm538, %v519, 0
        %v543 = vsel %vm538, %v520, 0
        %v546 = vsel %vm538, %v521, 0
        %v549 = vsel %vm538, %v522, 0
        %v552 = vsel %vm538, %v523, 0
        %v555 = vsel %vm538, %v524, 0
        %v558 = vsel %vm538, %v525, 0
        %v561 = vsel %vm538, %v526, 0
        %v564 = vsel %vm538, %v527, 0
        %v567 = vsel %vm538, %v528, 0
        %v570 = vsel %vm538, %v529, 0
        %v573 = vsel %vm538, %v530, 0
        %v576 = vsel %vm538, %v531, 0
        %v579 = vsel %vm538, %v532, 0
        %581 = vmatprep.subr.mxu0 0.0
        %582 = vmatpush1.xpose.msra.mxu0 %v546
        %583 = vmatprep.subr.mxu0 0.0
        %584 = vmatpush1.xpose.msra.mxu0 %v549
        %585 = vmatprep.subr.mxu0 0.0
        %586 = vmatpush1.xpose.msra.mxu0 %v552
        %587 = vmatprep.subr.mxu0 0.0
        %588 = vmatpush1.xpose.msra.mxu0 %v555
        %589 = vmatprep.subr.mxu0 0.0
        %590 = vmatpush1.xpose.msra.mxu0 %v558
        %591 = vmatprep.subr.mxu0 0.0
        %592 = vmatpush1.xpose.msra.mxu0 %v561
        %593 = vmatprep.subr.mxu0 0.0
        %594 = vmatpush1.xpose.msra.mxu0 %v564
        %595 = vmatprep.subr.mxu0 0.0
        %596 = vmatpush1.xpose.msra.mxu0 %v567
        %597 = vmatprep.subr.mxu0 0.0
        %598 = vmatpush1.xpose.msra.mxu0 %v570
        %599 = vmatprep.subr.mxu0 0.0
        %600 = vmatpush1.xpose.msra.mxu0 %v573
        %601 = vmatprep.subr.mxu0 0.0
        %602 = vmatpush1.xpose.msra.mxu0 %v576
        %603 = vmatprep.subr.mxu0 0.0
        %604 = vmatpush1.xpose.msra.mxu0 %v579
        %605 = vmatprep.subr.mxu0 0.0
        %606 = vmatpush1.xpose.msra.mxu0 0.0
        %607 = vmatprep.subr.mxu0 0.0
        %608 = vmatpush1.xpose.msra.mxu0 0.0
        %609 = vmatprep.subr.mxu0 0.0
        %610 = vmatpush1.xpose.msra.mxu0 0.0
        %611 = vmatprep.subr.mxu0 0.0
        %612 = vmatpush1.xpose.msra.mxu0 0.0
        %613 = vmatprep.subr.mxu0 0.0
        %614 = vmatpush1.xpose.msra.mxu0 0.0
        %615 = vmatprep.subr.mxu0 0.0
        %616 = vmatpush1.xpose.msra.mxu0 0.0
        %617 = vmatprep.subr.mxu0 0.0
        %618 = vmatpush1.xpose.msra.mxu0 0.0
        %619 = vmatprep.subr.mxu0 0.0
        %620 = vmatpush1.xpose.msra.mxu0 0.0
        %621 = vmatprep.subr.mxu0 0.0
        %622 = vmatpush1.xpose.msra.mxu0 0.0
        %623 = vmatprep.subr.mxu0 0.0
        %624 = vmatpush1.xpose.msra.mxu0 0.0
        %625 = vmatprep.subr.mxu0 0.0
        %626 = vmatpush1.xpose.msra.mxu0 0.0
        %627 = vmatprep.subr.mxu0 0.0
        %628 = vmatpush1.xpose.msra.mxu0 0.0
        %629 = vmatprep.subr.mxu0 0.0
        %630 = vmatpush1.xpose.msra.mxu0 0.0
        %631 = vmatprep.subr.mxu0 0.0
        %632 = vmatpush1.xpose.msra.mxu0 0.0
        %633 = vmatprep.subr.mxu0 0.0
        %634 = vmatpush1.xpose.msra.mxu0 0.0
        %635 = vmatprep.subr.mxu0 0.0
        %636 = vmatpush1.xpose.msra.mxu0 0.0
        %637 = vmatprep.subr.mxu0 0.0
        %638 = vmatpush1.xpose.msra.mxu0 0.0
        %639 = vmatprep.subr.mxu0 0.0
        %640 = vmatpush1.xpose.msra.mxu0 0.0
        %641 = vmatprep.subr.mxu0 0.0
        %642 = vmatpush1.xpose.msra.mxu0 0.0
        %643 = vmatprep.subr.mxu0 0.0
        %644 = vmatpush1.xpose.msra.mxu0 0.0
        %645 = vmatprep.mubr.f32.mxu0 0.0
        %646 = vmatmul.mubr.f32.gmra.mrb[0].mxu0 %v540
        %v647 = vpop.f32.mrb[0].mxu0
        %v648 = vadd.f32 %v537, %v647
        %v649 = vpop.f32.mrb[0].mxu0
        %650 = vmatprep.mubr.f32.mxu0 0.0
        %651 = vmatmul.mubr.f32.gmra.mrb[0].mxu0 %v543
        %v652 = vpop.f32.mrb[0].mxu0
        %v653 = vadd.f32 %v537, %v652
        %v654 = vpop.f32.mrb[0].mxu0
        %655 = vdwg.mxu0
        %v656 = vlaneseq
        %v657 = vshrl.u32 %v656, 7
        %v658 = vlaneseq
        %v659 = vand.u32 %v658, 127
        %v660 = vsub.s32 %v657, %v659
        %v661 = vadd.s32 %v660, 15
        %v662 = vlaneseq
        %v663 = vshrl.u32 %v662, 7
        %v664 = vsub.s32 0, %v663
        %v665 = vrot.slane %v661, %v664
        %667 = vbcast.lane.b32.xlu0 %v665, 256
        %v668 = vpop.permute.xlu0 %667
        %v669 = vlaneseq
        %v670 = vshrl.u32 %v669, 7
        %v671 = vsub.s32 1, %v670
        %v672 = vrot.slane %v661, %v671
        %674 = vbcast.lane.b32.xlu0 %v672, 256
        %v675 = vpop.permute.xlu0 %674
        %v676 = vlaneseq
        %v677 = vshrl.u32 %v676, 7
        %v678 = vsub.s32 2, %v677
        %v679 = vrot.slane %v661, %v678
        %681 = vbcast.lane.b32.xlu0 %v679, 256
        %v682 = vpop.permute.xlu0 %681
        %v683 = vlaneseq
        %v684 = vshrl.u32 %v683, 7
        %v685 = vsub.s32 3, %v684
        %v686 = vrot.slane %v661, %v685
        %688 = vbcast.lane.b32.xlu0 %v686, 256
        %v689 = vpop.permute.xlu0 %688
        %v690 = vlaneseq
        %v691 = vshrl.u32 %v690, 7
        %v692 = vsub.s32 4, %v691
        %v693 = vrot.slane %v661, %v692
        %695 = vbcast.lane.b32.xlu0 %v693, 256
        %v696 = vpop.permute.xlu0 %695
        %v697 = vlaneseq
        %v698 = vshrl.u32 %v697, 7
        %v699 = vsub.s32 5, %v698
        %v700 = vrot.slane %v661, %v699
        %702 = vbcast.lane.b32.xlu0 %v700, 256
        %v703 = vpop.permute.xlu0 %702
        %v704 = vlaneseq
        %v705 = vshrl.u32 %v704, 7
        %v706 = vsub.s32 6, %v705
        %v707 = vrot.slane %v661, %v706
        %709 = vbcast.lane.b32.xlu0 %v707, 256
        %v710 = vpop.permute.xlu0 %709
        %v711 = vlaneseq
        %v712 = vshrl.u32 %v711, 7
        %v713 = vsub.s32 7, %v712
        %v714 = vrot.slane %v661, %v713
        %716 = vbcast.lane.b32.xlu0 %v714, 256
        %v717 = vpop.permute.xlu0 %716
        %vm718 = vcmp.eq.s32.totalorder %v659, %v668
        %vm719 = vcmp.eq.s32.totalorder %v659, %v675
        %vm720 = vcmp.eq.s32.totalorder %v659, %v682
        %vm721 = vcmp.eq.s32.totalorder %v659, %v689
        %vm722 = vcmp.eq.s32.totalorder %v659, %v696
        %vm723 = vcmp.eq.s32.totalorder %v659, %v703
        %vm724 = vcmp.eq.s32.totalorder %v659, %v710
        %vm725 = vcmp.eq.s32.totalorder %v659, %v717
        %v726 = vsel %vm718, 1, 0
        %v727 = vsel %vm719, 1, 0
        %v728 = vsel %vm720, 1, 0
        %v729 = vsel %vm721, 1, 0
        %v730 = vsel %vm722, 1, 0
        %v731 = vsel %vm723, 1, 0
        %v732 = vsel %vm724, 1, 0
        %v733 = vsel %vm725, 1, 0
        %v734 = vcvt.s32.f32 %v726
        %v735 = vcvt.s32.f32 %v727
        %v736 = vcvt.s32.f32 %v728
        %v737 = vcvt.s32.f32 %v729
        %v738 = vcvt.s32.f32 %v730
        %v739 = vcvt.s32.f32 %v731
        %v740 = vcvt.s32.f32 %v732
        %v741 = vcvt.s32.f32 %v733
        %v742 = vld [vmem:[%s464] sm:$0xff]
        %v743 = vld [vmem:[%s464 + $0x8] sm:$0xff]
        %v744 = vld [vmem:[%s464 + $0x10] sm:$0xff]
        %v745 = vld [vmem:[%s464 + $0x18] sm:$0x7f]
        %v746 = vld [vmem:[%s1] sm:$0x3]
        %vm747 = vcmask 130048
        %v749 = vsel %vm747, %v648, 0
        %v752 = vsel %vm747, %v653, 0
        %v755 = vsel %vm747, %v742, 0
        %v758 = vsel %vm747, %v743, 0
        %v761 = vsel %vm747, %v744, 0
        %v764 = vsel %vm747, %v745, 0
        %766 = vmatprep.subr.mxu0 0.0
        %767 = vmatpush1.xpose.msra.mxu0 %v755
        %768 = vmatprep.subr.mxu0 0.0
        %769 = vmatpush1.xpose.msra.mxu0 %v758
        %770 = vmatprep.subr.mxu0 0.0
        %771 = vmatpush1.xpose.msra.mxu0 %v761
        %772 = vmatprep.subr.mxu0 0.0
        %773 = vmatpush1.xpose.msra.mxu0 %v764
        %774 = vmatprep.subr.mxu0 0.0
        %775 = vmatpush1.xpose.msra.mxu0 0.0
        %776 = vmatprep.subr.mxu0 0.0
        %777 = vmatpush1.xpose.msra.mxu0 0.0
        %778 = vmatprep.subr.mxu0 0.0
        %779 = vmatpush1.xpose.msra.mxu0 0.0
        %780 = vmatprep.subr.mxu0 0.0
        %781 = vmatpush1.xpose.msra.mxu0 0.0
        %782 = vmatprep.subr.mxu0 0.0
        %783 = vmatpush1.xpose.msra.mxu0 0.0
        %784 = vmatprep.subr.mxu0 0.0
        %785 = vmatpush1.xpose.msra.mxu0 0.0
        %786 = vmatprep.subr.mxu0 0.0
        %787 = vmatpush1.xpose.msra.mxu0 0.0
        %788 = vmatprep.subr.mxu0 0.0
        %789 = vmatpush1.xpose.msra.mxu0 0.0
        %790 = vmatprep.subr.mxu0 0.0
        %791 = vmatpush1.xpose.msra.mxu0 0.0
        %792 = vmatprep.subr.mxu0 0.0
        %793 = vmatpush1.xpose.msra.mxu0 0.0
        %794 = vmatprep.subr.mxu0 0.0
        %795 = vmatpush1.xpose.msra.mxu0 0.0
        %796 = vmatprep.subr.mxu0 0.0
        %797 = vmatpush1.xpose.msra.mxu0 0.0
        %798 = vmatprep.subr.mxu0 0.0
        %799 = vmatpush1.xpose.msra.mxu0 0.0
        %800 = vmatprep.subr.mxu0 0.0
        %801 = vmatpush1.xpose.msra.mxu0 0.0
        %802 = vmatprep.subr.mxu0 0.0
        %803 = vmatpush1.xpose.msra.mxu0 0.0
        %804 = vmatprep.subr.mxu0 0.0
        %805 = vmatpush1.xpose.msra.mxu0 0.0
        %806 = vmatprep.subr.mxu0 0.0
        %807 = vmatpush1.xpose.msra.mxu0 0.0
        %808 = vmatprep.subr.mxu0 0.0
        %809 = vmatpush1.xpose.msra.mxu0 0.0
        %810 = vmatprep.subr.mxu0 0.0
        %811 = vmatpush1.xpose.msra.mxu0 0.0
        %812 = vmatprep.subr.mxu0 0.0
        %813 = vmatpush1.xpose.msra.mxu0 0.0
        %814 = vmatprep.subr.mxu0 0.0
        %815 = vmatpush1.xpose.msra.mxu0 0.0
        %816 = vmatprep.subr.mxu0 0.0
        %817 = vmatpush1.xpose.msra.mxu0 0.0
        %818 = vmatprep.subr.mxu0 0.0
        %819 = vmatpush1.xpose.msra.mxu0 0.0
        %820 = vmatprep.subr.mxu0 0.0
        %821 = vmatpush1.xpose.msra.mxu0 0.0
        %822 = vmatprep.subr.mxu0 0.0
        %823 = vmatpush1.xpose.msra.mxu0 0.0
        %824 = vmatprep.subr.mxu0 0.0
        %825 = vmatpush1.xpose.msra.mxu0 0.0
        %826 = vmatprep.subr.mxu0 0.0
        %827 = vmatpush1.xpose.msra.mxu0 0.0
        %828 = vmatprep.subr.mxu0 0.0
        %829 = vmatpush1.xpose.msra.mxu0 0.0
        %830 = vmatprep.mubr.f32.mxu0 0.0
        %831 = vmatmul.mubr.f32.gmra.mrb[0].mxu0 %v749
        %v832 = vpop.f32.mrb[0].mxu0
        %v833 = vadd.f32 0.0, %v832
        %v834 = vpop.f32.mrb[0].mxu0
        %835 = vmatprep.mubr.f32.mxu0 0.0
        %836 = vmatmul.mubr.f32.gmra.mrb[0].mxu0 %v752
        %v837 = vpop.f32.mrb[0].mxu0
        %v838 = vadd.f32 0.0, %v837
        %v839 = vpop.f32.mrb[0].mxu0
        %840 = vdwg.mxu0
        %841 = vrot.lane.b32.xlu0 %v648, 96
        %v842 = vpop.permute.xlu0 %841
        %843 = vrot.lane.b32.xlu0 %v653, 96
        %v844 = vpop.permute.xlu0 %843
        %v845 = vsel %vm747, %v842, 0
        %v847 = vsel %vm747, %v844, 0
        %849 = vmatprep.subr.mxu0 0.0
        %850 = vmatpush1.xpose.msra.mxu0 %v755
        %851 = vmatprep.subr.mxu0 0.0
        %852 = vmatpush1.xpose.msra.mxu0 %v758
        %853 = vmatprep.subr.mxu0 0.0
        %854 = vmatpush1.xpose.msra.mxu0 %v761
        %855 = vmatprep.subr.mxu0 0.0
        %856 = vmatpush1.xpose.msra.mxu0 %v764
        %857 = vmatprep.subr.mxu0 0.0
        %858 = vmatpush1.xpose.msra.mxu0 0.0
        %859 = vmatprep.subr.mxu0 0.0
        %860 = vmatpush1.xpose.msra.mxu0 0.0
        %861 = vmatprep.subr.mxu0 0.0
        %862 = vmatpush1.xpose.msra.mxu0 0.0
        %863 = vmatprep.subr.mxu0 0.0
        %864 = vmatpush1.xpose.msra.mxu0 0.0
        %865 = vmatprep.subr.mxu0 0.0
        %866 = vmatpush1.xpose.msra.mxu0 0.0
        %867 = vmatprep.subr.mxu0 0.0
        %868 = vmatpush1.xpose.msra.mxu0 0.0
        %869 = vmatprep.subr.mxu0 0.0
        %870 = vmatpush1.xpose.msra.mxu0 0.0
        %871 = vmatprep.subr.mxu0 0.0
        %872 = vmatpush1.xpose.msra.mxu0 0.0
        %873 = vmatprep.subr.mxu0 0.0
        %874 = vmatpush1.xpose.msra.mxu0 0.0
        %875 = vmatprep.subr.mxu0 0.0
        %876 = vmatpush1.xpose.msra.mxu0 0.0
        %877 = vmatprep.subr.mxu0 0.0
        %878 = vmatpush1.xpose.msra.mxu0 0.0
        %879 = vmatprep.subr.mxu0 0.0
        %880 = vmatpush1.xpose.msra.mxu0 0.0
        %881 = vmatprep.subr.mxu0 0.0
        %882 = vmatpush1.xpose.msra.mxu0 0.0
        %883 = vmatprep.subr.mxu0 0.0
        %884 = vmatpush1.xpose.msra.mxu0 0.0
        %885 = vmatprep.subr.mxu0 0.0
        %886 = vmatpush1.xpose.msra.mxu0 0.0
        %887 = vmatprep.subr.mxu0 0.0
        %888 = vmatpush1.xpose.msra.mxu0 0.0
        %889 = vmatprep.subr.mxu0 0.0
        %890 = vmatpush1.xpose.msra.mxu0 0.0
        %891 = vmatprep.subr.mxu0 0.0
        %892 = vmatpush1.xpose.msra.mxu0 0.0
        %893 = vmatprep.subr.mxu0 0.0
        %894 = vmatpush1.xpose.msra.mxu0 0.0
        %895 = vmatprep.subr.mxu0 0.0
        %896 = vmatpush1.xpose.msra.mxu0 0.0
        %897 = vmatprep.subr.mxu0 0.0
        %898 = vmatpush1.xpose.msra.mxu0 0.0
        %899 = vmatprep.subr.mxu0 0.0
        %900 = vmatpush1.xpose.msra.mxu0 0.0
        %901 = vmatprep.subr.mxu0 0.0
        %902 = vmatpush1.xpose.msra.mxu0 0.0
        %903 = vmatprep.subr.mxu0 0.0
        %904 = vmatpush1.xpose.msra.mxu0 0.0
        %905 = vmatprep.subr.mxu0 0.0
        %906 = vmatpush1.xpose.msra.mxu0 0.0
        %907 = vmatprep.subr.mxu0 0.0
        %908 = vmatpush1.xpose.msra.mxu0 0.0
        %909 = vmatprep.subr.mxu0 0.0
        %910 = vmatpush1.xpose.msra.mxu0 0.0
        %911 = vmatprep.subr.mxu0 0.0
        %912 = vmatpush1.xpose.msra.mxu0 0.0
        %913 = vmatprep.mubr.f32.mxu0 0.0
        %914 = vmatmul.mubr.f32.gmra.mrb[0].mxu0 %v845
        %v915 = vpop.f32.mrb[0].mxu0
        %v916 = vadd.f32 0.0, %v915
        %v917 = vpop.f32.mrb[0].mxu0
        %918 = vmatprep.mubr.f32.mxu0 0.0
        %919 = vmatmul.mubr.f32.gmra.mrb[0].mxu0 %v847
        %v920 = vpop.f32.mrb[0].mxu0
        %v921 = vadd.f32 0.0, %v920
        %v922 = vpop.f32.mrb[0].mxu0
        %923 = vdwg.mxu0
        %v925 = vcombine.high %v833, %v833
        %v927 = vunpack.c.l.s4 1966171168
        %v928 = vunpack.c.0.s8 %v927
        %v929 = vlaneseq
        %v930 = vshrl.u32 %v929, 7
        %v931 = vsub.s32 %v928, %v930
        %v932 = vrot.slane %v833, %v931
        %v934 = vunpack.c.l.s4 1966171168
        %v935 = vunpack.c.0.s8 %v934
        %v936 = vlaneseq
        %v937 = vshrl.u32 %v936, 7
        %v938 = vsub.s32 %v935, %v937
        %v939 = vrot.slane %v925, %v938
        %v940 = vcombine.high %v932, %v932
        %v941 = vcombine.high %v939, %v939
        %v943 = vunpack.c.l.s4 1966171168
        %v944 = vunpack.c.0.s8 %v943
        %v945 = vlaneseq
        %v946 = vshrl.u32 %v945, 7
        %v947 = vsub.s32 %v944, %v946
        %v948 = vrot.slane %v932, %v947
        %v950 = vunpack.c.l.s4 1966171168
        %v951 = vunpack.c.0.s8 %v950
        %v952 = vlaneseq
        %v953 = vshrl.u32 %v952, 7
        %v954 = vsub.s32 %v951, %v953
        %v955 = vrot.slane %v939, %v954
        %v957 = vunpack.c.l.s4 1966171168
        %v958 = vunpack.c.0.s8 %v957
        %v959 = vlaneseq
        %v960 = vshrl.u32 %v959, 7
        %v961 = vsub.s32 %v958, %v960
        %v962 = vrot.slane %v940, %v961
        %v964 = vunpack.c.l.s4 1966171168
        %v965 = vunpack.c.0.s8 %v964
        %v966 = vlaneseq
        %v967 = vshrl.u32 %v966, 7
        %v968 = vsub.s32 %v965, %v967
        %v969 = vrot.slane %v941, %v968
        %v970 = vcombine.high %v948, %v948
        %v971 = vcombine.high %v955, %v955
        %v972 = vcombine.high %v962, %v962
        %v973 = vcombine.high %v969, %v969
        %v974 = vlaneseq
        %v975 = vshrl.u32 %v974, 7
        %v976 = vsub.s32 0, %v975
        %v977 = vrot.slane %v948, %v976
        %v978 = vlaneseq
        %v979 = vshrl.u32 %v978, 7
        %v980 = vsub.s32 0, %v979
        %v981 = vrot.slane %v962, %v980
        %v982 = vlaneseq
        %v983 = vshrl.u32 %v982, 7
        %v984 = vsub.s32 0, %v983
        %v985 = vrot.slane %v970, %v984
        %v986 = vlaneseq
        %v987 = vshrl.u32 %v986, 7
        %v988 = vsub.s32 0, %v987
        %v989 = vrot.slane %v972, %v988
        %v990 = vlaneseq
        %v991 = vshrl.u32 %v990, 7
        %v992 = vsub.s32 0, %v991
        %v993 = vrot.slane %v955, %v992
        %v994 = vlaneseq
        %v995 = vshrl.u32 %v994, 7
        %v996 = vsub.s32 0, %v995
        %v997 = vrot.slane %v969, %v996
        %v998 = vlaneseq
        %v999 = vshrl.u32 %v998, 7
        %v1000 = vsub.s32 0, %v999
        %v1001 = vrot.slane %v971, %v1000
        %v1002 = vlaneseq
        %v1003 = vshrl.u32 %v1002, 7
        %v1004 = vsub.s32 0, %v1003
        %v1005 = vrot.slane %v973, %v1004
        %v1014 = vmul.f32 %v977, %v734
        %v1015 = vmul.f32 %v981, %v735
        %v1016 = vmul.f32 %v985, %v736
        %v1017 = vmul.f32 %v989, %v737
        %v1018 = vmul.f32 %v993, %v738
        %v1019 = vmul.f32 %v997, %v739
        %v1020 = vmul.f32 %v1001, %v740
        %v1021 = vmul.f32 %v1005, %v741
        %vm1022 = vcmask 252928
        %v1023 = vsel %vm1022, %v1014, 0.0
        %1024 = vadd.xlane.f32.xlu0 %v1023
        %v1025 = vpop.xlane.xlu0 %1024
        %v1026 = vsel %vm1022, %v1015, 0.0
        %1027 = vadd.xlane.f32.xlu0 %v1026
        %v1028 = vpop.xlane.xlu0 %1027
        %v1029 = vsel %vm1022, %v1016, 0.0
        %1030 = vadd.xlane.f32.xlu0 %v1029
        %v1031 = vpop.xlane.xlu0 %1030
        %v1032 = vsel %vm1022, %v1017, 0.0
        %1033 = vadd.xlane.f32.xlu0 %v1032
        %v1034 = vpop.xlane.xlu0 %1033
        %v1035 = vsel %vm1022, %v1018, 0.0
        %1036 = vadd.xlane.f32.xlu0 %v1035
        %v1037 = vpop.xlane.xlu0 %1036
        %v1038 = vsel %vm1022, %v1019, 0.0
        %1039 = vadd.xlane.f32.xlu0 %v1038
        %v1040 = vpop.xlane.xlu0 %1039
        %v1041 = vsel %vm1022, %v1020, 0.0
        %1042 = vadd.xlane.f32.xlu0 %v1041
        %v1043 = vpop.xlane.xlu0 %1042
        %v1044 = vsel %vm1022, %v1021, 0.0
        %1045 = vadd.xlane.f32.xlu0 %v1044
        %v1046 = vpop.xlane.xlu0 %1045
        %v1047 = vmul.f32 %v916, %v734
        %v1048 = vmul.f32 %v916, %v735
        %v1049 = vmul.f32 %v916, %v736
        %v1050 = vmul.f32 %v916, %v737
        %v1051 = vmul.f32 %v916, %v738
        %v1052 = vmul.f32 %v916, %v739
        %v1053 = vmul.f32 %v916, %v740
        %v1054 = vmul.f32 %v916, %v741
        %v1055 = vsel %vm1022, %v1047, 0.0
        %1056 = vadd.xlane.f32.xlu0 %v1055
        %v1057 = vpop.xlane.xlu0 %1056
        %v1058 = vsel %vm1022, %v1048, 0.0
        %1059 = vadd.xlane.f32.xlu0 %v1058
        %v1060 = vpop.xlane.xlu0 %1059
        %v1061 = vsel %vm1022, %v1049, 0.0
        %1062 = vadd.xlane.f32.xlu0 %v1061
        %v1063 = vpop.xlane.xlu0 %1062
        %v1064 = vsel %vm1022, %v1050, 0.0
        %1065 = vadd.xlane.f32.xlu0 %v1064
        %v1066 = vpop.xlane.xlu0 %1065
        %v1067 = vsel %vm1022, %v1051, 0.0
        %1068 = vadd.xlane.f32.xlu0 %v1067
        %v1069 = vpop.xlane.xlu0 %1068
        %v1070 = vsel %vm1022, %v1052, 0.0
        %1071 = vadd.xlane.f32.xlu0 %v1070
        %v1072 = vpop.xlane.xlu0 %1071
        %v1073 = vsel %vm1022, %v1053, 0.0
        %1074 = vadd.xlane.f32.xlu0 %v1073
        %v1075 = vpop.xlane.xlu0 %1074
        %v1076 = vsel %vm1022, %v1054, 0.0
        %1077 = vadd.xlane.f32.xlu0 %v1076
        %v1078 = vpop.xlane.xlu0 %1077
        %v1087 = vlaneseq
        %v1088 = vshrl.u32 %v1087, 7
        %v1089 = vsub.s32 %v659, %v1088
        %v1090 = vrot.slane %v1025, %v1089
        %v1091 = vlaneseq
        %v1092 = vshrl.u32 %v1091, 7
        %v1093 = vsub.s32 %v659, %v1092
        %v1094 = vrot.slane %v1028, %v1093
        %v1095 = vlaneseq
        %v1096 = vshrl.u32 %v1095, 7
        %v1097 = vsub.s32 %v659, %v1096
        %v1098 = vrot.slane %v1031, %v1097
        %v1099 = vlaneseq
        %v1100 = vshrl.u32 %v1099, 7
        %v1101 = vsub.s32 %v659, %v1100
        %v1102 = vrot.slane %v1034, %v1101
        %v1103 = vlaneseq
        %v1104 = vshrl.u32 %v1103, 7
        %v1105 = vsub.s32 %v659, %v1104
        %v1106 = vrot.slane %v1037, %v1105
        %v1107 = vlaneseq
        %v1108 = vshrl.u32 %v1107, 7
        %v1109 = vsub.s32 %v659, %v1108
        %v1110 = vrot.slane %v1040, %v1109
        %v1111 = vlaneseq
        %v1112 = vshrl.u32 %v1111, 7
        %v1113 = vsub.s32 %v659, %v1112
        %v1114 = vrot.slane %v1043, %v1113
        %v1115 = vlaneseq
        %v1116 = vshrl.u32 %v1115, 7
        %v1117 = vsub.s32 %v659, %v1116
        %v1118 = vrot.slane %v1046, %v1117
        %vm1119 = vcmask 1041409
        %v1120 = vsel %vm1119, %v1094, %v1090
        %vm1121 = vcmask 1042434
        %v1122 = vsel %vm1121, %v1098, %v1120
        %vm1123 = vcmask 1043459
        %v1124 = vsel %vm1123, %v1102, %v1122
        %vm1125 = vcmask 1044484
        %v1126 = vsel %vm1125, %v1106, %v1124
        %vm1127 = vcmask 1045509
        %v1128 = vsel %vm1127, %v1110, %v1126
        %vm1129 = vcmask 1046534
        %v1130 = vsel %vm1129, %v1114, %v1128
        %vm1131 = vcmask 1047559
        %v1132 = vsel %vm1131, %v1118, %v1130
        %1134 = vmatprep.subr.mxu0 0.0
        %1135 = vmatpush1.xpose.msra.mxu0 %v845
        %1136 = vmatprep.subr.mxu0 0.0
        %1137 = vmatpush1.xpose.msra.mxu0 0.0
        %1138 = vmatprep.subr.mxu0 0.0
        %1139 = vmatpush1.xpose.msra.mxu0 0.0
        %1140 = vmatprep.subr.mxu0 0.0
        %1141 = vmatpush1.xpose.msra.mxu0 0.0
        %1142 = vmatprep.subr.mxu0 0.0
        %1143 = vmatpush1.xpose.msra.mxu0 0.0
        %1144 = vmatprep.subr.mxu0 0.0
        %1145 = vmatpush1.xpose.msra.mxu0 0.0
        %1146 = vmatprep.subr.mxu0 0.0
        %1147 = vmatpush1.xpose.msra.mxu0 0.0
        %1148 = vmatprep.subr.mxu0 0.0
        %1149 = vmatpush1.xpose.msra.mxu0 0.0
        %1150 = vmatprep.subr.mxu0 0.0
        %1151 = vmatpush1.xpose.msra.mxu0 0.0
        %1152 = vmatprep.subr.mxu0 0.0
        %1153 = vmatpush1.xpose.msra.mxu0 0.0
        %1154 = vmatprep.subr.mxu0 0.0
        %1155 = vmatpush1.xpose.msra.mxu0 0.0
        %1156 = vmatprep.subr.mxu0 0.0
        %1157 = vmatpush1.xpose.msra.mxu0 0.0
        %1158 = vmatprep.subr.mxu0 0.0
        %1159 = vmatpush1.xpose.msra.mxu0 0.0
        %1160 = vmatprep.subr.mxu0 0.0
        %1161 = vmatpush1.xpose.msra.mxu0 0.0
        %1162 = vmatprep.subr.mxu0 0.0
        %1163 = vmatpush1.xpose.msra.mxu0 0.0
        %1164 = vmatprep.subr.mxu0 0.0
        %1165 = vmatpush1.xpose.msra.mxu0 0.0
        %1166 = vmatprep.subr.mxu0 0.0
        %1167 = vmatpush1.xpose.msra.mxu0 0.0
        %1168 = vmatprep.subr.mxu0 0.0
        %1169 = vmatpush1.xpose.msra.mxu0 0.0
        %1170 = vmatprep.subr.mxu0 0.0
        %1171 = vmatpush1.xpose.msra.mxu0 0.0
        %1172 = vmatprep.subr.mxu0 0.0
        %1173 = vmatpush1.xpose.msra.mxu0 0.0
        %1174 = vmatprep.subr.mxu0 0.0
        %1175 = vmatpush1.xpose.msra.mxu0 0.0
        %1176 = vmatprep.subr.mxu0 0.0
        %1177 = vmatpush1.xpose.msra.mxu0 0.0
        %1178 = vmatprep.subr.mxu0 0.0
        %1179 = vmatpush1.xpose.msra.mxu0 0.0
        %1180 = vmatprep.subr.mxu0 0.0
        %1181 = vmatpush1.xpose.msra.mxu0 0.0
        %1182 = vmatprep.subr.mxu0 0.0
        %1183 = vmatpush1.xpose.msra.mxu0 0.0
        %1184 = vmatprep.subr.mxu0 0.0
        %1185 = vmatpush1.xpose.msra.mxu0 0.0
        %1186 = vmatprep.subr.mxu0 0.0
        %1187 = vmatpush1.xpose.msra.mxu0 0.0
        %1188 = vmatprep.subr.mxu0 0.0
        %1189 = vmatpush1.xpose.msra.mxu0 0.0
        %1190 = vmatprep.subr.mxu0 0.0
        %1191 = vmatpush1.xpose.msra.mxu0 0.0
        %1192 = vmatprep.subr.mxu0 0.0
        %1193 = vmatpush1.xpose.msra.mxu0 0.0
        %1194 = vmatprep.subr.mxu0 0.0
        %1195 = vmatpush1.xpose.msra.mxu0 0.0
        %1196 = vmatprep.subr.mxu0 0.0
        %1197 = vmatpush1.xpose.msra.mxu0 0.0
        %1198 = vmatprep.mubr.f32.mxu0 0.0
        %1199 = vmatmul.mubr.f32.gmra.mrb[0].mxu0 %v749
        %v1200 = vpop.f32.mrb[0].mxu0
        %v1201 = vadd.f32 %v1132, %v1200
        %v1202 = vpop.f32.mrb[0].mxu0
        %1203 = vdwg.mxu0
        %v1212 = vlaneseq
        %v1213 = vshrl.u32 %v1212, 7
        %v1214 = vsub.s32 %v659, %v1213
        %v1215 = vrot.slane %v1057, %v1214
        %v1216 = vlaneseq
        %v1217 = vshrl.u32 %v1216, 7
        %v1218 = vsub.s32 %v659, %v1217
        %v1219 = vrot.slane %v1060, %v1218
        %v1220 = vlaneseq
        %v1221 = vshrl.u32 %v1220, 7
        %v1222 = vsub.s32 %v659, %v1221
        %v1223 = vrot.slane %v1063, %v1222
        %v1224 = vlaneseq
        %v1225 = vshrl.u32 %v1224, 7
        %v1226 = vsub.s32 %v659, %v1225
        %v1227 = vrot.slane %v1066, %v1226
        %v1228 = vlaneseq
        %v1229 = vshrl.u32 %v1228, 7
        %v1230 = vsub.s32 %v659, %v1229
        %v1231 = vrot.slane %v1069, %v1230
        %v1232 = vlaneseq
        %v1233 = vshrl.u32 %v1232, 7
        %v1234 = vsub.s32 %v659, %v1233
        %v1235 = vrot.slane %v1072, %v1234
        %v1236 = vlaneseq
        %v1237 = vshrl.u32 %v1236, 7
        %v1238 = vsub.s32 %v659, %v1237
        %v1239 = vrot.slane %v1075, %v1238
        %v1240 = vlaneseq
        %v1241 = vshrl.u32 %v1240, 7
        %v1242 = vsub.s32 %v659, %v1241
        %v1243 = vrot.slane %v1078, %v1242
        %v1244 = vsel %vm1119, %v1219, %v1215
        %v1245 = vsel %vm1121, %v1223, %v1244
        %v1246 = vsel %vm1123, %v1227, %v1245
        %v1247 = vsel %vm1125, %v1231, %v1246
        %v1248 = vsel %vm1127, %v1235, %v1247
        %v1249 = vsel %vm1129, %v1239, %v1248
        %v1250 = vsel %vm1131, %v1243, %v1249
        %v1252 = vadd.f32 %v1201, %v1250
        %v1253 = vmul.f32 %v1252, 0.25
        %v1254 = vlaneseq
        %v1255 = vshrl.u32 %v1254, 7
        %v1256 = vsub.s32 0, %v1255
        %v1257 = vrot.slane %v746, %v1256
        %v1258 = vadd.f32 %v1253, %v1257
        %vm1259 = vcmask 64512
        %v1260 = vsel %vm1259, %v1258, -inf
        %1261 = vmax.xlane.f32.xlu0 %v1260
        %v1262 = vpop.xlane.xlu0 %1261
        %v1263 = vsub.f32 %v1258, %v1262
        %v1264 = vmul.f32 %v1263, 1.442695
        %v1265 = vpow.pop %v1264
        %v1266 = vsel %vm1259, %v1265, 0.0
        %1267 = vadd.xlane.f32.xlu0 %v1266
        %v1268 = vpop.xlane.xlu0 %1267
        %v1269 = vrcp.pop %v1268
        %v1270 = vmul.f32 %v1265, %v1269
        %1271 = vrot.lane.b32.xlu0 %v648, 64
        %v1272 = vpop.permute.xlu0 %1271
        %v1275 = vsel %vm1259, %v1270, 0
        %1277 = vmatprep.subr.mxu0 0.0
        %1278 = vmatpush1.msra.mxu0 %v1272
        %1279 = vmatprep.subr.mxu0 0.0
        %1280 = vmatpush1.msra.mxu0 0.0
        %1281 = vmatprep.subr.mxu0 0.0
        %1282 = vmatpush1.msra.mxu0 0.0
        %1283 = vmatprep.subr.mxu0 0.0
        %1284 = vmatpush1.msra.mxu0 0.0
        %1285 = vmatprep.subr.mxu0 0.0
        %1286 = vmatpush1.msra.mxu0 0.0
        %1287 = vmatprep.subr.mxu0 0.0
        %1288 = vmatpush1.msra.mxu0 0.0
        %1289 = vmatprep.subr.mxu0 0.0
        %1290 = vmatpush1.msra.mxu0 0.0
        %1291 = vmatprep.subr.mxu0 0.0
        %1292 = vmatpush1.msra.mxu0 0.0
        %1293 = vmatprep.subr.mxu0 0.0
        %1294 = vmatpush1.msra.mxu0 0.0
        %1295 = vmatprep.subr.mxu0 0.0
        %1296 = vmatpush1.msra.mxu0 0.0
        %1297 = vmatprep.subr.mxu0 0.0
        %1298 = vmatpush1.msra.mxu0 0.0
        %1299 = vmatprep.subr.mxu0 0.0
        %1300 = vmatpush1.msra.mxu0 0.0
        %1301 = vmatprep.subr.mxu0 0.0
        %1302 = vmatpush1.msra.mxu0 0.0
        %1303 = vmatprep.subr.mxu0 0.0
        %1304 = vmatpush1.msra.mxu0 0.0
        %1305 = vmatprep.subr.mxu0 0.0
        %1306 = vmatpush1.msra.mxu0 0.0
        %1307 = vmatprep.subr.mxu0 0.0
        %1308 = vmatpush1.msra.mxu0 0.0
        %1309 = vmatprep.subr.mxu0 0.0
        %1310 = vmatpush1.msra.mxu0 0.0
        %1311 = vmatprep.subr.mxu0 0.0
        %1312 = vmatpush1.msra.mxu0 0.0
        %1313 = vmatprep.subr.mxu0 0.0
        %1314 = vmatpush1.msra.mxu0 0.0
        %1315 = vmatprep.subr.mxu0 0.0
        %1316 = vmatpush1.msra.mxu0 0.0
        %1317 = vmatprep.subr.mxu0 0.0
        %1318 = vmatpush1.msra.mxu0 0.0
        %1319 = vmatprep.subr.mxu0 0.0
        %1320 = vmatpush1.msra.mxu0 0.0
        %1321 = vmatprep.subr.mxu0 0.0
        %1322 = vmatpush1.msra.mxu0 0.0
        %1323 = vmatprep.subr.mxu0 0.0
        %1324 = vmatpush1.msra.mxu0 0.0
        %1325 = vmatprep.subr.mxu0 0.0
        %1326 = vmatpush1.msra.mxu0 0.0
        %1327 = vmatprep.subr.mxu0 0.0
        %1328 = vmatpush1.msra.mxu0 0.0
        %1329 = vmatprep.subr.mxu0 0.0
        %1330 = vmatpush1.msra.mxu0 0.0
        %1331 = vmatprep.subr.mxu0 0.0
        %1332 = vmatpush1.msra.mxu0 0.0
        %1333 = vmatprep.subr.mxu0 0.0
        %1334 = vmatpush1.msra.mxu0 0.0
        %1335 = vmatprep.subr.mxu0 0.0
        %1336 = vmatpush1.msra.mxu0 0.0
        %1337 = vmatprep.subr.mxu0 0.0
        %1338 = vmatpush1.msra.mxu0 0.0
        %1339 = vmatprep.subr.mxu0 0.0
        %1340 = vmatpush1.msra.mxu0 0.0
        %1341 = vmatprep.mubr.f32.mxu0 0.0
        %1342 = vmatmul.mubr.f32.gmra.mrb[0].mxu0 %v1275
        %v1343 = vpop.f32.mrb[0].mxu0
        %v1344 = vadd.f32 0.0, %v1343
        %v1345 = vpop.f32.mrb[0].mxu0
        %1346 = vdwg.mxu0
        %v1348 = vcombine.high %v838, %v838
        %v1350 = vunpack.c.l.s4 1966171168
        %v1351 = vunpack.c.0.s8 %v1350
        %v1352 = vlaneseq
        %v1353 = vshrl.u32 %v1352, 7
        %v1354 = vsub.s32 %v1351, %v1353
        %v1355 = vrot.slane %v838, %v1354
        %v1357 = vunpack.c.l.s4 1966171168
        %v1358 = vunpack.c.0.s8 %v1357
        %v1359 = vlaneseq
        %v1360 = vshrl.u32 %v1359, 7
        %v1361 = vsub.s32 %v1358, %v1360
        %v1362 = vrot.slane %v1348, %v1361
        %v1363 = vcombine.high %v1355, %v1355
        %v1364 = vcombine.high %v1362, %v1362
        %v1366 = vunpack.c.l.s4 1966171168
        %v1367 = vunpack.c.0.s8 %v1366
        %v1368 = vlaneseq
        %v1369 = vshrl.u32 %v1368, 7
        %v1370 = vsub.s32 %v1367, %v1369
        %v1371 = vrot.slane %v1355, %v1370
        %v1373 = vunpack.c.l.s4 1966171168
        %v1374 = vunpack.c.0.s8 %v1373
        %v1375 = vlaneseq
        %v1376 = vshrl.u32 %v1375, 7
        %v1377 = vsub.s32 %v1374, %v1376
        %v1378 = vrot.slane %v1362, %v1377
        %v1380 = vunpack.c.l.s4 1966171168
        %v1381 = vunpack.c.0.s8 %v1380
        %v1382 = vlaneseq
        %v1383 = vshrl.u32 %v1382, 7
        %v1384 = vsub.s32 %v1381, %v1383
        %v1385 = vrot.slane %v1363, %v1384
        %v1387 = vunpack.c.l.s4 1966171168
        %v1388 = vunpack.c.0.s8 %v1387
        %v1389 = vlaneseq
        %v1390 = vshrl.u32 %v1389, 7
        %v1391 = vsub.s32 %v1388, %v1390
        %v1392 = vrot.slane %v1364, %v1391
        %v1393 = vcombine.high %v1371, %v1371
        %v1394 = vcombine.high %v1378, %v1378
        %v1395 = vcombine.high %v1385, %v1385
        %v1396 = vcombine.high %v1392, %v1392
        %v1397 = vlaneseq
        %v1398 = vshrl.u32 %v1397, 7
        %v1399 = vsub.s32 0, %v1398
        %v1400 = vrot.slane %v1371, %v1399
        %v1401 = vlaneseq
        %v1402 = vshrl.u32 %v1401, 7
        %v1403 = vsub.s32 0, %v1402
        %v1404 = vrot.slane %v1385, %v1403
        %v1405 = vlaneseq
        %v1406 = vshrl.u32 %v1405, 7
        %v1407 = vsub.s32 0, %v1406
        %v1408 = vrot.slane %v1393, %v1407
        %v1409 = vlaneseq
        %v1410 = vshrl.u32 %v1409, 7
        %v1411 = vsub.s32 0, %v1410
        %v1412 = vrot.slane %v1395, %v1411
        %v1413 = vlaneseq
        %v1414 = vshrl.u32 %v1413, 7
        %v1415 = vsub.s32 0, %v1414
        %v1416 = vrot.slane %v1378, %v1415
        %v1417 = vlaneseq
        %v1418 = vshrl.u32 %v1417, 7
        %v1419 = vsub.s32 0, %v1418
        %v1420 = vrot.slane %v1392, %v1419
        %v1421 = vlaneseq
        %v1422 = vshrl.u32 %v1421, 7
        %v1423 = vsub.s32 0, %v1422
        %v1424 = vrot.slane %v1394, %v1423
        %v1425 = vlaneseq
        %v1426 = vshrl.u32 %v1425, 7
        %v1427 = vsub.s32 0, %v1426
        %v1428 = vrot.slane %v1396, %v1427
        %v1437 = vmul.f32 %v1400, %v734
        %v1438 = vmul.f32 %v1404, %v735
        %v1439 = vmul.f32 %v1408, %v736
        %v1440 = vmul.f32 %v1412, %v737
        %v1441 = vmul.f32 %v1416, %v738
        %v1442 = vmul.f32 %v1420, %v739
        %v1443 = vmul.f32 %v1424, %v740
        %v1444 = vmul.f32 %v1428, %v741
        %v1445 = vsel %vm1022, %v1437, 0.0
        %1446 = vadd.xlane.f32.xlu0 %v1445
        %v1447 = vpop.xlane.xlu0 %1446
        %v1448 = vsel %vm1022, %v1438, 0.0
        %1449 = vadd.xlane.f32.xlu0 %v1448
        %v1450 = vpop.xlane.xlu0 %1449
        %v1451 = vsel %vm1022, %v1439, 0.0
        %1452 = vadd.xlane.f32.xlu0 %v1451
        %v1453 = vpop.xlane.xlu0 %1452
        %v1454 = vsel %vm1022, %v1440, 0.0
        %1455 = vadd.xlane.f32.xlu0 %v1454
        %v1456 = vpop.xlane.xlu0 %1455
        %v1457 = vsel %vm1022, %v1441, 0.0
        %1458 = vadd.xlane.f32.xlu0 %v1457
        %v1459 = vpop.xlane.xlu0 %1458
        %v1460 = vsel %vm1022, %v1442, 0.0
        %1461 = vadd.xlane.f32.xlu0 %v1460
        %v1462 = vpop.xlane.xlu0 %1461
        %v1463 = vsel %vm1022, %v1443, 0.0
        %1464 = vadd.xlane.f32.xlu0 %v1463
        %v1465 = vpop.xlane.xlu0 %1464
        %v1466 = vsel %vm1022, %v1444, 0.0
        %1467 = vadd.xlane.f32.xlu0 %v1466
        %v1468 = vpop.xlane.xlu0 %1467
        %v1469 = vmul.f32 %v921, %v734
        %v1470 = vmul.f32 %v921, %v735
        %v1471 = vmul.f32 %v921, %v736
        %v1472 = vmul.f32 %v921, %v737
        %v1473 = vmul.f32 %v921, %v738
        %v1474 = vmul.f32 %v921, %v739
        %v1475 = vmul.f32 %v921, %v740
        %v1476 = vmul.f32 %v921, %v741
        %v1477 = vsel %vm1022, %v1469, 0.0
        %1478 = vadd.xlane.f32.xlu0 %v1477
        %v1479 = vpop.xlane.xlu0 %1478
        %v1480 = vsel %vm1022, %v1470, 0.0
        %1481 = vadd.xlane.f32.xlu0 %v1480
        %v1482 = vpop.xlane.xlu0 %1481
        %v1483 = vsel %vm1022, %v1471, 0.0
        %1484 = vadd.xlane.f32.xlu0 %v1483
        %v1485 = vpop.xlane.xlu0 %1484
        %v1486 = vsel %vm1022, %v1472, 0.0
        %1487 = vadd.xlane.f32.xlu0 %v1486
        %v1488 = vpop.xlane.xlu0 %1487
        %v1489 = vsel %vm1022, %v1473, 0.0
        %1490 = vadd.xlane.f32.xlu0 %v1489
        %v1491 = vpop.xlane.xlu0 %1490
        %v1492 = vsel %vm1022, %v1474, 0.0
        %1493 = vadd.xlane.f32.xlu0 %v1492
        %v1494 = vpop.xlane.xlu0 %1493
        %v1495 = vsel %vm1022, %v1475, 0.0
        %1496 = vadd.xlane.f32.xlu0 %v1495
        %v1497 = vpop.xlane.xlu0 %1496
        %v1498 = vsel %vm1022, %v1476, 0.0
        %1499 = vadd.xlane.f32.xlu0 %v1498
        %v1500 = vpop.xlane.xlu0 %1499
        %v1509 = vlaneseq
        %v1510 = vshrl.u32 %v1509, 7
        %v1511 = vsub.s32 %v659, %v1510
        %v1512 = vrot.slane %v1447, %v1511
        %v1513 = vlaneseq
        %v1514 = vshrl.u32 %v1513, 7
        %v1515 = vsub.s32 %v659, %v1514
        %v1516 = vrot.slane %v1450, %v1515
        %v1517 = vlaneseq
        %v1518 = vshrl.u32 %v1517, 7
        %v1519 = vsub.s32 %v659, %v1518
        %v1520 = vrot.slane %v1453, %v1519
        %v1521 = vlaneseq
        %v1522 = vshrl.u32 %v1521, 7
        %v1523 = vsub.s32 %v659, %v1522
        %v1524 = vrot.slane %v1456, %v1523
        %v1525 = vlaneseq
        %v1526 = vshrl.u32 %v1525, 7
        %v1527 = vsub.s32 %v659, %v1526
        %v1528 = vrot.slane %v1459, %v1527
        %v1529 = vlaneseq
        %v1530 = vshrl.u32 %v1529, 7
        %v1531 = vsub.s32 %v659, %v1530
        %v1532 = vrot.slane %v1462, %v1531
        %v1533 = vlaneseq
        %v1534 = vshrl.u32 %v1533, 7
        %v1535 = vsub.s32 %v659, %v1534
        %v1536 = vrot.slane %v1465, %v1535
        %v1537 = vlaneseq
        %v1538 = vshrl.u32 %v1537, 7
        %v1539 = vsub.s32 %v659, %v1538
        %v1540 = vrot.slane %v1468, %v1539
        %v1541 = vsel %vm1119, %v1516, %v1512
        %v1542 = vsel %vm1121, %v1520, %v1541
        %v1543 = vsel %vm1123, %v1524, %v1542
        %v1544 = vsel %vm1125, %v1528, %v1543
        %v1545 = vsel %vm1127, %v1532, %v1544
        %v1546 = vsel %vm1129, %v1536, %v1545
        %v1547 = vsel %vm1131, %v1540, %v1546
        %1549 = vmatprep.subr.mxu0 0.0
        %1550 = vmatpush1.xpose.msra.mxu0 %v847
        %1551 = vmatprep.subr.mxu0 0.0
        %1552 = vmatpush1.xpose.msra.mxu0 0.0
        %1553 = vmatprep.subr.mxu0 0.0
        %1554 = vmatpush1.xpose.msra.mxu0 0.0
        %1555 = vmatprep.subr.mxu0 0.0
        %1556 = vmatpush1.xpose.msra.mxu0 0.0
        %1557 = vmatprep.subr.mxu0 0.0
        %1558 = vmatpush1.xpose.msra.mxu0 0.0
        %1559 = vmatprep.subr.mxu0 0.0
        %1560 = vmatpush1.xpose.msra.mxu0 0.0
        %1561 = vmatprep.subr.mxu0 0.0
        %1562 = vmatpush1.xpose.msra.mxu0 0.0
        %1563 = vmatprep.subr.mxu0 0.0
        %1564 = vmatpush1.xpose.msra.mxu0 0.0
        %1565 = vmatprep.subr.mxu0 0.0
        %1566 = vmatpush1.xpose.msra.mxu0 0.0
        %1567 = vmatprep.subr.mxu0 0.0
        %1568 = vmatpush1.xpose.msra.mxu0 0.0
        %1569 = vmatprep.subr.mxu0 0.0
        %1570 = vmatpush1.xpose.msra.mxu0 0.0
        %1571 = vmatprep.subr.mxu0 0.0
        %1572 = vmatpush1.xpose.msra.mxu0 0.0
        %1573 = vmatprep.subr.mxu0 0.0
        %1574 = vmatpush1.xpose.msra.mxu0 0.0
        %1575 = vmatprep.subr.mxu0 0.0
        %1576 = vmatpush1.xpose.msra.mxu0 0.0
        %1577 = vmatprep.subr.mxu0 0.0
        %1578 = vmatpush1.xpose.msra.mxu0 0.0
        %1579 = vmatprep.subr.mxu0 0.0
        %1580 = vmatpush1.xpose.msra.mxu0 0.0
        %1581 = vmatprep.subr.mxu0 0.0
        %1582 = vmatpush1.xpose.msra.mxu0 0.0
        %1583 = vmatprep.subr.mxu0 0.0
        %1584 = vmatpush1.xpose.msra.mxu0 0.0
        %1585 = vmatprep.subr.mxu0 0.0
        %1586 = vmatpush1.xpose.msra.mxu0 0.0
        %1587 = vmatprep.subr.mxu0 0.0
        %1588 = vmatpush1.xpose.msra.mxu0 0.0
        %1589 = vmatprep.subr.mxu0 0.0
        %1590 = vmatpush1.xpose.msra.mxu0 0.0
        %1591 = vmatprep.subr.mxu0 0.0
        %1592 = vmatpush1.xpose.msra.mxu0 0.0
        %1593 = vmatprep.subr.mxu0 0.0
        %1594 = vmatpush1.xpose.msra.mxu0 0.0
        %1595 = vmatprep.subr.mxu0 0.0
        %1596 = vmatpush1.xpose.msra.mxu0 0.0
        %1597 = vmatprep.subr.mxu0 0.0
        %1598 = vmatpush1.xpose.msra.mxu0 0.0
        %1599 = vmatprep.subr.mxu0 0.0
        %1600 = vmatpush1.xpose.msra.mxu0 0.0
        %1601 = vmatprep.subr.mxu0 0.0
        %1602 = vmatpush1.xpose.msra.mxu0 0.0
        %1603 = vmatprep.subr.mxu0 0.0
        %1604 = vmatpush1.xpose.msra.mxu0 0.0
        %1605 = vmatprep.subr.mxu0 0.0
        %1606 = vmatpush1.xpose.msra.mxu0 0.0
        %1607 = vmatprep.subr.mxu0 0.0
        %1608 = vmatpush1.xpose.msra.mxu0 0.0
        %1609 = vmatprep.subr.mxu0 0.0
        %1610 = vmatpush1.xpose.msra.mxu0 0.0
        %1611 = vmatprep.subr.mxu0 0.0
        %1612 = vmatpush1.xpose.msra.mxu0 0.0
        %1613 = vmatprep.mubr.f32.mxu0 0.0
        %1614 = vmatmul.mubr.f32.gmra.mrb[0].mxu0 %v752
        %v1615 = vpop.f32.mrb[0].mxu0
        %v1616 = vadd.f32 %v1547, %v1615
        %v1617 = vpop.f32.mrb[0].mxu0
        %1618 = vdwg.mxu0
        %v1627 = vlaneseq
        %v1628 = vshrl.u32 %v1627, 7
        %v1629 = vsub.s32 %v659, %v1628
        %v1630 = vrot.slane %v1479, %v1629
        %v1631 = vlaneseq
        %v1632 = vshrl.u32 %v1631, 7
        %v1633 = vsub.s32 %v659, %v1632
        %v1634 = vrot.slane %v1482, %v1633
        %v1635 = vlaneseq
        %v1636 = vshrl.u32 %v1635, 7
        %v1637 = vsub.s32 %v659, %v1636
        %v1638 = vrot.slane %v1485, %v1637
        %v1639 = vlaneseq
        %v1640 = vshrl.u32 %v1639, 7
        %v1641 = vsub.s32 %v659, %v1640
        %v1642 = vrot.slane %v1488, %v1641
        %v1643 = vlaneseq
        %v1644 = vshrl.u32 %v1643, 7
        %v1645 = vsub.s32 %v659, %v1644
        %v1646 = vrot.slane %v1491, %v1645
        %v1647 = vlaneseq
        %v1648 = vshrl.u32 %v1647, 7
        %v1649 = vsub.s32 %v659, %v1648
        %v1650 = vrot.slane %v1494, %v1649
        %v1651 = vlaneseq
        %v1652 = vshrl.u32 %v1651, 7
        %v1653 = vsub.s32 %v659, %v1652
        %v1654 = vrot.slane %v1497, %v1653
        %v1655 = vlaneseq
        %v1656 = vshrl.u32 %v1655, 7
        %v1657 = vsub.s32 %v659, %v1656
        %v1658 = vrot.slane %v1500, %v1657
        %v1659 = vsel %vm1119, %v1634, %v1630
        %v1660 = vsel %vm1121, %v1638, %v1659
        %v1661 = vsel %vm1123, %v1642, %v1660
        %v1662 = vsel %vm1125, %v1646, %v1661
        %v1663 = vsel %vm1127, %v1650, %v1662
        %v1664 = vsel %vm1129, %v1654, %v1663
        %v1665 = vsel %vm1131, %v1658, %v1664
        %v1667 = vadd.f32 %v1616, %v1665
        %v1668 = vmul.f32 %v1667, 0.25
        %v1669 = vlaneseq
        %v1670 = vshrl.u32 %v1669, 7
        %v1671 = vsub.s32 1, %v1670
        %v1672 = vrot.slane %v746, %v1671
        %v1673 = vadd.f32 %v1668, %v1672
        %v1674 = vsel %vm1259, %v1673, -inf
        %1675 = vmax.xlane.f32.xlu0 %v1674
        %v1676 = vpop.xlane.xlu0 %1675
        %v1677 = vsub.f32 %v1673, %v1676
        %v1678 = vmul.f32 %v1677, 1.442695
        %v1679 = vpow.pop %v1678
        %v1680 = vsel %vm1259, %v1679, 0.0
        %1681 = vadd.xlane.f32.xlu0 %v1680
        %v1682 = vpop.xlane.xlu0 %1681
        %v1683 = vrcp.pop %v1682
        %v1684 = vmul.f32 %v1679, %v1683
        %1685 = vrot.lane.b32.xlu0 %v653, 64
        %v1686 = vpop.permute.xlu0 %1685
        %v1689 = vsel %vm1259, %v1684, 0
        %1691 = vmatprep.subr.mxu0 0.0
        %1692 = vmatpush1.msra.mxu0 %v1686
        %1693 = vmatprep.subr.mxu0 0.0
        %1694 = vmatpush1.msra.mxu0 0.0
        %1695 = vmatprep.subr.mxu0 0.0
        %1696 = vmatpush1.msra.mxu0 0.0
        %1697 = vmatprep.subr.mxu0 0.0
        %1698 = vmatpush1.msra.mxu0 0.0
        %1699 = vmatprep.subr.mxu0 0.0
        %1700 = vmatpush1.msra.mxu0 0.0
        %1701 = vmatprep.subr.mxu0 0.0
        %1702 = vmatpush1.msra.mxu0 0.0
        %1703 = vmatprep.subr.mxu0 0.0
        %1704 = vmatpush1.msra.mxu0 0.0
        %1705 = vmatprep.subr.mxu0 0.0
        %1706 = vmatpush1.msra.mxu0 0.0
        %1707 = vmatprep.subr.mxu0 0.0
        %1708 = vmatpush1.msra.mxu0 0.0
        %1709 = vmatprep.subr.mxu0 0.0
        %1710 = vmatpush1.msra.mxu0 0.0
        %1711 = vmatprep.subr.mxu0 0.0
        %1712 = vmatpush1.msra.mxu0 0.0
        %1713 = vmatprep.subr.mxu0 0.0
        %1714 = vmatpush1.msra.mxu0 0.0
        %1715 = vmatprep.subr.mxu0 0.0
        %1716 = vmatpush1.msra.mxu0 0.0
        %1717 = vmatprep.subr.mxu0 0.0
        %1718 = vmatpush1.msra.mxu0 0.0
        %1719 = vmatprep.subr.mxu0 0.0
        %1720 = vmatpush1.msra.mxu0 0.0
        %1721 = vmatprep.subr.mxu0 0.0
        %1722 = vmatpush1.msra.mxu0 0.0
        %1723 = vmatprep.subr.mxu0 0.0
        %1724 = vmatpush1.msra.mxu0 0.0
        %1725 = vmatprep.subr.mxu0 0.0
        %1726 = vmatpush1.msra.mxu0 0.0
        %1727 = vmatprep.subr.mxu0 0.0
        %1728 = vmatpush1.msra.mxu0 0.0
        %1729 = vmatprep.subr.mxu0 0.0
        %1730 = vmatpush1.msra.mxu0 0.0
        %1731 = vmatprep.subr.mxu0 0.0
        %1732 = vmatpush1.msra.mxu0 0.0
        %1733 = vmatprep.subr.mxu0 0.0
        %1734 = vmatpush1.msra.mxu0 0.0
        %1735 = vmatprep.subr.mxu0 0.0
        %1736 = vmatpush1.msra.mxu0 0.0
        %1737 = vmatprep.subr.mxu0 0.0
        %1738 = vmatpush1.msra.mxu0 0.0
        %1739 = vmatprep.subr.mxu0 0.0
        %1740 = vmatpush1.msra.mxu0 0.0
        %1741 = vmatprep.subr.mxu0 0.0
        %1742 = vmatpush1.msra.mxu0 0.0
        %1743 = vmatprep.subr.mxu0 0.0
        %1744 = vmatpush1.msra.mxu0 0.0
        %1745 = vmatprep.subr.mxu0 0.0
        %1746 = vmatpush1.msra.mxu0 0.0
        %1747 = vmatprep.subr.mxu0 0.0
        %1748 = vmatpush1.msra.mxu0 0.0
        %1749 = vmatprep.subr.mxu0 0.0
        %1750 = vmatpush1.msra.mxu0 0.0
        %1751 = vmatprep.subr.mxu0 0.0
        %1752 = vmatpush1.msra.mxu0 0.0
        %1753 = vmatprep.subr.mxu0 0.0
        %1754 = vmatpush1.msra.mxu0 0.0
        %1755 = vmatprep.mubr.f32.mxu0 0.0
        %1756 = vmatmul.mubr.f32.gmra.mrb[0].mxu0 %v1689
        %v1757 = vpop.f32.mrb[0].mxu0
        %v1758 = vadd.f32 0.0, %v1757
        %v1759 = vpop.f32.mrb[0].mxu0
        %1760 = vdwg.mxu0
        %1761 = vrot.lane.b32.xlu0 %v648, 112
        %v1762 = vpop.permute.xlu0 %1761
        %1763 = vrot.lane.b32.xlu0 %v653, 112
        %v1764 = vpop.permute.xlu0 %1763
        %v1765 = vsel %vm747, %v1762, 0
        %v1767 = vsel %vm747, %v1764, 0
        %1769 = vmatprep.subr.mxu0 0.0
        %1770 = vmatpush1.xpose.msra.mxu0 %v755
        %1771 = vmatprep.subr.mxu0 0.0
        %1772 = vmatpush1.xpose.msra.mxu0 %v758
        %1773 = vmatprep.subr.mxu0 0.0
        %1774 = vmatpush1.xpose.msra.mxu0 %v761
        %1775 = vmatprep.subr.mxu0 0.0
        %1776 = vmatpush1.xpose.msra.mxu0 %v764
        %1777 = vmatprep.subr.mxu0 0.0
        %1778 = vmatpush1.xpose.msra.mxu0 0.0
        %1779 = vmatprep.subr.mxu0 0.0
        %1780 = vmatpush1.xpose.msra.mxu0 0.0
        %1781 = vmatprep.subr.mxu0 0.0
        %1782 = vmatpush1.xpose.msra.mxu0 0.0
        %1783 = vmatprep.subr.mxu0 0.0
        %1784 = vmatpush1.xpose.msra.mxu0 0.0
        %1785 = vmatprep.subr.mxu0 0.0
        %1786 = vmatpush1.xpose.msra.mxu0 0.0
        %1787 = vmatprep.subr.mxu0 0.0
        %1788 = vmatpush1.xpose.msra.mxu0 0.0
        %1789 = vmatprep.subr.mxu0 0.0
        %1790 = vmatpush1.xpose.msra.mxu0 0.0
        %1791 = vmatprep.subr.mxu0 0.0
        %1792 = vmatpush1.xpose.msra.mxu0 0.0
        %1793 = vmatprep.subr.mxu0 0.0
        %1794 = vmatpush1.xpose.msra.mxu0 0.0
        %1795 = vmatprep.subr.mxu0 0.0
        %1796 = vmatpush1.xpose.msra.mxu0 0.0
        %1797 = vmatprep.subr.mxu0 0.0
        %1798 = vmatpush1.xpose.msra.mxu0 0.0
        %1799 = vmatprep.subr.mxu0 0.0
        %1800 = vmatpush1.xpose.msra.mxu0 0.0
        %1801 = vmatprep.subr.mxu0 0.0
        %1802 = vmatpush1.xpose.msra.mxu0 0.0
        %1803 = vmatprep.subr.mxu0 0.0
        %1804 = vmatpush1.xpose.msra.mxu0 0.0
        %1805 = vmatprep.subr.mxu0 0.0
        %1806 = vmatpush1.xpose.msra.mxu0 0.0
        %1807 = vmatprep.subr.mxu0 0.0
        %1808 = vmatpush1.xpose.msra.mxu0 0.0
        %1809 = vmatprep.subr.mxu0 0.0
        %1810 = vmatpush1.xpose.msra.mxu0 0.0
        %1811 = vmatprep.subr.mxu0 0.0
        %1812 = vmatpush1.xpose.msra.mxu0 0.0
        %1813 = vmatprep.subr.mxu0 0.0
        %1814 = vmatpush1.xpose.msra.mxu0 0.0
        %1815 = vmatprep.subr.mxu0 0.0
        %1816 = vmatpush1.xpose.msra.mxu0 0.0
        %1817 = vmatprep.subr.mxu0 0.0
        %1818 = vmatpush1.xpose.msra.mxu0 0.0
        %1819 = vmatprep.subr.mxu0 0.0
        %1820 = vmatpush1.xpose.msra.mxu0 0.0
        %1821 = vmatprep.subr.mxu0 0.0
        %1822 = vmatpush1.xpose.msra.mxu0 0.0
        %1823 = vmatprep.subr.mxu0 0.0
        %1824 = vmatpush1.xpose.msra.mxu0 0.0
        %1825 = vmatprep.subr.mxu0 0.0
        %1826 = vmatpush1.xpose.msra.mxu0 0.0
        %1827 = vmatprep.subr.mxu0 0.0
        %1828 = vmatpush1.xpose.msra.mxu0 0.0
        %1829 = vmatprep.subr.mxu0 0.0
        %1830 = vmatpush1.xpose.msra.mxu0 0.0
        %1831 = vmatprep.subr.mxu0 0.0
        %1832 = vmatpush1.xpose.msra.mxu0 0.0
        %1833 = vmatprep.mubr.f32.mxu0 0.0
        %1834 = vmatmul.mubr.f32.gmra.mrb[0].mxu0 %v1765
        %v1835 = vpop.f32.mrb[0].mxu0
        %v1836 = vadd.f32 0.0, %v1835
        %v1837 = vpop.f32.mrb[0].mxu0
        %1838 = vmatprep.mubr.f32.mxu0 0.0
        %1839 = vmatmul.mubr.f32.gmra.mrb[0].mxu0 %v1767
        %v1840 = vpop.f32.mrb[0].mxu0
        %v1841 = vadd.f32 0.0, %v1840
        %v1842 = vpop.f32.mrb[0].mxu0
        %1843 = vdwg.mxu0
        %1844 = vrot.lane.b32.xlu0 %v648, 80
        %v1845 = vpop.permute.xlu0 %1844
        %1846 = vrot.lane.b32.xlu0 %v653, 80
        %v1847 = vpop.permute.xlu0 %1846
        %v1848 = vsel %vm747, %v1845, 0
        %v1850 = vsel %vm747, %v1847, 0
        %1852 = vmatprep.subr.mxu0 0.0
        %1853 = vmatpush1.xpose.msra.mxu0 %v755
        %1854 = vmatprep.subr.mxu0 0.0
        %1855 = vmatpush1.xpose.msra.mxu0 %v758
        %1856 = vmatprep.subr.mxu0 0.0
        %1857 = vmatpush1.xpose.msra.mxu0 %v761
        %1858 = vmatprep.subr.mxu0 0.0
        %1859 = vmatpush1.xpose.msra.mxu0 %v764
        %1860 = vmatprep.subr.mxu0 0.0
        %1861 = vmatpush1.xpose.msra.mxu0 0.0
        %1862 = vmatprep.subr.mxu0 0.0
        %1863 = vmatpush1.xpose.msra.mxu0 0.0
        %1864 = vmatprep.subr.mxu0 0.0
        %1865 = vmatpush1.xpose.msra.mxu0 0.0
        %1866 = vmatprep.subr.mxu0 0.0
        %1867 = vmatpush1.xpose.msra.mxu0 0.0
        %1868 = vmatprep.subr.mxu0 0.0
        %1869 = vmatpush1.xpose.msra.mxu0 0.0
        %1870 = vmatprep.subr.mxu0 0.0
        %1871 = vmatpush1.xpose.msra.mxu0 0.0
        %1872 = vmatprep.subr.mxu0 0.0
        %1873 = vmatpush1.xpose.msra.mxu0 0.0
        %1874 = vmatprep.subr.mxu0 0.0
        %1875 = vmatpush1.xpose.msra.mxu0 0.0
        %1876 = vmatprep.subr.mxu0 0.0
        %1877 = vmatpush1.xpose.msra.mxu0 0.0
        %1878 = vmatprep.subr.mxu0 0.0
        %1879 = vmatpush1.xpose.msra.mxu0 0.0
        %1880 = vmatprep.subr.mxu0 0.0
        %1881 = vmatpush1.xpose.msra.mxu0 0.0
        %1882 = vmatprep.subr.mxu0 0.0
        %1883 = vmatpush1.xpose.msra.mxu0 0.0
        %1884 = vmatprep.subr.mxu0 0.0
        %1885 = vmatpush1.xpose.msra.mxu0 0.0
        %1886 = vmatprep.subr.mxu0 0.0
        %1887 = vmatpush1.xpose.msra.mxu0 0.0
        %1888 = vmatprep.subr.mxu0 0.0
        %1889 = vmatpush1.xpose.msra.mxu0 0.0
        %1890 = vmatprep.subr.mxu0 0.0
        %1891 = vmatpush1.xpose.msra.mxu0 0.0
        %1892 = vmatprep.subr.mxu0 0.0
        %1893 = vmatpush1.xpose.msra.mxu0 0.0
        %1894 = vmatprep.subr.mxu0 0.0
        %1895 = vmatpush1.xpose.msra.mxu0 0.0
        %1896 = vmatprep.subr.mxu0 0.0
        %1897 = vmatpush1.xpose.msra.mxu0 0.0
        %1898 = vmatprep.subr.mxu0 0.0
        %1899 = vmatpush1.xpose.msra.mxu0 0.0
        %1900 = vmatprep.subr.mxu0 0.0
        %1901 = vmatpush1.xpose.msra.mxu0 0.0
        %1902 = vmatprep.subr.mxu0 0.0
        %1903 = vmatpush1.xpose.msra.mxu0 0.0
        %1904 = vmatprep.subr.mxu0 0.0
        %1905 = vmatpush1.xpose.msra.mxu0 0.0
        %1906 = vmatprep.subr.mxu0 0.0
        %1907 = vmatpush1.xpose.msra.mxu0 0.0
        %1908 = vmatprep.subr.mxu0 0.0
        %1909 = vmatpush1.xpose.msra.mxu0 0.0
        %1910 = vmatprep.subr.mxu0 0.0
        %1911 = vmatpush1.xpose.msra.mxu0 0.0
        %1912 = vmatprep.subr.mxu0 0.0
        %1913 = vmatpush1.xpose.msra.mxu0 0.0
        %1914 = vmatprep.subr.mxu0 0.0
        %1915 = vmatpush1.xpose.msra.mxu0 0.0
        %1916 = vmatprep.mubr.f32.mxu0 0.0
        %1917 = vmatmul.mubr.f32.gmra.mrb[0].mxu0 %v1848
        %v1918 = vpop.f32.mrb[0].mxu0
        %v1919 = vadd.f32 0.0, %v1918
        %v1920 = vpop.f32.mrb[0].mxu0
        %1921 = vmatprep.mubr.f32.mxu0 0.0
        %1922 = vmatmul.mubr.f32.gmra.mrb[0].mxu0 %v1850
        %v1923 = vpop.f32.mrb[0].mxu0
        %v1924 = vadd.f32 0.0, %v1923
        %v1925 = vpop.f32.mrb[0].mxu0
        %1926 = vdwg.mxu0
        %v1928 = vcombine.high %v1836, %v1836
        %v1930 = vunpack.c.l.s4 1966171168
        %v1931 = vunpack.c.0.s8 %v1930
        %v1932 = vlaneseq
        %v1933 = vshrl.u32 %v1932, 7
        %v1934 = vsub.s32 %v1931, %v1933
        %v1935 = vrot.slane %v1836, %v1934
        %v1937 = vunpack.c.l.s4 1966171168
        %v1938 = vunpack.c.0.s8 %v1937
        %v1939 = vlaneseq
        %v1940 = vshrl.u32 %v1939, 7
        %v1941 = vsub.s32 %v1938, %v1940
        %v1942 = vrot.slane %v1928, %v1941
        %v1943 = vcombine.high %v1935, %v1935
        %v1944 = vcombine.high %v1942, %v1942
        %v1946 = vunpack.c.l.s4 1966171168
        %v1947 = vunpack.c.0.s8 %v1946
        %v1948 = vlaneseq
        %v1949 = vshrl.u32 %v1948, 7
        %v1950 = vsub.s32 %v1947, %v1949
        %v1951 = vrot.slane %v1935, %v1950
        %v1953 = vunpack.c.l.s4 1966171168
        %v1954 = vunpack.c.0.s8 %v1953
        %v1955 = vlaneseq
        %v1956 = vshrl.u32 %v1955, 7
        %v1957 = vsub.s32 %v1954, %v1956
        %v1958 = vrot.slane %v1942, %v1957
        %v1960 = vunpack.c.l.s4 1966171168
        %v1961 = vunpack.c.0.s8 %v1960
        %v1962 = vlaneseq
        %v1963 = vshrl.u32 %v1962, 7
        %v1964 = vsub.s32 %v1961, %v1963
        %v1965 = vrot.slane %v1943, %v1964
        %v1967 = vunpack.c.l.s4 1966171168
        %v1968 = vunpack.c.0.s8 %v1967
        %v1969 = vlaneseq
        %v1970 = vshrl.u32 %v1969, 7
        %v1971 = vsub.s32 %v1968, %v1970
        %v1972 = vrot.slane %v1944, %v1971
        %v1973 = vcombine.high %v1951, %v1951
        %v1974 = vcombine.high %v1958, %v1958
        %v1975 = vcombine.high %v1965, %v1965
        %v1976 = vcombine.high %v1972, %v1972
        %v1977 = vlaneseq
        %v1978 = vshrl.u32 %v1977, 7
        %v1979 = vsub.s32 0, %v1978
        %v1980 = vrot.slane %v1951, %v1979
        %v1981 = vlaneseq
        %v1982 = vshrl.u32 %v1981, 7
        %v1983 = vsub.s32 0, %v1982
        %v1984 = vrot.slane %v1965, %v1983
        %v1985 = vlaneseq
        %v1986 = vshrl.u32 %v1985, 7
        %v1987 = vsub.s32 0, %v1986
        %v1988 = vrot.slane %v1973, %v1987
        %v1989 = vlaneseq
        %v1990 = vshrl.u32 %v1989, 7
        %v1991 = vsub.s32 0, %v1990
        %v1992 = vrot.slane %v1975, %v1991
        %v1993 = vlaneseq
        %v1994 = vshrl.u32 %v1993, 7
        %v1995 = vsub.s32 0, %v1994
        %v1996 = vrot.slane %v1958, %v1995
        %v1997 = vlaneseq
        %v1998 = vshrl.u32 %v1997, 7
        %v1999 = vsub.s32 0, %v1998
        %v2000 = vrot.slane %v1972, %v1999
        %v2001 = vlaneseq
        %v2002 = vshrl.u32 %v2001, 7
        %v2003 = vsub.s32 0, %v2002
        %v2004 = vrot.slane %v1974, %v2003
        %v2005 = vlaneseq
        %v2006 = vshrl.u32 %v2005, 7
        %v2007 = vsub.s32 0, %v2006
        %v2008 = vrot.slane %v1976, %v2007
        %v2017 = vmul.f32 %v1980, %v734
        %v2018 = vmul.f32 %v1984, %v735
        %v2019 = vmul.f32 %v1988, %v736
        %v2020 = vmul.f32 %v1992, %v737
        %v2021 = vmul.f32 %v1996, %v738
        %v2022 = vmul.f32 %v2000, %v739
        %v2023 = vmul.f32 %v2004, %v740
        %v2024 = vmul.f32 %v2008, %v741
        %v2025 = vsel %vm1022, %v2017, 0.0
        %2026 = vadd.xlane.f32.xlu0 %v2025
        %v2027 = vpop.xlane.xlu0 %2026
        %v2028 = vsel %vm1022, %v2018, 0.0
        %2029 = vadd.xlane.f32.xlu0 %v2028
        %v2030 = vpop.xlane.xlu0 %2029
        %v2031 = vsel %vm1022, %v2019, 0.0
        %2032 = vadd.xlane.f32.xlu0 %v2031
        %v2033 = vpop.xlane.xlu0 %2032
        %v2034 = vsel %vm1022, %v2020, 0.0
        %2035 = vadd.xlane.f32.xlu0 %v2034
        %v2036 = vpop.xlane.xlu0 %2035
        %v2037 = vsel %vm1022, %v2021, 0.0
        %2038 = vadd.xlane.f32.xlu0 %v2037
        %v2039 = vpop.xlane.xlu0 %2038
        %v2040 = vsel %vm1022, %v2022, 0.0
        %2041 = vadd.xlane.f32.xlu0 %v2040
        %v2042 = vpop.xlane.xlu0 %2041
        %v2043 = vsel %vm1022, %v2023, 0.0
        %2044 = vadd.xlane.f32.xlu0 %v2043
        %v2045 = vpop.xlane.xlu0 %2044
        %v2046 = vsel %vm1022, %v2024, 0.0
        %2047 = vadd.xlane.f32.xlu0 %v2046
        %v2048 = vpop.xlane.xlu0 %2047
        %v2049 = vmul.f32 %v1919, %v734
        %v2050 = vmul.f32 %v1919, %v735
        %v2051 = vmul.f32 %v1919, %v736
        %v2052 = vmul.f32 %v1919, %v737
        %v2053 = vmul.f32 %v1919, %v738
        %v2054 = vmul.f32 %v1919, %v739
        %v2055 = vmul.f32 %v1919, %v740
        %v2056 = vmul.f32 %v1919, %v741
        %v2057 = vsel %vm1022, %v2049, 0.0
        %2058 = vadd.xlane.f32.xlu0 %v2057
        %v2059 = vpop.xlane.xlu0 %2058
        %v2060 = vsel %vm1022, %v2050, 0.0
        %2061 = vadd.xlane.f32.xlu0 %v2060
        %v2062 = vpop.xlane.xlu0 %2061
        %v2063 = vsel %vm1022, %v2051, 0.0
        %2064 = vadd.xlane.f32.xlu0 %v2063
        %v2065 = vpop.xlane.xlu0 %2064
        %v2066 = vsel %vm1022, %v2052, 0.0
        %2067 = vadd.xlane.f32.xlu0 %v2066
        %v2068 = vpop.xlane.xlu0 %2067
        %v2069 = vsel %vm1022, %v2053, 0.0
        %2070 = vadd.xlane.f32.xlu0 %v2069
        %v2071 = vpop.xlane.xlu0 %2070
        %v2072 = vsel %vm1022, %v2054, 0.0
        %2073 = vadd.xlane.f32.xlu0 %v2072
        %v2074 = vpop.xlane.xlu0 %2073
        %v2075 = vsel %vm1022, %v2055, 0.0
        %2076 = vadd.xlane.f32.xlu0 %v2075
        %v2077 = vpop.xlane.xlu0 %2076
        %v2078 = vsel %vm1022, %v2056, 0.0
        %2079 = vadd.xlane.f32.xlu0 %v2078
        %v2080 = vpop.xlane.xlu0 %2079
        %v2089 = vlaneseq
        %v2090 = vshrl.u32 %v2089, 7
        %v2091 = vsub.s32 %v659, %v2090
        %v2092 = vrot.slane %v2027, %v2091
        %v2093 = vlaneseq
        %v2094 = vshrl.u32 %v2093, 7
        %v2095 = vsub.s32 %v659, %v2094
        %v2096 = vrot.slane %v2030, %v2095
        %v2097 = vlaneseq
        %v2098 = vshrl.u32 %v2097, 7
        %v2099 = vsub.s32 %v659, %v2098
        %v2100 = vrot.slane %v2033, %v2099
        %v2101 = vlaneseq
        %v2102 = vshrl.u32 %v2101, 7
        %v2103 = vsub.s32 %v659, %v2102
        %v2104 = vrot.slane %v2036, %v2103
        %v2105 = vlaneseq
        %v2106 = vshrl.u32 %v2105, 7
        %v2107 = vsub.s32 %v659, %v2106
        %v2108 = vrot.slane %v2039, %v2107
        %v2109 = vlaneseq
        %v2110 = vshrl.u32 %v2109, 7
        %v2111 = vsub.s32 %v659, %v2110
        %v2112 = vrot.slane %v2042, %v2111
        %v2113 = vlaneseq
        %v2114 = vshrl.u32 %v2113, 7
        %v2115 = vsub.s32 %v659, %v2114
        %v2116 = vrot.slane %v2045, %v2115
        %v2117 = vlaneseq
        %v2118 = vshrl.u32 %v2117, 7
        %v2119 = vsub.s32 %v659, %v2118
        %v2120 = vrot.slane %v2048, %v2119
        %v2121 = vsel %vm1119, %v2096, %v2092
        %v2122 = vsel %vm1121, %v2100, %v2121
        %v2123 = vsel %vm1123, %v2104, %v2122
        %v2124 = vsel %vm1125, %v2108, %v2123
        %v2125 = vsel %vm1127, %v2112, %v2124
        %v2126 = vsel %vm1129, %v2116, %v2125
        %v2127 = vsel %vm1131, %v2120, %v2126
        %2129 = vmatprep.subr.mxu0 0.0
        %2130 = vmatpush1.xpose.msra.mxu0 %v1848
        %2131 = vmatprep.subr.mxu0 0.0
        %2132 = vmatpush1.xpose.msra.mxu0 0.0
        %2133 = vmatprep.subr.mxu0 0.0
        %2134 = vmatpush1.xpose.msra.mxu0 0.0
        %2135 = vmatprep.subr.mxu0 0.0
        %2136 = vmatpush1.xpose.msra.mxu0 0.0
        %2137 = vmatprep.subr.mxu0 0.0
        %2138 = vmatpush1.xpose.msra.mxu0 0.0
        %2139 = vmatprep.subr.mxu0 0.0
        %2140 = vmatpush1.xpose.msra.mxu0 0.0
        %2141 = vmatprep.subr.mxu0 0.0
        %2142 = vmatpush1.xpose.msra.mxu0 0.0
        %2143 = vmatprep.subr.mxu0 0.0
        %2144 = vmatpush1.xpose.msra.mxu0 0.0
        %2145 = vmatprep.subr.mxu0 0.0
        %2146 = vmatpush1.xpose.msra.mxu0 0.0
        %2147 = vmatprep.subr.mxu0 0.0
        %2148 = vmatpush1.xpose.msra.mxu0 0.0
        %2149 = vmatprep.subr.mxu0 0.0
        %2150 = vmatpush1.xpose.msra.mxu0 0.0
        %2151 = vmatprep.subr.mxu0 0.0
        %2152 = vmatpush1.xpose.msra.mxu0 0.0
        %2153 = vmatprep.subr.mxu0 0.0
        %2154 = vmatpush1.xpose.msra.mxu0 0.0
        %2155 = vmatprep.subr.mxu0 0.0
        %2156 = vmatpush1.xpose.msra.mxu0 0.0
        %2157 = vmatprep.subr.mxu0 0.0
        %2158 = vmatpush1.xpose.msra.mxu0 0.0
        %2159 = vmatprep.subr.mxu0 0.0
        %2160 = vmatpush1.xpose.msra.mxu0 0.0
        %2161 = vmatprep.subr.mxu0 0.0
        %2162 = vmatpush1.xpose.msra.mxu0 0.0
        %2163 = vmatprep.subr.mxu0 0.0
        %2164 = vmatpush1.xpose.msra.mxu0 0.0
        %2165 = vmatprep.subr.mxu0 0.0
        %2166 = vmatpush1.xpose.msra.mxu0 0.0
        %2167 = vmatprep.subr.mxu0 0.0
        %2168 = vmatpush1.xpose.msra.mxu0 0.0
        %2169 = vmatprep.subr.mxu0 0.0
        %2170 = vmatpush1.xpose.msra.mxu0 0.0
        %2171 = vmatprep.subr.mxu0 0.0
        %2172 = vmatpush1.xpose.msra.mxu0 0.0
        %2173 = vmatprep.subr.mxu0 0.0
        %2174 = vmatpush1.xpose.msra.mxu0 0.0
        %2175 = vmatprep.subr.mxu0 0.0
        %2176 = vmatpush1.xpose.msra.mxu0 0.0
        %2177 = vmatprep.subr.mxu0 0.0
        %2178 = vmatpush1.xpose.msra.mxu0 0.0
        %2179 = vmatprep.subr.mxu0 0.0
        %2180 = vmatpush1.xpose.msra.mxu0 0.0
        %2181 = vmatprep.subr.mxu0 0.0
        %2182 = vmatpush1.xpose.msra.mxu0 0.0
        %2183 = vmatprep.subr.mxu0 0.0
        %2184 = vmatpush1.xpose.msra.mxu0 0.0
        %2185 = vmatprep.subr.mxu0 0.0
        %2186 = vmatpush1.xpose.msra.mxu0 0.0
        %2187 = vmatprep.subr.mxu0 0.0
        %2188 = vmatpush1.xpose.msra.mxu0 0.0
        %2189 = vmatprep.subr.mxu0 0.0
        %2190 = vmatpush1.xpose.msra.mxu0 0.0
        %2191 = vmatprep.subr.mxu0 0.0
        %2192 = vmatpush1.xpose.msra.mxu0 0.0
        %2193 = vmatprep.mubr.f32.mxu0 0.0
        %2194 = vmatmul.mubr.f32.gmra.mrb[0].mxu0 %v1765
        %v2195 = vpop.f32.mrb[0].mxu0
        %v2196 = vadd.f32 %v2127, %v2195
        %v2197 = vpop.f32.mrb[0].mxu0
        %2198 = vdwg.mxu0
        %v2207 = vlaneseq
        %v2208 = vshrl.u32 %v2207, 7
        %v2209 = vsub.s32 %v659, %v2208
        %v2210 = vrot.slane %v2059, %v2209
        %v2211 = vlaneseq
        %v2212 = vshrl.u32 %v2211, 7
        %v2213 = vsub.s32 %v659, %v2212
        %v2214 = vrot.slane %v2062, %v2213
        %v2215 = vlaneseq
        %v2216 = vshrl.u32 %v2215, 7
        %v2217 = vsub.s32 %v659, %v2216
        %v2218 = vrot.slane %v2065, %v2217
        %v2219 = vlaneseq
        %v2220 = vshrl.u32 %v2219, 7
        %v2221 = vsub.s32 %v659, %v2220
        %v2222 = vrot.slane %v2068, %v2221
        %v2223 = vlaneseq
        %v2224 = vshrl.u32 %v2223, 7
        %v2225 = vsub.s32 %v659, %v2224
        %v2226 = vrot.slane %v2071, %v2225
        %v2227 = vlaneseq
        %v2228 = vshrl.u32 %v2227, 7
        %v2229 = vsub.s32 %v659, %v2228
        %v2230 = vrot.slane %v2074, %v2229
        %v2231 = vlaneseq
        %v2232 = vshrl.u32 %v2231, 7
        %v2233 = vsub.s32 %v659, %v2232
        %v2234 = vrot.slane %v2077, %v2233
        %v2235 = vlaneseq
        %v2236 = vshrl.u32 %v2235, 7
        %v2237 = vsub.s32 %v659, %v2236
        %v2238 = vrot.slane %v2080, %v2237
        %v2239 = vsel %vm1119, %v2214, %v2210
        %v2240 = vsel %vm1121, %v2218, %v2239
        %v2241 = vsel %vm1123, %v2222, %v2240
        %v2242 = vsel %vm1125, %v2226, %v2241
        %v2243 = vsel %vm1127, %v2230, %v2242
        %v2244 = vsel %vm1129, %v2234, %v2243
        %v2245 = vsel %vm1131, %v2238, %v2244
        %v2247 = vadd.f32 %v2196, %v2245
        %v2248 = vmul.f32 %v2247, 0.25
        %v2249 = vadd.f32 %v2248, %v1257
        %v2250 = vsel %vm1259, %v2249, -inf
        %2251 = vmax.xlane.f32.xlu0 %v2250
        %v2252 = vpop.xlane.xlu0 %2251
        %v2253 = vsub.f32 %v2249, %v2252
        %v2254 = vmul.f32 %v2253, 1.442695
        %v2255 = vpow.pop %v2254
        %v2256 = vsel %vm1259, %v2255, 0.0
        %2257 = vadd.xlane.f32.xlu0 %v2256
        %v2258 = vpop.xlane.xlu0 %2257
        %v2259 = vrcp.pop %v2258
        %v2260 = vmul.f32 %v2255, %v2259
        %2261 = vrot.lane.b32.xlu0 %v648, 48
        %v2262 = vpop.permute.xlu0 %2261
        %v2265 = vsel %vm1259, %v2260, 0
        %2267 = vmatprep.subr.mxu0 0.0
        %2268 = vmatpush1.msra.mxu0 %v2262
        %2269 = vmatprep.subr.mxu0 0.0
        %2270 = vmatpush1.msra.mxu0 0.0
        %2271 = vmatprep.subr.mxu0 0.0
        %2272 = vmatpush1.msra.mxu0 0.0
        %2273 = vmatprep.subr.mxu0 0.0
        %2274 = vmatpush1.msra.mxu0 0.0
        %2275 = vmatprep.subr.mxu0 0.0
        %2276 = vmatpush1.msra.mxu0 0.0
        %2277 = vmatprep.subr.mxu0 0.0
        %2278 = vmatpush1.msra.mxu0 0.0
        %2279 = vmatprep.subr.mxu0 0.0
        %2280 = vmatpush1.msra.mxu0 0.0
        %2281 = vmatprep.subr.mxu0 0.0
        %2282 = vmatpush1.msra.mxu0 0.0
        %2283 = vmatprep.subr.mxu0 0.0
        %2284 = vmatpush1.msra.mxu0 0.0
        %2285 = vmatprep.subr.mxu0 0.0
        %2286 = vmatpush1.msra.mxu0 0.0
        %2287 = vmatprep.subr.mxu0 0.0
        %2288 = vmatpush1.msra.mxu0 0.0
        %2289 = vmatprep.subr.mxu0 0.0
        %2290 = vmatpush1.msra.mxu0 0.0
        %2291 = vmatprep.subr.mxu0 0.0
        %2292 = vmatpush1.msra.mxu0 0.0
        %2293 = vmatprep.subr.mxu0 0.0
        %2294 = vmatpush1.msra.mxu0 0.0
        %2295 = vmatprep.subr.mxu0 0.0
        %2296 = vmatpush1.msra.mxu0 0.0
        %2297 = vmatprep.subr.mxu0 0.0
        %2298 = vmatpush1.msra.mxu0 0.0
        %2299 = vmatprep.subr.mxu0 0.0
        %2300 = vmatpush1.msra.mxu0 0.0
        %2301 = vmatprep.subr.mxu0 0.0
        %2302 = vmatpush1.msra.mxu0 0.0
        %2303 = vmatprep.subr.mxu0 0.0
        %2304 = vmatpush1.msra.mxu0 0.0
        %2305 = vmatprep.subr.mxu0 0.0
        %2306 = vmatpush1.msra.mxu0 0.0
        %2307 = vmatprep.subr.mxu0 0.0
        %2308 = vmatpush1.msra.mxu0 0.0
        %2309 = vmatprep.subr.mxu0 0.0
        %2310 = vmatpush1.msra.mxu0 0.0
        %2311 = vmatprep.subr.mxu0 0.0
        %2312 = vmatpush1.msra.mxu0 0.0
        %2313 = vmatprep.subr.mxu0 0.0
        %2314 = vmatpush1.msra.mxu0 0.0
        %2315 = vmatprep.subr.mxu0 0.0
        %2316 = vmatpush1.msra.mxu0 0.0
        %2317 = vmatprep.subr.mxu0 0.0
        %2318 = vmatpush1.msra.mxu0 0.0
        %2319 = vmatprep.subr.mxu0 0.0
        %2320 = vmatpush1.msra.mxu0 0.0
        %2321 = vmatprep.subr.mxu0 0.0
        %2322 = vmatpush1.msra.mxu0 0.0
        %2323 = vmatprep.subr.mxu0 0.0
        %2324 = vmatpush1.msra.mxu0 0.0
        %2325 = vmatprep.subr.mxu0 0.0
        %2326 = vmatpush1.msra.mxu0 0.0
        %2327 = vmatprep.subr.mxu0 0.0
        %2328 = vmatpush1.msra.mxu0 0.0
        %2329 = vmatprep.subr.mxu0 0.0
        %2330 = vmatpush1.msra.mxu0 0.0
        %2331 = vmatprep.mubr.f32.mxu0 0.0
        %2332 = vmatmul.mubr.f32.gmra.mrb[0].mxu0 %v2265
        %v2333 = vpop.f32.mrb[0].mxu0
        %v2334 = vadd.f32 0.0, %v2333
        %v2335 = vpop.f32.mrb[0].mxu0
        %2336 = vdwg.mxu0
        %v2338 = vcombine.high %v1841, %v1841
        %v2340 = vunpack.c.l.s4 1966171168
        %v2341 = vunpack.c.0.s8 %v2340
        %v2342 = vlaneseq
        %v2343 = vshrl.u32 %v2342, 7
        %v2344 = vsub.s32 %v2341, %v2343
        %v2345 = vrot.slane %v1841, %v2344
        %v2347 = vunpack.c.l.s4 1966171168
        %v2348 = vunpack.c.0.s8 %v2347
        %v2349 = vlaneseq
        %v2350 = vshrl.u32 %v2349, 7
        %v2351 = vsub.s32 %v2348, %v2350
        %v2352 = vrot.slane %v2338, %v2351
        %v2353 = vcombine.high %v2345, %v2345
        %v2354 = vcombine.high %v2352, %v2352
        %v2356 = vunpack.c.l.s4 1966171168
        %v2357 = vunpack.c.0.s8 %v2356
        %v2358 = vlaneseq
        %v2359 = vshrl.u32 %v2358, 7
        %v2360 = vsub.s32 %v2357, %v2359
        %v2361 = vrot.slane %v2345, %v2360
        %v2363 = vunpack.c.l.s4 1966171168
        %v2364 = vunpack.c.0.s8 %v2363
        %v2365 = vlaneseq
        %v2366 = vshrl.u32 %v2365, 7
        %v2367 = vsub.s32 %v2364, %v2366
        %v2368 = vrot.slane %v2352, %v2367
        %v2370 = vunpack.c.l.s4 1966171168
        %v2371 = vunpack.c.0.s8 %v2370
        %v2372 = vlaneseq
        %v2373 = vshrl.u32 %v2372, 7
        %v2374 = vsub.s32 %v2371, %v2373
        %v2375 = vrot.slane %v2353, %v2374
        %v2377 = vunpack.c.l.s4 1966171168
        %v2378 = vunpack.c.0.s8 %v2377
        %v2379 = vlaneseq
        %v2380 = vshrl.u32 %v2379, 7
        %v2381 = vsub.s32 %v2378, %v2380
        %v2382 = vrot.slane %v2354, %v2381
        %v2383 = vcombine.high %v2361, %v2361
        %v2384 = vcombine.high %v2368, %v2368
        %v2385 = vcombine.high %v2375, %v2375
        %v2386 = vcombine.high %v2382, %v2382
        %v2387 = vlaneseq
        %v2388 = vshrl.u32 %v2387, 7
        %v2389 = vsub.s32 0, %v2388
        %v2390 = vrot.slane %v2361, %v2389
        %v2391 = vlaneseq
        %v2392 = vshrl.u32 %v2391, 7
        %v2393 = vsub.s32 0, %v2392
        %v2394 = vrot.slane %v2375, %v2393
        %v2395 = vlaneseq
        %v2396 = vshrl.u32 %v2395, 7
        %v2397 = vsub.s32 0, %v2396
        %v2398 = vrot.slane %v2383, %v2397
        %v2399 = vlaneseq
        %v2400 = vshrl.u32 %v2399, 7
        %v2401 = vsub.s32 0, %v2400
        %v2402 = vrot.slane %v2385, %v2401
        %v2403 = vlaneseq
        %v2404 = vshrl.u32 %v2403, 7
        %v2405 = vsub.s32 0, %v2404
        %v2406 = vrot.slane %v2368, %v2405
        %v2407 = vlaneseq
        %v2408 = vshrl.u32 %v2407, 7
        %v2409 = vsub.s32 0, %v2408
        %v2410 = vrot.slane %v2382, %v2409
        %v2411 = vlaneseq
        %v2412 = vshrl.u32 %v2411, 7
        %v2413 = vsub.s32 0, %v2412
        %v2414 = vrot.slane %v2384, %v2413
        %v2415 = vlaneseq
        %v2416 = vshrl.u32 %v2415, 7
        %v2417 = vsub.s32 0, %v2416
        %v2418 = vrot.slane %v2386, %v2417
        %v2427 = vmul.f32 %v2390, %v734
        %v2428 = vmul.f32 %v2394, %v735
        %v2429 = vmul.f32 %v2398, %v736
        %v2430 = vmul.f32 %v2402, %v737
        %v2431 = vmul.f32 %v2406, %v738
        %v2432 = vmul.f32 %v2410, %v739
        %v2433 = vmul.f32 %v2414, %v740
        %v2434 = vmul.f32 %v2418, %v741
        %v2435 = vsel %vm1022, %v2427, 0.0
        %2436 = vadd.xlane.f32.xlu0 %v2435
        %v2437 = vpop.xlane.xlu0 %2436
        %v2438 = vsel %vm1022, %v2428, 0.0
        %2439 = vadd.xlane.f32.xlu0 %v2438
        %v2440 = vpop.xlane.xlu0 %2439
        %v2441 = vsel %vm1022, %v2429, 0.0
        %2442 = vadd.xlane.f32.xlu0 %v2441
        %v2443 = vpop.xlane.xlu0 %2442
        %v2444 = vsel %vm1022, %v2430, 0.0
        %2445 = vadd.xlane.f32.xlu0 %v2444
        %v2446 = vpop.xlane.xlu0 %2445
        %v2447 = vsel %vm1022, %v2431, 0.0
        %2448 = vadd.xlane.f32.xlu0 %v2447
        %v2449 = vpop.xlane.xlu0 %2448
        %v2450 = vsel %vm1022, %v2432, 0.0
        %2451 = vadd.xlane.f32.xlu0 %v2450
        %v2452 = vpop.xlane.xlu0 %2451
        %v2453 = vsel %vm1022, %v2433, 0.0
        %2454 = vadd.xlane.f32.xlu0 %v2453
        %v2455 = vpop.xlane.xlu0 %2454
        %v2456 = vsel %vm1022, %v2434, 0.0
        %2457 = vadd.xlane.f32.xlu0 %v2456
        %v2458 = vpop.xlane.xlu0 %2457
        %v2459 = vmul.f32 %v1924, %v734
        %v2460 = vmul.f32 %v1924, %v735
        %v2461 = vmul.f32 %v1924, %v736
        %v2462 = vmul.f32 %v1924, %v737
        %v2463 = vmul.f32 %v1924, %v738
        %v2464 = vmul.f32 %v1924, %v739
        %v2465 = vmul.f32 %v1924, %v740
        %v2466 = vmul.f32 %v1924, %v741
        %v2467 = vsel %vm1022, %v2459, 0.0
        %2468 = vadd.xlane.f32.xlu0 %v2467
        %v2469 = vpop.xlane.xlu0 %2468
        %v2470 = vsel %vm1022, %v2460, 0.0
        %2471 = vadd.xlane.f32.xlu0 %v2470
        %v2472 = vpop.xlane.xlu0 %2471
        %v2473 = vsel %vm1022, %v2461, 0.0
        %2474 = vadd.xlane.f32.xlu0 %v2473
        %v2475 = vpop.xlane.xlu0 %2474
        %v2476 = vsel %vm1022, %v2462, 0.0
        %2477 = vadd.xlane.f32.xlu0 %v2476
        %v2478 = vpop.xlane.xlu0 %2477
        %v2479 = vsel %vm1022, %v2463, 0.0
        %2480 = vadd.xlane.f32.xlu0 %v2479
        %v2481 = vpop.xlane.xlu0 %2480
        %v2482 = vsel %vm1022, %v2464, 0.0
        %2483 = vadd.xlane.f32.xlu0 %v2482
        %v2484 = vpop.xlane.xlu0 %2483
        %v2485 = vsel %vm1022, %v2465, 0.0
        %2486 = vadd.xlane.f32.xlu0 %v2485
        %v2487 = vpop.xlane.xlu0 %2486
        %v2488 = vsel %vm1022, %v2466, 0.0
        %2489 = vadd.xlane.f32.xlu0 %v2488
        %v2490 = vpop.xlane.xlu0 %2489
        %v2499 = vlaneseq
        %v2500 = vshrl.u32 %v2499, 7
        %v2501 = vsub.s32 %v659, %v2500
        %v2502 = vrot.slane %v2437, %v2501
        %v2503 = vlaneseq
        %v2504 = vshrl.u32 %v2503, 7
        %v2505 = vsub.s32 %v659, %v2504
        %v2506 = vrot.slane %v2440, %v2505
        %v2507 = vlaneseq
        %v2508 = vshrl.u32 %v2507, 7
        %v2509 = vsub.s32 %v659, %v2508
        %v2510 = vrot.slane %v2443, %v2509
        %v2511 = vlaneseq
        %v2512 = vshrl.u32 %v2511, 7
        %v2513 = vsub.s32 %v659, %v2512
        %v2514 = vrot.slane %v2446, %v2513
        %v2515 = vlaneseq
        %v2516 = vshrl.u32 %v2515, 7
        %v2517 = vsub.s32 %v659, %v2516
        %v2518 = vrot.slane %v2449, %v2517
        %v2519 = vlaneseq
        %v2520 = vshrl.u32 %v2519, 7
        %v2521 = vsub.s32 %v659, %v2520
        %v2522 = vrot.slane %v2452, %v2521
        %v2523 = vlaneseq
        %v2524 = vshrl.u32 %v2523, 7
        %v2525 = vsub.s32 %v659, %v2524
        %v2526 = vrot.slane %v2455, %v2525
        %v2527 = vlaneseq
        %v2528 = vshrl.u32 %v2527, 7
        %v2529 = vsub.s32 %v659, %v2528
        %v2530 = vrot.slane %v2458, %v2529
        %v2531 = vsel %vm1119, %v2506, %v2502
        %v2532 = vsel %vm1121, %v2510, %v2531
        %v2533 = vsel %vm1123, %v2514, %v2532
        %v2534 = vsel %vm1125, %v2518, %v2533
        %v2535 = vsel %vm1127, %v2522, %v2534
        %v2536 = vsel %vm1129, %v2526, %v2535
        %v2537 = vsel %vm1131, %v2530, %v2536
        %2539 = vmatprep.subr.mxu0 0.0
        %2540 = vmatpush1.xpose.msra.mxu0 %v1850
        %2541 = vmatprep.subr.mxu0 0.0
        %2542 = vmatpush1.xpose.msra.mxu0 0.0
        %2543 = vmatprep.subr.mxu0 0.0
        %2544 = vmatpush1.xpose.msra.mxu0 0.0
        %2545 = vmatprep.subr.mxu0 0.0
        %2546 = vmatpush1.xpose.msra.mxu0 0.0
        %2547 = vmatprep.subr.mxu0 0.0
        %2548 = vmatpush1.xpose.msra.mxu0 0.0
        %2549 = vmatprep.subr.mxu0 0.0
        %2550 = vmatpush1.xpose.msra.mxu0 0.0
        %2551 = vmatprep.subr.mxu0 0.0
        %2552 = vmatpush1.xpose.msra.mxu0 0.0
        %2553 = vmatprep.subr.mxu0 0.0
        %2554 = vmatpush1.xpose.msra.mxu0 0.0
        %2555 = vmatprep.subr.mxu0 0.0
        %2556 = vmatpush1.xpose.msra.mxu0 0.0
        %2557 = vmatprep.subr.mxu0 0.0
        %2558 = vmatpush1.xpose.msra.mxu0 0.0
        %2559 = vmatprep.subr.mxu0 0.0
        %2560 = vmatpush1.xpose.msra.mxu0 0.0
        %2561 = vmatprep.subr.mxu0 0.0
        %2562 = vmatpush1.xpose.msra.mxu0 0.0
        %2563 = vmatprep.subr.mxu0 0.0
        %2564 = vmatpush1.xpose.msra.mxu0 0.0
        %2565 = vmatprep.subr.mxu0 0.0
        %2566 = vmatpush1.xpose.msra.mxu0 0.0
        %2567 = vmatprep.subr.mxu0 0.0
        %2568 = vmatpush1.xpose.msra.mxu0 0.0
        %2569 = vmatprep.subr.mxu0 0.0
        %2570 = vmatpush1.xpose.msra.mxu0 0.0
        %2571 = vmatprep.subr.mxu0 0.0
        %2572 = vmatpush1.xpose.msra.mxu0 0.0
        %2573 = vmatprep.subr.mxu0 0.0
        %2574 = vmatpush1.xpose.msra.mxu0 0.0
        %2575 = vmatprep.subr.mxu0 0.0
        %2576 = vmatpush1.xpose.msra.mxu0 0.0
        %2577 = vmatprep.subr.mxu0 0.0
        %2578 = vmatpush1.xpose.msra.mxu0 0.0
        %2579 = vmatprep.subr.mxu0 0.0
        %2580 = vmatpush1.xpose.msra.mxu0 0.0
        %2581 = vmatprep.subr.mxu0 0.0
        %2582 = vmatpush1.xpose.msra.mxu0 0.0
        %2583 = vmatprep.subr.mxu0 0.0
        %2584 = vmatpush1.xpose.msra.mxu0 0.0
        %2585 = vmatprep.subr.mxu0 0.0
        %2586 = vmatpush1.xpose.msra.mxu0 0.0
        %2587 = vmatprep.subr.mxu0 0.0
        %2588 = vmatpush1.xpose.msra.mxu0 0.0
        %2589 = vmatprep.subr.mxu0 0.0
        %2590 = vmatpush1.xpose.msra.mxu0 0.0
        %2591 = vmatprep.subr.mxu0 0.0
        %2592 = vmatpush1.xpose.msra.mxu0 0.0
        %2593 = vmatprep.subr.mxu0 0.0
        %2594 = vmatpush1.xpose.msra.mxu0 0.0
        %2595 = vmatprep.subr.mxu0 0.0
        %2596 = vmatpush1.xpose.msra.mxu0 0.0
        %2597 = vmatprep.subr.mxu0 0.0
        %2598 = vmatpush1.xpose.msra.mxu0 0.0
        %2599 = vmatprep.subr.mxu0 0.0
        %2600 = vmatpush1.xpose.msra.mxu0 0.0
        %2601 = vmatprep.subr.mxu0 0.0
        %2602 = vmatpush1.xpose.msra.mxu0 0.0
        %2603 = vmatprep.mubr.f32.mxu0 0.0
        %2604 = vmatmul.mubr.f32.gmra.mrb[0].mxu0 %v1767
        %v2605 = vpop.f32.mrb[0].mxu0
        %v2606 = vadd.f32 %v2537, %v2605
        %v2607 = vpop.f32.mrb[0].mxu0
        %2608 = vdwg.mxu0
        %v2617 = vlaneseq
        %v2618 = vshrl.u32 %v2617, 7
        %v2619 = vsub.s32 %v659, %v2618
        %v2620 = vrot.slane %v2469, %v2619
        %v2621 = vlaneseq
        %v2622 = vshrl.u32 %v2621, 7
        %v2623 = vsub.s32 %v659, %v2622
        %v2624 = vrot.slane %v2472, %v2623
        %v2625 = vlaneseq
        %v2626 = vshrl.u32 %v2625, 7
        %v2627 = vsub.s32 %v659, %v2626
        %v2628 = vrot.slane %v2475, %v2627
        %v2629 = vlaneseq
        %v2630 = vshrl.u32 %v2629, 7
        %v2631 = vsub.s32 %v659, %v2630
        %v2632 = vrot.slane %v2478, %v2631
        %v2633 = vlaneseq
        %v2634 = vshrl.u32 %v2633, 7
        %v2635 = vsub.s32 %v659, %v2634
        %v2636 = vrot.slane %v2481, %v2635
        %v2637 = vlaneseq
        %v2638 = vshrl.u32 %v2637, 7
        %v2639 = vsub.s32 %v659, %v2638
        %v2640 = vrot.slane %v2484, %v2639
        %v2641 = vlaneseq
        %v2642 = vshrl.u32 %v2641, 7
        %v2643 = vsub.s32 %v659, %v2642
        %v2644 = vrot.slane %v2487, %v2643
        %v2645 = vlaneseq
        %v2646 = vshrl.u32 %v2645, 7
        %v2647 = vsub.s32 %v659, %v2646
        %v2648 = vrot.slane %v2490, %v2647
        %v2649 = vsel %vm1119, %v2624, %v2620
        %v2650 = vsel %vm1121, %v2628, %v2649
        %v2651 = vsel %vm1123, %v2632, %v2650
        %v2652 = vsel %vm1125, %v2636, %v2651
        %v2653 = vsel %vm1127, %v2640, %v2652
        %v2654 = vsel %vm1129, %v2644, %v2653
        %v2655 = vsel %vm1131, %v2648, %v2654
        %v2657 = vadd.f32 %v2606, %v2655
        %v2658 = vmul.f32 %v2657, 0.25
        %v2659 = vadd.f32 %v2658, %v1672
        %v2660 = vsel %vm1259, %v2659, -inf
        %2661 = vmax.xlane.f32.xlu0 %v2660
        %v2662 = vpop.xlane.xlu0 %2661
        %v2663 = vsub.f32 %v2659, %v2662
        %v2664 = vmul.f32 %v2663, 1.442695
        %v2665 = vpow.pop %v2664
        %v2666 = vsel %vm1259, %v2665, 0.0
        %2667 = vadd.xlane.f32.xlu0 %v2666
        %v2668 = vpop.xlane.xlu0 %2667
        %v2669 = vrcp.pop %v2668
        %v2670 = vmul.f32 %v2665, %v2669
        %2671 = vrot.lane.b32.xlu0 %v653, 48
        %v2672 = vpop.permute.xlu0 %2671
        %v2675 = vsel %vm1259, %v2670, 0
        %2677 = vmatprep.subr.mxu0 0.0
        %2678 = vmatpush1.msra.mxu0 %v2672
        %2679 = vmatprep.subr.mxu0 0.0
        %2680 = vmatpush1.msra.mxu0 0.0
        %2681 = vmatprep.subr.mxu0 0.0
        %2682 = vmatpush1.msra.mxu0 0.0
        %2683 = vmatprep.subr.mxu0 0.0
        %2684 = vmatpush1.msra.mxu0 0.0
        %2685 = vmatprep.subr.mxu0 0.0
        %2686 = vmatpush1.msra.mxu0 0.0
        %2687 = vmatprep.subr.mxu0 0.0
        %2688 = vmatpush1.msra.mxu0 0.0
        %2689 = vmatprep.subr.mxu0 0.0
        %2690 = vmatpush1.msra.mxu0 0.0
        %2691 = vmatprep.subr.mxu0 0.0
        %2692 = vmatpush1.msra.mxu0 0.0
        %2693 = vmatprep.subr.mxu0 0.0
        %2694 = vmatpush1.msra.mxu0 0.0
        %2695 = vmatprep.subr.mxu0 0.0
        %2696 = vmatpush1.msra.mxu0 0.0
        %2697 = vmatprep.subr.mxu0 0.0
        %2698 = vmatpush1.msra.mxu0 0.0
        %2699 = vmatprep.subr.mxu0 0.0
        %2700 = vmatpush1.msra.mxu0 0.0
        %2701 = vmatprep.subr.mxu0 0.0
        %2702 = vmatpush1.msra.mxu0 0.0
        %2703 = vmatprep.subr.mxu0 0.0
        %2704 = vmatpush1.msra.mxu0 0.0
        %2705 = vmatprep.subr.mxu0 0.0
        %2706 = vmatpush1.msra.mxu0 0.0
        %2707 = vmatprep.subr.mxu0 0.0
        %2708 = vmatpush1.msra.mxu0 0.0
        %2709 = vmatprep.subr.mxu0 0.0
        %2710 = vmatpush1.msra.mxu0 0.0
        %2711 = vmatprep.subr.mxu0 0.0
        %2712 = vmatpush1.msra.mxu0 0.0
        %2713 = vmatprep.subr.mxu0 0.0
        %2714 = vmatpush1.msra.mxu0 0.0
        %2715 = vmatprep.subr.mxu0 0.0
        %2716 = vmatpush1.msra.mxu0 0.0
        %2717 = vmatprep.subr.mxu0 0.0
        %2718 = vmatpush1.msra.mxu0 0.0
        %2719 = vmatprep.subr.mxu0 0.0
        %2720 = vmatpush1.msra.mxu0 0.0
        %2721 = vmatprep.subr.mxu0 0.0
        %2722 = vmatpush1.msra.mxu0 0.0
        %2723 = vmatprep.subr.mxu0 0.0
        %2724 = vmatpush1.msra.mxu0 0.0
        %2725 = vmatprep.subr.mxu0 0.0
        %2726 = vmatpush1.msra.mxu0 0.0
        %2727 = vmatprep.subr.mxu0 0.0
        %2728 = vmatpush1.msra.mxu0 0.0
        %2729 = vmatprep.subr.mxu0 0.0
        %2730 = vmatpush1.msra.mxu0 0.0
        %2731 = vmatprep.subr.mxu0 0.0
        %2732 = vmatpush1.msra.mxu0 0.0
        %2733 = vmatprep.subr.mxu0 0.0
        %2734 = vmatpush1.msra.mxu0 0.0
        %2735 = vmatprep.subr.mxu0 0.0
        %2736 = vmatpush1.msra.mxu0 0.0
        %2737 = vmatprep.subr.mxu0 0.0
        %2738 = vmatpush1.msra.mxu0 0.0
        %2739 = vmatprep.subr.mxu0 0.0
        %2740 = vmatpush1.msra.mxu0 0.0
        %2741 = vmatprep.mubr.f32.mxu0 0.0
        %2742 = vmatmul.mubr.f32.gmra.mrb[0].mxu0 %v2675
        %v2743 = vpop.f32.mrb[0].mxu0
        %v2744 = vadd.f32 0.0, %v2743
        %v2745 = vpop.f32.mrb[0].mxu0
        %2746 = vdwg.mxu0
        %2749 = vrot.lane.b32.xlu0 %v2334, 16
        %v2750 = vpop.permute.xlu0 %2749
        %2751 = vrot.lane.b32.xlu0 %v2744, 16
        %v2752 = vpop.permute.xlu0 %2751
        %v2755 = vsel %vm747, %v1344, %v2750
        %v2756 = vsel %vm747, %v1758, %v2752
        %v2757 = vld [vmem:[%s449] sm:$0xff]
        %v2758 = vld [vmem:[%s449 + $0x8] sm:$0xff]
        %v2759 = vld [vmem:[%s449 + $0x10] sm:$0xff]
        %v2760 = vld [vmem:[%s449 + $0x18] sm:$0xff]
        %v2761 = vld [vmem:[%s468 + $0x1] sm:$0x1]
        %v2762 = vlaneseq
        %v2763 = vshrl.u32 %v2762, 7
        %v2764 = vsub.s32 0, %v2763
        %v2765 = vrot.slane %v2761, %v2764
        %v2767 = vsel %vm538, %v2755, 0
        %v2770 = vsel %vm538, %v2756, 0
        %v2773 = vsel %vm538, %v2757, 0
        %v2776 = vsel %vm538, %v2758, 0
        %v2779 = vsel %vm538, %v2759, 0
        %v2782 = vsel %vm538, %v2760, 0
        %2784 = vmatprep.subr.mxu0 0.0
        %2785 = vmatpush1.xpose.msra.mxu0 %v2773
        %2786 = vmatprep.subr.mxu0 0.0
        %2787 = vmatpush1.xpose.msra.mxu0 %v2776
        %2788 = vmatprep.subr.mxu0 0.0
        %2789 = vmatpush1.xpose.msra.mxu0 %v2779
        %2790 = vmatprep.subr.mxu0 0.0
        %2791 = vmatpush1.xpose.msra.mxu0 %v2782
        %2792 = vmatprep.subr.mxu0 0.0
        %2793 = vmatpush1.xpose.msra.mxu0 0.0
        %2794 = vmatprep.subr.mxu0 0.0
        %2795 = vmatpush1.xpose.msra.mxu0 0.0
        %2796 = vmatprep.subr.mxu0 0.0
        %2797 = vmatpush1.xpose.msra.mxu0 0.0
        %2798 = vmatprep.subr.mxu0 0.0
        %2799 = vmatpush1.xpose.msra.mxu0 0.0
        %2800 = vmatprep.subr.mxu0 0.0
        %2801 = vmatpush1.xpose.msra.mxu0 0.0
        %2802 = vmatprep.subr.mxu0 0.0
        %2803 = vmatpush1.xpose.msra.mxu0 0.0
        %2804 = vmatprep.subr.mxu0 0.0
        %2805 = vmatpush1.xpose.msra.mxu0 0.0
        %2806 = vmatprep.subr.mxu0 0.0
        %2807 = vmatpush1.xpose.msra.mxu0 0.0
        %2808 = vmatprep.subr.mxu0 0.0
        %2809 = vmatpush1.xpose.msra.mxu0 0.0
        %2810 = vmatprep.subr.mxu0 0.0
        %2811 = vmatpush1.xpose.msra.mxu0 0.0
        %2812 = vmatprep.subr.mxu0 0.0
        %2813 = vmatpush1.xpose.msra.mxu0 0.0
        %2814 = vmatprep.subr.mxu0 0.0
        %2815 = vmatpush1.xpose.msra.mxu0 0.0
        %2816 = vmatprep.subr.mxu0 0.0
        %2817 = vmatpush1.xpose.msra.mxu0 0.0
        %2818 = vmatprep.subr.mxu0 0.0
        %2819 = vmatpush1.xpose.msra.mxu0 0.0
        %2820 = vmatprep.subr.mxu0 0.0
        %2821 = vmatpush1.xpose.msra.mxu0 0.0
        %2822 = vmatprep.subr.mxu0 0.0
        %2823 = vmatpush1.xpose.msra.mxu0 0.0
        %2824 = vmatprep.subr.mxu0 0.0
        %2825 = vmatpush1.xpose.msra.mxu0 0.0
        %2826 = vmatprep.subr.mxu0 0.0
        %2827 = vmatpush1.xpose.msra.mxu0 0.0
        %2828 = vmatprep.subr.mxu0 0.0
        %2829 = vmatpush1.xpose.msra.mxu0 0.0
        %2830 = vmatprep.subr.mxu0 0.0
        %2831 = vmatpush1.xpose.msra.mxu0 0.0
        %2832 = vmatprep.subr.mxu0 0.0
        %2833 = vmatpush1.xpose.msra.mxu0 0.0
        %2834 = vmatprep.subr.mxu0 0.0
        %2835 = vmatpush1.xpose.msra.mxu0 0.0
        %2836 = vmatprep.subr.mxu0 0.0
        %2837 = vmatpush1.xpose.msra.mxu0 0.0
        %2838 = vmatprep.subr.mxu0 0.0
        %2839 = vmatpush1.xpose.msra.mxu0 0.0
        %2840 = vmatprep.subr.mxu0 0.0
        %2841 = vmatpush1.xpose.msra.mxu0 0.0
        %2842 = vmatprep.subr.mxu0 0.0
        %2843 = vmatpush1.xpose.msra.mxu0 0.0
        %2844 = vmatprep.subr.mxu0 0.0
        %2845 = vmatpush1.xpose.msra.mxu0 0.0
        %2846 = vmatprep.subr.mxu0 0.0
        %2847 = vmatpush1.xpose.msra.mxu0 0.0
        %2848 = vmatprep.mubr.f32.mxu0 0.0
        %2849 = vmatmul.mubr.f32.gmra.mrb[0].mxu0 %v2767
        %v2850 = vpop.f32.mrb[0].mxu0
        %v2851 = vadd.f32 %v2765, %v2850
        %v2852 = vpop.f32.mrb[0].mxu0
        %2853 = vmatprep.mubr.f32.mxu0 0.0
        %2854 = vmatmul.mubr.f32.gmra.mrb[0].mxu0 %v2770
        %v2855 = vpop.f32.mrb[0].mxu0
        %v2856 = vadd.f32 %v2765, %v2855
        %v2857 = vpop.f32.mrb[0].mxu0
        %2858 = vdwg.mxu0
        %v2859 = vadd.f32 %v2851, %v519
        %v2860 = vadd.f32 %v2856, %v520
        %v2861 = vld [vmem:[%s468 + $0x2] sm:$0x1]
        %v2862 = vld [vmem:[%s468 + $0x3] sm:$0x1]
        %v2863 = vsel %vm538, %v2859, 0.0
        %2864 = vadd.xlane.f32.xlu0 %v2863
        %v2865 = vpop.xlane.xlu0 %2864
        %v2866 = vsel %vm538, %v2860, 0.0
        %2867 = vadd.xlane.f32.xlu0 %v2866
        %v2868 = vpop.xlane.xlu0 %2867
        %v2869 = vrcp.pop 32.0
        %v2870 = vmul.f32 %v2865, %v2869
        %v2871 = vmul.f32 %v2868, %v2869
        %v2872 = vsub.f32 %v2859, %v2870
        %v2873 = vsub.f32 %v2860, %v2871
        %v2874 = vmul.f32 %v2872, %v2872
        %v2875 = vmul.f32 %v2873, %v2873
        %v2876 = vsel %vm538, %v2874, 0.0
        %2877 = vadd.xlane.f32.xlu0 %v2876
        %v2878 = vpop.xlane.xlu0 %2877
        %v2879 = vsel %vm538, %v2875, 0.0
        %2880 = vadd.xlane.f32.xlu0 %v2879
        %v2881 = vpop.xlane.xlu0 %2880
        %v2882 = vmul.f32 %v2878, %v2869
        %v2883 = vmul.f32 %v2881, %v2869
        %v2884 = vadd.f32 %v2882, 1e-12
        %v2885 = vadd.f32 %v2883, 1e-12
        %v2886 = vrsqrt.pop %v2884
        %v2887 = vrsqrt.pop %v2885
        %v2888 = vmul.f32 %v2872, %v2886
        %v2889 = vmul.f32 %v2873, %v2887
        %v2890 = vlaneseq
        %v2891 = vshrl.u32 %v2890, 7
        %v2892 = vsub.s32 0, %v2891
        %v2893 = vrot.slane %v2861, %v2892
        %v2894 = vmul.f32 %v2888, %v2893
        %v2895 = vmul.f32 %v2889, %v2893
        %v2896 = vlaneseq
        %v2897 = vshrl.u32 %v2896, 7
        %v2898 = vsub.s32 0, %v2897
        %v2899 = vrot.slane %v2862, %v2898
        %v2900 = vadd.f32 %v2894, %v2899
        %v2901 = vadd.f32 %v2895, %v2899
        %v2902 = vld [vmem:[%s454] sm:$0xff]
        %v2903 = vld [vmem:[%s454 + $0x8] sm:$0xff]
        %v2904 = vld [vmem:[%s454 + $0x10] sm:$0xff]
        %v2905 = vld [vmem:[%s454 + $0x18] sm:$0xff]
        %v2906 = vld [vmem:[%s454 + $0x20] sm:$0xff]
        %v2907 = vld [vmem:[%s454 + $0x28] sm:$0xff]
        %v2908 = vld [vmem:[%s454 + $0x30] sm:$0xff]
        %v2909 = vld [vmem:[%s454 + $0x38] sm:$0xff]
        %v2910 = vld [vmem:[%s468 + $0x4] sm:$0x1]
        %v2911 = vlaneseq
        %v2912 = vshrl.u32 %v2911, 7
        %v2913 = vsub.s32 0, %v2912
        %v2914 = vrot.slane %v2910, %v2913
        %v2916 = vsel %vm538, %v2900, 0
        %v2919 = vsel %vm538, %v2901, 0
        %v2922 = vsel %vm538, %v2902, 0
        %v2925 = vsel %vm538, %v2903, 0
        %v2928 = vsel %vm538, %v2904, 0
        %v2931 = vsel %vm538, %v2905, 0
        %v2934 = vsel %vm538, %v2906, 0
        %v2937 = vsel %vm538, %v2907, 0
        %v2940 = vsel %vm538, %v2908, 0
        %v2943 = vsel %vm538, %v2909, 0
        %2945 = vmatprep.subr.mxu0 0.0
        %2946 = vmatpush1.xpose.msra.mxu0 %v2922
        %2947 = vmatprep.subr.mxu0 0.0
        %2948 = vmatpush1.xpose.msra.mxu0 %v2925
        %2949 = vmatprep.subr.mxu0 0.0
        %2950 = vmatpush1.xpose.msra.mxu0 %v2928
        %2951 = vmatprep.subr.mxu0 0.0
        %2952 = vmatpush1.xpose.msra.mxu0 %v2931
        %2953 = vmatprep.subr.mxu0 0.0
        %2954 = vmatpush1.xpose.msra.mxu0 %v2934
        %2955 = vmatprep.subr.mxu0 0.0
        %2956 = vmatpush1.xpose.msra.mxu0 %v2937
        %2957 = vmatprep.subr.mxu0 0.0
        %2958 = vmatpush1.xpose.msra.mxu0 %v2940
        %2959 = vmatprep.subr.mxu0 0.0
        %2960 = vmatpush1.xpose.msra.mxu0 %v2943
        %2961 = vmatprep.subr.mxu0 0.0
        %2962 = vmatpush1.xpose.msra.mxu0 0.0
        %2963 = vmatprep.subr.mxu0 0.0
        %2964 = vmatpush1.xpose.msra.mxu0 0.0
        %2965 = vmatprep.subr.mxu0 0.0
        %2966 = vmatpush1.xpose.msra.mxu0 0.0
        %2967 = vmatprep.subr.mxu0 0.0
        %2968 = vmatpush1.xpose.msra.mxu0 0.0
        %2969 = vmatprep.subr.mxu0 0.0
        %2970 = vmatpush1.xpose.msra.mxu0 0.0
        %2971 = vmatprep.subr.mxu0 0.0
        %2972 = vmatpush1.xpose.msra.mxu0 0.0
        %2973 = vmatprep.subr.mxu0 0.0
        %2974 = vmatpush1.xpose.msra.mxu0 0.0
        %2975 = vmatprep.subr.mxu0 0.0
        %2976 = vmatpush1.xpose.msra.mxu0 0.0
        %2977 = vmatprep.subr.mxu0 0.0
        %2978 = vmatpush1.xpose.msra.mxu0 0.0
        %2979 = vmatprep.subr.mxu0 0.0
        %2980 = vmatpush1.xpose.msra.mxu0 0.0
        %2981 = vmatprep.subr.mxu0 0.0
        %2982 = vmatpush1.xpose.msra.mxu0 0.0
        %2983 = vmatprep.subr.mxu0 0.0
        %2984 = vmatpush1.xpose.msra.mxu0 0.0
        %2985 = vmatprep.subr.mxu0 0.0
        %2986 = vmatpush1.xpose.msra.mxu0 0.0
        %2987 = vmatprep.subr.mxu0 0.0
        %2988 = vmatpush1.xpose.msra.mxu0 0.0
        %2989 = vmatprep.subr.mxu0 0.0
        %2990 = vmatpush1.xpose.msra.mxu0 0.0
        %2991 = vmatprep.subr.mxu0 0.0
        %2992 = vmatpush1.xpose.msra.mxu0 0.0
        %2993 = vmatprep.subr.mxu0 0.0
        %2994 = vmatpush1.xpose.msra.mxu0 0.0
        %2995 = vmatprep.subr.mxu0 0.0
        %2996 = vmatpush1.xpose.msra.mxu0 0.0
        %2997 = vmatprep.subr.mxu0 0.0
        %2998 = vmatpush1.xpose.msra.mxu0 0.0
        %2999 = vmatprep.subr.mxu0 0.0
        %3000 = vmatpush1.xpose.msra.mxu0 0.0
        %3001 = vmatprep.subr.mxu0 0.0
        %3002 = vmatpush1.xpose.msra.mxu0 0.0
        %3003 = vmatprep.subr.mxu0 0.0
        %3004 = vmatpush1.xpose.msra.mxu0 0.0
        %3005 = vmatprep.subr.mxu0 0.0
        %3006 = vmatpush1.xpose.msra.mxu0 0.0
        %3007 = vmatprep.subr.mxu0 0.0
        %3008 = vmatpush1.xpose.msra.mxu0 0.0
        %3009 = vmatprep.mubr.f32.mxu0 0.0
        %3010 = vmatmul.mubr.f32.gmra.mrb[0].mxu0 %v2916
        %v3011 = vpop.f32.mrb[0].mxu0
        %v3012 = vadd.f32 %v2914, %v3011
        %v3013 = vpop.f32.mrb[0].mxu0
        %3014 = vmatprep.mubr.f32.mxu0 0.0
        %3015 = vmatmul.mubr.f32.gmra.mrb[0].mxu0 %v2919
        %v3016 = vpop.f32.mrb[0].mxu0
        %v3017 = vadd.f32 %v2914, %v3016
        %v3018 = vpop.f32.mrb[0].mxu0
        %3019 = vdwg.mxu0
        %v3020 = vmul.f32 %v3012, 0.5
        %v3021 = vmul.f32 %v3017, 0.5
        %v3022 = vmul.f32 %v3012, 0.70710677
        %v3023 = vmul.f32 %v3017, 0.70710677
        %v3024 = verf.f32.pop %v3022
        %v3025 = verf.f32.pop %v3023
        %v3026 = vadd.f32 %v3024, 1.0
        %v3027 = vadd.f32 %v3025, 1.0
        %v3028 = vmul.f32 %v3020, %v3026
        %v3029 = vmul.f32 %v3021, %v3027
        %v3030 = vld [vmem:[%s459] sm:$0xff]
        %v3031 = vld [vmem:[%s459 + $0x8] sm:$0xff]
        %v3032 = vld [vmem:[%s459 + $0x10] sm:$0xff]
        %v3033 = vld [vmem:[%s459 + $0x18] sm:$0xff]
        %v3034 = vld [vmem:[%s468 + $0x5] sm:$0x1]
        %v3035 = vlaneseq
        %v3036 = vshrl.u32 %v3035, 7
        %v3037 = vsub.s32 0, %v3036
        %v3038 = vrot.slane %v3034, %v3037
        %vm3039 = vcmask 523264
        %v3041 = vsel %vm3039, %v3028, 0
        %v3044 = vsel %vm3039, %v3029, 0
        %v3047 = vsel %vm3039, %v3030, 0
        %v3050 = vsel %vm3039, %v3031, 0
        %v3053 = vsel %vm3039, %v3032, 0
        %v3056 = vsel %vm3039, %v3033, 0
        %3058 = vmatprep.subr.mxu0 0.0
        %3059 = vmatpush1.xpose.msra.mxu0 %v3047
        %3060 = vmatprep.subr.mxu0 0.0
        %3061 = vmatpush1.xpose.msra.mxu0 %v3050
        %3062 = vmatprep.subr.mxu0 0.0
        %3063 = vmatpush1.xpose.msra.mxu0 %v3053
        %3064 = vmatprep.subr.mxu0 0.0
        %3065 = vmatpush1.xpose.msra.mxu0 %v3056
        %3066 = vmatprep.subr.mxu0 0.0
        %3067 = vmatpush1.xpose.msra.mxu0 0.0
        %3068 = vmatprep.subr.mxu0 0.0
        %3069 = vmatpush1.xpose.msra.mxu0 0.0
        %3070 = vmatprep.subr.mxu0 0.0
        %3071 = vmatpush1.xpose.msra.mxu0 0.0
        %3072 = vmatprep.subr.mxu0 0.0
        %3073 = vmatpush1.xpose.msra.mxu0 0.0
        %3074 = vmatprep.subr.mxu0 0.0
        %3075 = vmatpush1.xpose.msra.mxu0 0.0
        %3076 = vmatprep.subr.mxu0 0.0
        %3077 = vmatpush1.xpose.msra.mxu0 0.0
        %3078 = vmatprep.subr.mxu0 0.0
        %3079 = vmatpush1.xpose.msra.mxu0 0.0
        %3080 = vmatprep.subr.mxu0 0.0
        %3081 = vmatpush1.xpose.msra.mxu0 0.0
        %3082 = vmatprep.subr.mxu0 0.0
        %3083 = vmatpush1.xpose.msra.mxu0 0.0
        %3084 = vmatprep.subr.mxu0 0.0
        %3085 = vmatpush1.xpose.msra.mxu0 0.0
        %3086 = vmatprep.subr.mxu0 0.0
        %3087 = vmatpush1.xpose.msra.mxu0 0.0
        %3088 = vmatprep.subr.mxu0 0.0
        %3089 = vmatpush1.xpose.msra.mxu0 0.0
        %3090 = vmatprep.subr.mxu0 0.0
        %3091 = vmatpush1.xpose.msra.mxu0 0.0
        %3092 = vmatprep.subr.mxu0 0.0
        %3093 = vmatpush1.xpose.msra.mxu0 0.0
        %3094 = vmatprep.subr.mxu0 0.0
        %3095 = vmatpush1.xpose.msra.mxu0 0.0
        %3096 = vmatprep.subr.mxu0 0.0
        %3097 = vmatpush1.xpose.msra.mxu0 0.0
        %3098 = vmatprep.subr.mxu0 0.0
        %3099 = vmatpush1.xpose.msra.mxu0 0.0
        %3100 = vmatprep.subr.mxu0 0.0
        %3101 = vmatpush1.xpose.msra.mxu0 0.0
        %3102 = vmatprep.subr.mxu0 0.0
        %3103 = vmatpush1.xpose.msra.mxu0 0.0
        %3104 = vmatprep.subr.mxu0 0.0
        %3105 = vmatpush1.xpose.msra.mxu0 0.0
        %3106 = vmatprep.subr.mxu0 0.0
        %3107 = vmatpush1.xpose.msra.mxu0 0.0
        %3108 = vmatprep.subr.mxu0 0.0
        %3109 = vmatpush1.xpose.msra.mxu0 0.0
        %3110 = vmatprep.subr.mxu0 0.0
        %3111 = vmatpush1.xpose.msra.mxu0 0.0
        %3112 = vmatprep.subr.mxu0 0.0
        %3113 = vmatpush1.xpose.msra.mxu0 0.0
        %3114 = vmatprep.subr.mxu0 0.0
        %3115 = vmatpush1.xpose.msra.mxu0 0.0
        %3116 = vmatprep.subr.mxu0 0.0
        %3117 = vmatpush1.xpose.msra.mxu0 0.0
        %3118 = vmatprep.subr.mxu0 0.0
        %3119 = vmatpush1.xpose.msra.mxu0 0.0
        %3120 = vmatprep.subr.mxu0 0.0
        %3121 = vmatpush1.xpose.msra.mxu0 0.0
        %3122 = vmatprep.mubr.f32.mxu0 0.0
        %3123 = vmatmul.mubr.f32.gmra.mrb[0].mxu0 %v3041
        %v3124 = vpop.f32.mrb[0].mxu0
        %v3125 = vadd.f32 %v3038, %v3124
        %v3126 = vpop.f32.mrb[0].mxu0
        %3127 = vmatprep.mubr.f32.mxu0 0.0
        %3128 = vmatmul.mubr.f32.gmra.mrb[0].mxu0 %v3044
        %v3129 = vpop.f32.mrb[0].mxu0
        %v3130 = vadd.f32 %v3038, %v3129
        %v3131 = vpop.f32.mrb[0].mxu0
        %3132 = vdwg.mxu0
        %v3133 = vadd.f32 %v3125, %v2900
        %v3134 = vadd.f32 %v3130, %v2901
        %v3135 = vld [vmem:[%s468 + $0x6] sm:$0x1]
        %v3136 = vld [vmem:[%s468 + $0x7] sm:$0x1]
        %v3137 = vsel %vm538, %v3133, 0.0
        %3138 = vadd.xlane.f32.xlu0 %v3137
        %v3139 = vpop.xlane.xlu0 %3138
        %v3140 = vsel %vm538, %v3134, 0.0
        %3141 = vadd.xlane.f32.xlu0 %v3140
        %v3142 = vpop.xlane.xlu0 %3141
        %v3143 = vmul.f32 %v3139, %v2869
        %v3144 = vmul.f32 %v3142, %v2869
        %v3145 = vsub.f32 %v3133, %v3143
        %v3146 = vsub.f32 %v3134, %v3144
        %v3147 = vmul.f32 %v3145, %v3145
        %v3148 = vmul.f32 %v3146, %v3146
        %v3149 = vsel %vm538, %v3147, 0.0
        %3150 = vadd.xlane.f32.xlu0 %v3149
        %v3151 = vpop.xlane.xlu0 %3150
        %v3152 = vsel %vm538, %v3148, 0.0
        %3153 = vadd.xlane.f32.xlu0 %v3152
        %v3154 = vpop.xlane.xlu0 %3153
        %v3155 = vmul.f32 %v3151, %v2869
        %v3156 = vmul.f32 %v3154, %v2869
        %v3157 = vadd.f32 %v3155, 1e-12
        %v3158 = vadd.f32 %v3156, 1e-12
        %v3159 = vrsqrt.pop %v3157
        %v3160 = vrsqrt.pop %v3158
        %v3161 = vmul.f32 %v3145, %v3159
        %v3162 = vmul.f32 %v3146, %v3160
        %v3163 = vlaneseq
        %v3164 = vshrl.u32 %v3163, 7
        %v3165 = vsub.s32 0, %v3164
        %v3166 = vrot.slane %v3135, %v3165
        %v3167 = vmul.f32 %v3161, %v3166
        %v3168 = vmul.f32 %v3162, %v3166
        %v3169 = vlaneseq
        %v3170 = vshrl.u32 %v3169, 7
        %v3171 = vsub.s32 0, %v3170
        %v3172 = vrot.slane %v3136, %v3171
        %v3173 = vadd.f32 %v3167, %v3172
        %v3174 = vadd.f32 %v3168, %v3172
        %3175 = vst.msk [vmem:[#allocation2] sm:$0xff] %vm538, %v3173
        %3176 = vst.msk [vmem:[#allocation2 + $0x8] sm:$0xff] %vm538, %v3174
        %3177 = vst.msk [vmem:[#allocation3] sm:$0xff] %vm538, %v3173
        %3178 = vst.msk [vmem:[#allocation3 + $0x8] sm:$0xff] %vm538, %v3174
        %p3179 = scmp.eq.s32.totalorder %s25, 1
        // Predicated region
        $region65: #{electra_generator_forward.1} parent=59 // pred_check
          %p3180 = pneg %p3179
        $region66: #{electra_generator_forward.1} parent=59 // pred_check_branch
          %3182 = sbr.rel (%p3180) target = $region68
        $region67: #{electra_generator_forward.1} parent=59 // pred_region
          %v3183 = vld [vmem:[%s3] sm:$0xff]
          %v3184 = vld [vmem:[%s3 + $0x8] sm:$0xff]
          %v3185 = vld [vmem:[%s3 + $0x10] sm:$0xff]
          %v3186 = vld [vmem:[%s3 + $0x18] sm:$0xff]
          %v3187 = vld [vmem:[%s3 + $0x20] sm:$0xff]
          %v3188 = vld [vmem:[%s3 + $0x28] sm:$0xff]
          %v3189 = vld [vmem:[%s3 + $0x30] sm:$0xff]
          %v3190 = vld [vmem:[%s3 + $0x38] sm:$0xff]
          %v3191 = vld [vmem:[%s3 + $0x40] sm:$0xff]
          %v3192 = vld [vmem:[%s3 + $0x48] sm:$0xff]
          %v3193 = vld [vmem:[%s3 + $0x50] sm:$0xff]
          %v3194 = vld [vmem:[%s3 + $0x58] sm:$0xff]
          %v3195 = vld [vmem:[%s3 + $0x60] sm:$0xff]
          %v3196 = vld [vmem:[%s3 + $0x68] sm:$0xff]
          %v3197 = vld [vmem:[%s3 + $0x70] sm:$0xff]
          %v3198 = vld [vmem:[%s3 + $0x78] sm:$0xff]
          %v3200 = vsel %vm538, %v3173, 0
          %v3203 = vsel %vm538, %v3174, 0
          %v3206 = vsel %vm538, %v3183, 0
          %v3209 = vsel %vm538, %v3184, 0
          %v3212 = vsel %vm538, %v3185, 0
          %v3215 = vsel %vm538, %v3186, 0
          %v3218 = vsel %vm538, %v3187, 0
          %v3221 = vsel %vm538, %v3188, 0
          %v3224 = vsel %vm538, %v3189, 0
          %v3227 = vsel %vm538, %v3190, 0
          %v3230 = vsel %vm538, %v3191, 0
          %v3233 = vsel %vm538, %v3192, 0
          %v3236 = vsel %vm538, %v3193, 0
          %v3239 = vsel %vm538, %v3194, 0
          %v3242 = vsel %vm538, %v3195, 0
          %v3245 = vsel %vm538, %v3196, 0
          %v3248 = vsel %vm538, %v3197, 0
          %v3251 = vsel %vm538, %v3198, 0
          %3253 = vmatprep.subr.mxu0 0.0
          %3254 = vmatpush1.xpose.msra.mxu0 %v3206
          %3255 = vmatprep.subr.mxu0 0.0
          %3256 = vmatpush1.xpose.msra.mxu0 %v3209
          %3257 = vmatprep.subr.mxu0 0.0
          %3258 = vmatpush1.xpose.msra.mxu0 %v3212
          %3259 = vmatprep.subr.mxu0 0.0
          %3260 = vmatpush1.xpose.msra.mxu0 %v3215
          %3261 = vmatprep.subr.mxu0 0.0
          %3262 = vmatpush1.xpose.msra.mxu0 %v3218
          %3263 = vmatprep.subr.mxu0 0.0
          %3264 = vmatpush1.xpose.msra.mxu0 %v3221
          %3265 = vmatprep.subr.mxu0 0.0
          %3266 = vmatpush1.xpose.msra.mxu0 %v3224
          %3267 = vmatprep.subr.mxu0 0.0
          %3268 = vmatpush1.xpose.msra.mxu0 %v3227
          %3269 = vmatprep.subr.mxu0 0.0
          %3270 = vmatpush1.xpose.msra.mxu0 %v3230
          %3271 = vmatprep.subr.mxu0 0.0
          %3272 = vmatpush1.xpose.msra.mxu0 %v3233
          %3273 = vmatprep.subr.mxu0 0.0
          %3274 = vmatpush1.xpose.msra.mxu0 %v3236
          %3275 = vmatprep.subr.mxu0 0.0
          %3276 = vmatpush1.xpose.msra.mxu0 %v3239
          %3277 = vmatprep.subr.mxu0 0.0
          %3278 = vmatpush1.xpose.msra.mxu0 %v3242
          %3279 = vmatprep.subr.mxu0 0.0
          %3280 = vmatpush1.xpose.msra.mxu0 %v3245
          %3281 = vmatprep.subr.mxu0 0.0
          %3282 = vmatpush1.xpose.msra.mxu0 %v3248
          %3283 = vmatprep.subr.mxu0 0.0
          %3284 = vmatpush1.xpose.msra.mxu0 %v3251
          %3285 = vmatprep.subr.mxu0 0.0
          %3286 = vmatpush1.xpose.msra.mxu0 0.0
          %3287 = vmatprep.subr.mxu0 0.0
          %3288 = vmatpush1.xpose.msra.mxu0 0.0
          %3289 = vmatprep.subr.mxu0 0.0
          %3290 = vmatpush1.xpose.msra.mxu0 0.0
          %3291 = vmatprep.subr.mxu0 0.0
          %3292 = vmatpush1.xpose.msra.mxu0 0.0
          %3293 = vmatprep.subr.mxu0 0.0
          %3294 = vmatpush1.xpose.msra.mxu0 0.0
          %3295 = vmatprep.subr.mxu0 0.0
          %3296 = vmatpush1.xpose.msra.mxu0 0.0
          %3297 = vmatprep.subr.mxu0 0.0
          %3298 = vmatpush1.xpose.msra.mxu0 0.0
          %3299 = vmatprep.subr.mxu0 0.0
          %3300 = vmatpush1.xpose.msra.mxu0 0.0
          %3301 = vmatprep.subr.mxu0 0.0
          %3302 = vmatpush1.xpose.msra.mxu0 0.0
          %3303 = vmatprep.subr.mxu0 0.0
          %3304 = vmatpush1.xpose.msra.mxu0 0.0
          %3305 = vmatprep.subr.mxu0 0.0
          %3306 = vmatpush1.xpose.msra.mxu0 0.0
          %3307 = vmatprep.subr.mxu0 0.0
          %3308 = vmatpush1.xpose.msra.mxu0 0.0
          %3309 = vmatprep.subr.mxu0 0.0
          %3310 = vmatpush1.xpose.msra.mxu0 0.0
          %3311 = vmatprep.subr.mxu0 0.0
          %3312 = vmatpush1.xpose.msra.mxu0 0.0
          %3313 = vmatprep.subr.mxu0 0.0
          %3314 = vmatpush1.xpose.msra.mxu0 0.0
          %3315 = vmatprep.subr.mxu0 0.0
          %3316 = vmatpush1.xpose.msra.mxu0 0.0
          %3317 = vmatprep.mubr.f32.mxu0 0.0
          %3318 = vmatmul.mubr.f32.gmra.mrb[0].mxu0 %v3200
          %v3319 = vpop.f32.mrb[0].mxu0
          %v3320 = vadd.f32 0.0, %v3319
          %v3321 = vpop.f32.mrb[0].mxu0
          %3322 = vmatprep.mubr.f32.mxu0 0.0
          %3323 = vmatmul.mubr.f32.gmra.mrb[0].mxu0 %v3203
          %v3324 = vpop.f32.mrb[0].mxu0
          %v3325 = vadd.f32 0.0, %v3324
          %v3326 = vpop.f32.mrb[0].mxu0
          %3327 = vdwg.mxu0
          %v3328 = vmul.f32 %v3320, 0.5
          %v3329 = vmul.f32 %v3325, 0.5
          %v3330 = vmul.f32 %v3320, 0.70710677
          %v3331 = vmul.f32 %v3325, 0.70710677
          %v3332 = verf.f32.pop %v3330
          %v3333 = verf.f32.pop %v3331
          %v3334 = vadd.f32 %v3332, 1.0
          %v3335 = vadd.f32 %v3333, 1.0
          %v3336 = vmul.f32 %v3328, %v3334
          %v3337 = vmul.f32 %v3329, %v3335
          %v3338 = vld [vmem:[%s2 + $0x2] sm:$0x1]
          %v3339 = vld [vmem:[%s2 + $0x3] sm:$0x1]
          %3340 = vadd.xlane.f32.xlu0 %v3336
          %v3341 = vpop.xlane.xlu0 %3340
          %3342 = vadd.xlane.f32.xlu0 %v3337
          %v3343 = vpop.xlane.xlu0 %3342
          %v3344 = vrcp.pop 128.0
          %v3345 = vmul.f32 %v3341, %v3344
          %v3346 = vmul.f32 %v3343, %v3344
          %v3347 = vsub.f32 %v3336, %v3345
          %v3348 = vsub.f32 %v3337, %v3346
          %v3349 = vmul.f32 %v3347, %v3347
          %v3350 = vmul.f32 %v3348, %v3348
          %3351 = vadd.xlane.f32.xlu0 %v3349
          %v3352 = vpop.xlane.xlu0 %3351
          %3353 = vadd.xlane.f32.xlu0 %v3350
          %v3354 = vpop.xlane.xlu0 %3353
          %v3355 = vmul.f32 %v3352, %v3344
          %v3356 = vmul.f32 %v3354, %v3344
          %v3357 = vadd.f32 %v3355, 1e-12
          %v3358 = vadd.f32 %v3356, 1e-12
          %v3359 = vrsqrt.pop %v3357
          %v3360 = vrsqrt.pop %v3358
          %v3361 = vmul.f32 %v3347, %v3359
          %v3362 = vmul.f32 %v3348, %v3360
          %v3363 = vlaneseq
          %v3364 = vshrl.u32 %v3363, 7
          %v3365 = vsub.s32 0, %v3364
          %v3366 = vrot.slane %v3338, %v3365
          %v3367 = vmul.f32 %v3361, %v3366
          %v3368 = vmul.f32 %v3362, %v3366
          %v3369 = vlaneseq
          %v3370 = vshrl.u32 %v3369, 7
          %v3371 = vsub.s32 0, %v3370
          %v3372 = vrot.slane %v3339, %v3371
          %v3373 = vadd.f32 %v3367, %v3372
          %v3374 = vadd.f32 %v3368, %v3372
          %3375 = vst [vmem:[#allocation5] sm:$0xff] %v3373
          %3376 = vst [vmem:[#allocation5 + $0x8] sm:$0xff] %v3374
        $region68: #{electra_generator_forward.1} parent=59 // pred_fallthru
          _
        // Predicated region
        $region69: #{electra_generator_forward.1} parent=59 // pred_check
          %p3377 = pneg %p278
        $region70: #{electra_generator_forward.1} parent=59 // pred_check_branch
          %3379 = sbr.rel (%p3377) target = $region72
        $region71: #{electra_generator_forward.1} parent=59 // pred_region
          %s3381 = ssub.s32 256, 256
          %3382 = vsyncadd [#allocation4], %s3381
          %s3383 = sshll.u32 [#allocation3], 4
          %s3384 = int_to_ptr.vmem [resolvable:$true] %s3383
          %3389 = dma.vmem_to_hbm [thread:$0]  %s3384, 256, %s10, [#allocation4], 128, 128, 8
        $region72: #{electra_generator_forward.1} parent=59 // pred_fallthru
          _
        // Predicated region
        $region73: #{electra_generator_forward.1} parent=59 // pred_check
          %p3390 = pneg %p299
        $region74: #{electra_generator_forward.1} parent=59 // pred_check_branch
          %3392 = sbr.rel (%p3390) target = $region76
        $region75: #{electra_generator_forward.1} parent=59 // pred_region
          %s3394 = ssub.s32 256, 256
          %3395 = vsyncadd [#allocation6], %s3394
          %s3396 = sshll.u32 [#allocation5], 4
          %s3397 = int_to_ptr.vmem [resolvable:$true] %s3396
          %3402 = dma.vmem_to_hbm [thread:$0]  %s3397, 256, %s11, [#allocation6], 128, 128, 8
        $region76: #{electra_generator_forward.1} parent=59 // pred_fallthru
          _
        // Predicated region
        $region77: #{electra_generator_forward.1} parent=59 // pred_check
          %p3403 = pneg %p278
        $region78: #{electra_generator_forward.1} parent=59 // pred_check_branch
          %3405 = sbr.rel (%p3403) target = $region80
        $region79: #{electra_generator_forward.1} parent=59 // pred_region
          %3406 = dma.done [#allocation4], 256
        $region80: #{electra_generator_forward.1} parent=59 // pred_fallthru
          _
        // Predicated region
        $region81: #{electra_generator_forward.1} parent=59 // pred_check
          %p3407 = pneg %p299
        $region82: #{electra_generator_forward.1} parent=59 // pred_check_branch
          %3409 = sbr.rel (%p3407) target = $region84
        $region83: #{electra_generator_forward.1} parent=59 // pred_region
          %3410 = dma.done [#allocation6], 256
        $region84: #{electra_generator_forward.1} parent=59 // pred_fallthru
          _
      $region60: #{electra_generator_forward.1} parent=5 // pred_fallthru
        _
      %p3411 = scmp.le.s32.totalorder 2, %s20
      // Predicated region
      $region85: #{electra_generator_forward.1} parent=5 // pred_check
        %p3412 = pneg %p3411
      $region86: #{electra_generator_forward.1} parent=5 // pred_check_branch
        %3414 = sbr.rel (%p3412) target = $region88
      $region87: #{electra_generator_forward.1} parent=5 // pred_region
        %s3415 = ssub.s32 %s20, 2
      $region88: #{electra_generator_forward.1} parent=5 // pred_fallthru
        _
    $region6: #{electra_generator_forward.1} parent=1 // loop_footer
      %s24 = sadd.s32 1, %s20
    $region7: #{electra_generator_forward.1} parent=1 // loop_footer_branch
      %19 = sbr.rel target = $region3
    $region8: #{electra_generator_forward.1} parent=1 // loop_exit
      _
    %3416 = vsyncpa [#allocation4], 1
    %s3417 = scalar_lea.sflag [#allocation4], 1
    %3418 = vsyncpa %s3417, 1
    %3419 = vsyncpa [#allocation6], 1

</llo_original>
